<compile_context>
chip_gen: v7x
topology: tpu7x:2x2x1
jax: 0.10.0
libtpu: 0.0.40
codegen_flags: <defaults>
</compile_context>

<pallas_src>
import functools

import jax
import jax.numpy as jnp
import numpy as np
from jax import lax
from jax.experimental import pallas as pl
from jax.experimental.pallas import tpu as pltpu


def _topk_attn_kernel(kv_ref, a_row_ref, m_j_ref, out_ref, *, tj, tp, n_slabs):
    """One (batch-block, j-tile) grid step.

    kv_ref    : (BT, 1)   f32  per-row k value (integer-valued float)
    a_row_ref : (BT, Sp)  f32  full padded attn rows (resident across j steps)
    m_j_ref   : (BT, TJ)  f32  attn_mask tile for the output columns
    out_ref   : (BT, TJ)  f32  output mask tile
    """
    j = pl.program_id(1)
    bt = out_ref.shape[0]

    # q (output-column) tile, sliced from the resident row. Lane-aligned start.
    q0 = pl.multiple_of(j * tj, tj)
    aj = a_row_ref[:, pl.ds(q0, tj)]                # (BT, TJ)
    aj3 = aj[:, None, :]                            # (BT, 1, TJ)

    # Local index-difference matrix (p_local - q_local), built once per step.
    p_loc = lax.broadcasted_iota(jnp.int32, (tp, tj), 0)
    q_loc = lax.broadcasted_iota(jnp.int32, (tp, tj), 1)
    d_loc = p_loc - q_loc                           # (TP, TJ)
    q_base = j * tj                                 # dynamic scalar

    rank = jnp.zeros((bt, tj), jnp.float32)
    for s in range(n_slabs):                        # static, unrolled at trace time
        ai = a_row_ref[:, s * tp:(s + 1) * tp]      # (BT, TP) static, lane-aligned
        ai3 = ai[:, :, None]                        # (BT, TP, 1)
        gt = ai3 > aj3                              # (BT, TP, TJ) VPU compares
        eq = ai3 == aj3
        # Stable tie-break: p beats q iff p_global < q_global
        #   <=>  (p_local - q_local) < (j*TJ - s*TP)
        tie = d_loc < (q_base - s * tp)             # (TP, TJ), scalar RHS dynamic
        beats = jnp.logical_or(gt, jnp.logical_and(eq, tie[None, :, :]))
        # VPU reduction; 0/1 sums are exact in f32 for S < 2**24.
        rank = rank + jnp.sum(beats.astype(jnp.float32), axis=1)

    keep = (rank < kv_ref[...]).astype(jnp.float32)  # kv (BT,1) broadcasts over lanes
    out_ref[...] = (keep * m_j_ref[...]).astype(out_ref.dtype)


def topk_attention(attn, attn_mask=None, k=0.2, *, tile_j=256):
    """JAX/Pallas equivalent of TopKAttentionLayer(k).forward(attn, attn_mask)."""
    assert k > 0
    attn = jnp.asarray(attn)
    if attn_mask is None:
        attn_mask = jnp.ones_like(attn)
    attn_mask = jnp.asarray(attn_mask)
    assert attn.ndim == 2 and attn.shape == attn_mask.shape
    B, S = attn.shape
    out_dtype = jnp.promote_types(jnp.float32, attn_mask.dtype)

    # ---- per-row k value (matches torch: (sum(attn_mask,-1) * k).int()) ----
    mask_f = attn_mask.astype(jnp.float32)
    if 0 < k < 1:
        kv = jnp.floor(jnp.sum(mask_f, axis=-1) * jnp.float32(k))
    else:
        kv = jnp.full((B,), float(int(k)), dtype=jnp.float32)
    kv = kv.reshape(B, 1).astype(jnp.float32)

    # ---- tiling parameters --------------------------------------------------
    BT = 16 if B >= 16 else 8                          # batch rows per grid step
    tj = max(128, (int(tile_j) // 128) * 128)          # output tile, multiple of 128
    tj = min(tj, max(128, pl.cdiv(S, 128) * 128))      # no oversized tiles
    # Keep >= 2 parallel grid steps when possible (megacore on v7x).
    while tj > 128 and (pl.cdiv(B, BT) * pl.cdiv(S, tj)) < 2:
        tj -= 128
    tp = 128                                           # lane-aligned p-slab width
    Sp = pl.cdiv(S, tj) * tj                           # multiple of tj (and of tp)
    Bp = pl.cdiv(B, BT) * BT
    n_slabs = Sp // tp

    # ---- padding: -inf attn / 0 mask in the trailing block ------------------
    attn_p = jnp.full((Bp, Sp), -jnp.inf, dtype=jnp.float32)
    attn_p = attn_p.at[:B, :S].set(attn.astype(jnp.float32))
    mask_p = jnp.zeros((Bp, Sp), dtype=jnp.float32)
    mask_p = mask_p.at[:B, :S].set(mask_f)
    kv_p = jnp.zeros((Bp, 1), dtype=jnp.float32)
    kv_p = kv_p.at[:B, :].set(kv)

    grid = (Bp // BT, Sp // tj)                        # (batch-block, j-tile)

    kernel = functools.partial(_topk_attn_kernel, tj=tj, tp=tp, n_slabs=n_slabs)
    out_p = pl.pallas_call(
        kernel,
        out_shape=jax.ShapeDtypeStruct((Bp, Sp), jnp.float32),
        grid_spec=pltpu.PrefetchScalarGridSpec(
            num_scalar_prefetch=0,
            grid=grid,
            in_specs=[
                pl.BlockSpec((BT, 1), lambda b, j: (b, 0)),      # kv (per-row k)
                pl.BlockSpec((BT, Sp), lambda b, j: (b, 0)),     # full attn row
                pl.BlockSpec((BT, tj), lambda b, j: (b, j)),     # mask j-tile
            ],
            out_specs=pl.BlockSpec((BT, tj), lambda b, j: (b, j)),
        ),
        compiler_params=pltpu.CompilerParams(
            dimension_semantics=("parallel", "parallel"),
            vmem_limit_bytes=32 * 1024 * 1024,
        ),
    )(kv_p, attn_p, mask_p)

    return out_p[:B, :S].astype(out_dtype)


def _reference(attn, attn_mask, k):
    """NumPy transcription of the PyTorch forward (argsort/gather/scatter)."""
    attn = np.asarray(attn, dtype=np.float32)
    attn_mask = np.asarray(attn_mask, dtype=np.float32)
    B, S = attn.shape
    if 0 < k < 1:
        k_values = (attn_mask.sum(-1) * np.float32(k)).astype(np.int64)
    else:
        k_values = np.full((B,), int(k), dtype=np.int64)
    order = np.argsort(-attn, axis=-1, kind="stable")
    mask = np.zeros((B, S), dtype=np.float32)
    for b in range(B):
        kb = int(min(max(k_values[b], 0), S))
        if kb > 0:
            mask[b, order[b, :kb]] = 1.0
    return mask * attn_mask


if __name__ == "__main__":
    key = jax.random.PRNGKey(0)
    k1, k2, k3, k4 = jax.random.split(key, 4)

    # Case 1: fractional k; 128-wide tiles, 3 j-tiles, batch padding.
    B1, S1 = 4, 384
    attn1 = jax.random.normal(k1, (B1, S1), dtype=jnp.float32)
    mask1 = (jax.random.uniform(k2, (B1, S1)) > 0.3).astype(jnp.float32)
    out1 = jax.block_until_ready(topk_attention(attn1, mask1, k=0.2, tile_j=128))
    ref1 = _reference(attn1, mask1, 0.2)
    if not np.array_equal(np.asarray(out1), ref1):
        raise AssertionError("Pallas kernel output mismatch vs reference (case 1)")

    # Case 2: integer k; seq length not a multiple of the tile (padding path).
    B2, S2 = 3, 200
    attn2 = jax.random.normal(k3, (B2, S2), dtype=jnp.float32)
    mask2 = (jax.random.uniform(k4, (B2, S2)) > 0.5).astype(jnp.float32)
    out2 = jax.block_until_ready(topk_attention(attn2, mask2, k=7, tile_j=128))
    ref2 = _reference(attn2, mask2, 7)
    if not np.array_equal(np.asarray(out2), ref2):
        raise AssertionError("Pallas kernel output mismatch vs reference (case 2)")

    # Case 3: default 256-wide j-tile with 128-wide p-slabs (tj != tp path).
    out3 = jax.block_until_ready(topk_attention(attn1, mask1, k=0.2, tile_j=256))
    if not np.array_equal(np.asarray(out3), ref1):
        raise AssertionError("Pallas kernel output mismatch vs reference (case 3)")

    print("KERNEL_OK")
</pallas_src>

<mosaic_0001>
module attributes {stable_mosaic.version = 11 : i64} {
  func.func @_topk_attn_kernel(%arg0: i32, %arg1: i32, %arg2: memref<8x1xf32, #tpu.memory_space<vmem>>, %arg3: memref<8x384xf32, #tpu.memory_space<vmem>>, %arg4: memref<8x128xf32, #tpu.memory_space<vmem>>, %arg5: memref<8x128xf32, #tpu.memory_space<vmem>>) attributes {dimension_semantics = [#tpu.dimension_semantics<parallel>, #tpu.dimension_semantics<parallel>], iteration_bounds = array<i64: 1, 3>, scalar_prefetch = 0 : i64, scratch_operands = 0 : i64, tpu.core_type = #tpu.core_type<tc>, window_params = [{transform_indices = @transform_0, window_bounds = array<i64: 8, 1>}, {transform_indices = @transform_1, window_bounds = array<i64: 8, 384>}, {transform_indices = @transform_2, window_bounds = array<i64: 8, 128>}, {transform_indices = @transform_3, window_bounds = array<i64: 8, 128>}]} {
    %c128_i32 = arith.constant 128 : i32
    %0 = arith.muli %arg1, %c128_i32 : i32
    %1 = tpu.assume_multiple %0, 128 : i32
    %c0 = arith.constant 0 : index
    %2 = arith.index_cast %1 : i32 to index
    %3 = vector.load %arg3[%c0, %2] : memref<8x384xf32, #tpu.memory_space<vmem>>, vector<8x128xf32>
    %4 = vector.shape_cast %3 : vector<8x128xf32> to vector<8x1x128xf32>
    %5 = tpu.iota {dimensions = array<i32: 0>} : vector<128x128xi32>
    %6 = tpu.iota {dimensions = array<i32: 1>} : vector<128x128xi32>
    %7 = arith.subi %5, %6 : vector<128x128xi32>
    %c128_i32_0 = arith.constant 128 : i32
    %8 = arith.muli %arg1, %c128_i32_0 : i32
    %cst = arith.constant 0.000000e+00 : f32
    %9 = vector.broadcast %cst : f32 to vector<8x128xf32>
    %c0_1 = arith.constant 0 : index
    %c0_2 = arith.constant 0 : index
    %10 = vector.load %arg3[%c0_1, %c0_2] : memref<8x384xf32, #tpu.memory_space<vmem>>, vector<8x128xf32>
    %11 = vector.shape_cast %10 : vector<8x128xf32> to vector<8x128x1xf32>
    %12 = vector.broadcast %11 : vector<8x128x1xf32> to vector<8x128x128xf32>
    %13 = vector.broadcast %4 : vector<8x1x128xf32> to vector<8x128x128xf32>
    %14 = arith.cmpf ogt, %12, %13 : vector<8x128x128xf32>
    %15 = vector.broadcast %11 : vector<8x128x1xf32> to vector<8x128x128xf32>
    %16 = vector.broadcast %4 : vector<8x1x128xf32> to vector<8x128x128xf32>
    %17 = arith.cmpf oeq, %15, %16 : vector<8x128x128xf32>
    %c0_i32 = arith.constant 0 : i32
    %18 = arith.subi %8, %c0_i32 : i32
    %19 = vector.broadcast %18 : i32 to vector<128x128xi32>
    %20 = arith.cmpi slt, %7, %19 : vector<128x128xi32>
    %21 = vector.shape_cast %20 : vector<128x128xi1> to vector<1x128x128xi1>
    %22 = vector.broadcast %21 : vector<1x128x128xi1> to vector<8x128x128xi1>
    %23 = arith.andi %17, %22 : vector<8x128x128xi1>
    %24 = arith.ori %14, %23 : vector<8x128x128xi1>
    %25 = arith.extui %24 : vector<8x128x128xi1> to vector<8x128x128xi32>
    %26 = arith.sitofp %25 : vector<8x128x128xi32> to vector<8x128x128xf32>
    %cst_3 = arith.constant dense<0.000000e+00> : vector<8x128xf32>
    %27 = vector.multi_reduction <add>, %26, %cst_3 [1] : vector<8x128x128xf32> to vector<8x128xf32>
    %28 = arith.addf %9, %27 : vector<8x128xf32>
    %c0_4 = arith.constant 0 : index
    %c128 = arith.constant 128 : index
    %29 = vector.load %arg3[%c0_4, %c128] : memref<8x384xf32, #tpu.memory_space<vmem>>, vector<8x128xf32>
    %30 = vector.shape_cast %29 : vector<8x128xf32> to vector<8x128x1xf32>
    %31 = vector.broadcast %30 : vector<8x128x1xf32> to vector<8x128x128xf32>
    %32 = vector.broadcast %4 : vector<8x1x128xf32> to vector<8x128x128xf32>
    %33 = arith.cmpf ogt, %31, %32 : vector<8x128x128xf32>
    %34 = vector.broadcast %30 : vector<8x128x1xf32> to vector<8x128x128xf32>
    %35 = vector.broadcast %4 : vector<8x1x128xf32> to vector<8x128x128xf32>
    %36 = arith.cmpf oeq, %34, %35 : vector<8x128x128xf32>
    %c128_i32_5 = arith.constant 128 : i32
    %37 = arith.subi %8, %c128_i32_5 : i32
    %38 = vector.broadcast %37 : i32 to vector<128x128xi32>
    %39 = arith.cmpi slt, %7, %38 : vector<128x128xi32>
    %40 = vector.shape_cast %39 : vector<128x128xi1> to vector<1x128x128xi1>
    %41 = vector.broadcast %40 : vector<1x128x128xi1> to vector<8x128x128xi1>
    %42 = arith.andi %36, %41 : vector<8x128x128xi1>
    %43 = arith.ori %33, %42 : vector<8x128x128xi1>
    %44 = arith.extui %43 : vector<8x128x128xi1> to vector<8x128x128xi32>
    %45 = arith.sitofp %44 : vector<8x128x128xi32> to vector<8x128x128xf32>
    %cst_6 = arith.constant dense<0.000000e+00> : vector<8x128xf32>
    %46 = vector.multi_reduction <add>, %45, %cst_6 [1] : vector<8x128x128xf32> to vector<8x128xf32>
    %47 = arith.addf %28, %46 : vector<8x128xf32>
    %c0_7 = arith.constant 0 : index
    %c256 = arith.constant 256 : index
    %48 = vector.load %arg3[%c0_7, %c256] : memref<8x384xf32, #tpu.memory_space<vmem>>, vector<8x128xf32>
    %49 = vector.shape_cast %48 : vector<8x128xf32> to vector<8x128x1xf32>
    %50 = vector.broadcast %49 : vector<8x128x1xf32> to vector<8x128x128xf32>
    %51 = vector.broadcast %4 : vector<8x1x128xf32> to vector<8x128x128xf32>
    %52 = arith.cmpf ogt, %50, %51 : vector<8x128x128xf32>
    %53 = vector.broadcast %49 : vector<8x128x1xf32> to vector<8x128x128xf32>
    %54 = vector.broadcast %4 : vector<8x1x128xf32> to vector<8x128x128xf32>
    %55 = arith.cmpf oeq, %53, %54 : vector<8x128x128xf32>
    %c256_i32 = arith.constant 256 : i32
    %56 = arith.subi %8, %c256_i32 : i32
    %57 = vector.broadcast %56 : i32 to vector<128x128xi32>
    %58 = arith.cmpi slt, %7, %57 : vector<128x128xi32>
    %59 = vector.shape_cast %58 : vector<128x128xi1> to vector<1x128x128xi1>
    %60 = vector.broadcast %59 : vector<1x128x128xi1> to vector<8x128x128xi1>
    %61 = arith.andi %55, %60 : vector<8x128x128xi1>
    %62 = arith.ori %52, %61 : vector<8x128x128xi1>
    %63 = arith.extui %62 : vector<8x128x128xi1> to vector<8x128x128xi32>
    %64 = arith.sitofp %63 : vector<8x128x128xi32> to vector<8x128x128xf32>
    %cst_8 = arith.constant dense<0.000000e+00> : vector<8x128xf32>
    %65 = vector.multi_reduction <add>, %64, %cst_8 [1] : vector<8x128x128xf32> to vector<8x128xf32>
    %66 = arith.addf %47, %65 : vector<8x128xf32>
    %c0_9 = arith.constant 0 : index
    %c0_10 = arith.constant 0 : index
    %67 = vector.load %arg2[%c0_9, %c0_10] : memref<8x1xf32, #tpu.memory_space<vmem>>, vector<8x1xf32>
    %68 = vector.broadcast %67 : vector<8x1xf32> to vector<8x128xf32>
    %69 = arith.cmpf olt, %66, %68 : vector<8x128xf32>
    %70 = arith.extui %69 : vector<8x128xi1> to vector<8x128xi32>
    %71 = arith.sitofp %70 : vector<8x128xi32> to vector<8x128xf32>
    %c0_11 = arith.constant 0 : index
    %c0_12 = arith.constant 0 : index
    %72 = vector.load %arg4[%c0_11, %c0_12] : memref<8x128xf32, #tpu.memory_space<vmem>>, vector<8x128xf32>
    %73 = arith.mulf %71, %72 : vector<8x128xf32>
    %c0_13 = arith.constant 0 : index
    %c0_14 = arith.constant 0 : index
    %74 = vector.load %arg5[%c0_13, %c0_14] : memref<8x128xf32, #tpu.memory_space<vmem>>, vector<8x128xf32>
    tpu.vector_store %arg5[%c0_13, %c0_14], %73 {strides = array<i32>} : memref<8x128xf32, #tpu.memory_space<vmem>>, vector<8x128xf32>,
    return
  }
  func.func @transform_0(%arg0: i32, %arg1: i32) -> (i32, i32) {
    %c0_i32 = arith.constant 0 : i32
    %c0_i32_0 = arith.constant 0 : i32
    return %arg0, %c0_i32 : i32, i32
  }
  func.func @transform_1(%arg0: i32, %arg1: i32) -> (i32, i32) {
    %c0_i32 = arith.constant 0 : i32
    %c0_i32_0 = arith.constant 0 : i32
    return %arg0, %c0_i32 : i32, i32
  }
  func.func @transform_2(%arg0: i32, %arg1: i32) -> (i32, i32) {
    %c0_i32 = arith.constant 0 : i32
    return %arg0, %arg1 : i32, i32
  }
  func.func @transform_3(%arg0: i32, %arg1: i32) -> (i32, i32) {
    %c0_i32 = arith.constant 0 : i32
    return %arg0, %arg1 : i32, i32
  }
}

</mosaic_0001>

<llo_original>
// kernel: tpu_custom_call.1
$region0: #{tpu_custom_call.1}
  #allocation0 [shape = 'u32[]', space=smem, size = 0x4, offset = 0x4, fixed_abs, tag = 'smem constant byte address 0x4 - core index']
  #allocation1 [shape = 'u32[144,128]{1,0:T(1,128)}', space=vmem, size = 0x12000, scoped, tag = 'internal scratch']
  %s0 = inlined_call_operand.vmem [shape: f32[8,1], index: 0, kind: input, shape index: {}]
  %s1 = inlined_call_operand.hbm [shape: f32[8,384], index: 1, kind: input, shape index: {}]
  %s2 = inlined_call_operand.hbm [shape: f32[8,384], index: 2, kind: input, shape index: {}]
  %s3 = inlined_call_operand.hbm [shape: f32[8,384], index: 3, kind: output, shape index: {}]
  %s4 = sld [smem:[#allocation0]]
  $region53: #{tpu_custom_call.1} parent=0
    _
  %s6 = ssub.s32 1, %s4
  %s7 = scalar_select 0, %s6, %s4
  $region1: #{tpu_custom_call.1} parent=0
    #allocation2 [shape = 'u8[12288]{0}', space=vmem, size = 0x3000, scoped, tag = 'input window, operand 1, single buffered']
    #allocation3 [shape = 's32[2]{0}', space=sflag, size = 0x8, scoped, tag = 'scoped memory for tpu_custom_call.1']
    #allocation4 [shape = 's32[2]{0}', space=sflag, size = 0x8, scoped, tag = 'scoped memory for tpu_custom_call.1']
    #allocation5 [shape = 'u8[8192]{0}', space=vmem, size = 0x2000, scoped, tag = 'input window, operand 2']
    #allocation6 [shape = 's32[2]{0}', space=sflag, size = 0x8, scoped, tag = 'scoped memory for tpu_custom_call.1']
    #allocation7 [shape = 'u8[8192]{0}', space=vmem, size = 0x2000, scoped, tag = 'output window, operand 0']
    %8 = vsyncpa [#allocation3], 0
    %9 = vsyncpa [#allocation6], 0
    %s10 = scalar_lea.sflag [#allocation6], 1
    %11 = vsyncpa %s10, 0
    %12 = vsyncpa [#allocation4], 0
    %s13 = scalar_lea.sflag [#allocation4], 1
    %14 = vsyncpa %s13, 0
    loop: start=0, step=1, limit=5
    $region2: #{tpu_custom_call.1} parent=1 // loop_pre_header
      _
    $region3: #{tpu_custom_call.1} parent=1 // loop_header
      %s16 = sphi 0, %s20
      %p17 = scmp.ge.s32.totalorder %s16, 5
      %s23 = sphi 0, %s35
      %s24 = sphi 0, %s31
      %s25 = sphi 0, %s23
      %s26 = sphi 0, %s24
      %s27 = sphi 0, %s25
      %s28 = sphi 0, %s26
      %s38 = sphi 0, %s40
      %s41 = sphi 0, %s38
      %s42 = sphi 0, %s41
      %s58 = sphi 0, %s42
      %s64 = sphi 0, %s66
      %s67 = sphi 0, %s64
      %s68 = sphi 0, %s67
      %s84 = sphi 0, %s68
      %s92 = sphi 0, %s94
      %s95 = sphi 0, %s92
      %s96 = sphi 0, %s95
      %s112 = sphi 0, %s96
      %s120 = sphi 0, %s122
      %s123 = sphi 0, %s120
      %s124 = sphi 0, %s123
      %s140 = sphi 0, %s124
    $region4: #{tpu_custom_call.1} parent=1 // loop_header_branch
      %19 = sbr.rel (%p17) target = $region8
    $region5: #{tpu_custom_call.1} parent=1 // loop_body
      %s21 = ssub.s32 %s16, 1
      %s22 = ssub.s32 %s16, 2
      %s29 = sadd.s32 1, %s24
      %p30 = scmp.ge.s32.totalorder %s29, 3
      %s31 = scalar_select %p30, 0, %s29
      %s32 = sadd.s32 1, %s23
      %s33 = scalar_select %p30, %s32, %s23
      %p34 = scmp.ge.s32.totalorder %s33, 1
      %s35 = scalar_select %p34, 0, %s33
      %s36 = ssub.s32 %s23, %s35
      %p37 = scmp.eq.s32.totalorder %s36, 0
      %s39 = sadd.s32 %s38, 1
      %s40 = scalar_select %p37, %s38, %s39
      %p43 = pneg %p37
      %p44 = scmp.eq.s32.totalorder %s16, 2
      %p45 = por %p43, %p44
      %p46 = scmp.ne.s32.totalorder %s38, %s41
      %p47 = scmp.eq.s32.totalorder %s16, 0
      %p48 = por %p46, %p47
      %p49 = scmp.ne.s32.totalorder %s38, %s41
      %p50 = scmp.eq.s32.totalorder %s21, 2
      %p51 = por %p49, %p50
      %p52 = scmp.ne.s32.totalorder %s41, %s42
      %p53 = scmp.eq.s32.totalorder %s21, 0
      %p54 = por %p52, %p53
      %p55 = scmp.ne.s32.totalorder %s41, %s42
      %p56 = scmp.eq.s32.totalorder %s22, 2
      %p57 = por %p55, %p56
      %p59 = scmp.ne.s32.totalorder %s42, %s58
      %p60 = scmp.eq.s32.totalorder %s22, 0
      %p61 = por %p59, %p60
      %s62 = ssub.s32 %s23, %s35
      %p63 = scmp.eq.s32.totalorder %s62, 0
      %s65 = sadd.s32 %s64, 1
      %s66 = scalar_select %p63, %s64, %s65
      %p69 = pneg %p63
      %p70 = scmp.eq.s32.totalorder %s16, 2
      %p71 = por %p69, %p70
      %p72 = scmp.ne.s32.totalorder %s64, %s67
      %p73 = scmp.eq.s32.totalorder %s16, 0
      %p74 = por %p72, %p73
      %p75 = scmp.ne.s32.totalorder %s64, %s67
      %p76 = scmp.eq.s32.totalorder %s21, 2
      %p77 = por %p75, %p76
      %p78 = scmp.ne.s32.totalorder %s67, %s68
      %p79 = scmp.eq.s32.totalorder %s21, 0
      %p80 = por %p78, %p79
      %p81 = scmp.ne.s32.totalorder %s67, %s68
      %p82 = scmp.eq.s32.totalorder %s22, 2
      %p83 = por %p81, %p82
      %p85 = scmp.ne.s32.totalorder %s68, %s84
      %p86 = scmp.eq.s32.totalorder %s22, 0
      %p87 = por %p85, %p86
      %s88 = ssub.s32 %s23, %s35
      %s89 = ssub.s32 %s24, %s31
      %s90 = sor.u32 %s88, %s89
      %p91 = scmp.eq.s32.totalorder %s90, 0
      %s93 = sadd.s32 %s92, 1
      %s94 = scalar_select %p91, %s92, %s93
      %p97 = pneg %p91
      %p98 = scmp.eq.s32.totalorder %s16, 2
      %p99 = por %p97, %p98
      %p100 = scmp.ne.s32.totalorder %s92, %s95
      %p101 = scmp.eq.s32.totalorder %s16, 0
      %p102 = por %p100, %p101
      %p103 = scmp.ne.s32.totalorder %s92, %s95
      %p104 = scmp.eq.s32.totalorder %s21, 2
      %p105 = por %p103, %p104
      %p106 = scmp.ne.s32.totalorder %s95, %s96
      %p107 = scmp.eq.s32.totalorder %s21, 0
      %p108 = por %p106, %p107
      %p109 = scmp.ne.s32.totalorder %s95, %s96
      %p110 = scmp.eq.s32.totalorder %s22, 2
      %p111 = por %p109, %p110
      %p113 = scmp.ne.s32.totalorder %s96, %s112
      %p114 = scmp.eq.s32.totalorder %s22, 0
      %p115 = por %p113, %p114
      %s116 = ssub.s32 %s23, %s35
      %s117 = ssub.s32 %s24, %s31
      %s118 = sor.u32 %s116, %s117
      %p119 = scmp.eq.s32.totalorder %s118, 0
      %s121 = sadd.s32 %s120, 1
      %s122 = scalar_select %p119, %s120, %s121
      %p125 = pneg %p119
      %p126 = scmp.eq.s32.totalorder %s16, 2
      %p127 = por %p125, %p126
      %p128 = scmp.ne.s32.totalorder %s120, %s123
      %p129 = scmp.eq.s32.totalorder %s16, 0
      %p130 = por %p128, %p129
      %p131 = scmp.ne.s32.totalorder %s120, %s123
      %p132 = scmp.eq.s32.totalorder %s21, 2
      %p133 = por %p131, %p132
      %p134 = scmp.ne.s32.totalorder %s123, %s124
      %p135 = scmp.eq.s32.totalorder %s21, 0
      %p136 = por %p134, %p135
      %p137 = scmp.ne.s32.totalorder %s123, %s124
      %p138 = scmp.eq.s32.totalorder %s22, 2
      %p139 = por %p137, %p138
      %p141 = scmp.ne.s32.totalorder %s124, %s140
      %p142 = scmp.eq.s32.totalorder %s22, 0
      %p143 = por %p141, %p142
      %p144 = scmp.le.s32.totalorder 1, %s16
      %p145 = scmp.lt.s32.totalorder %s16, 4
      %p146 = pnand %p144, %p145
      %p147 = pneg %p146
      // Predicated region
      $region9: #{tpu_custom_call.1} parent=5 // pred_check
        _
      $region10: #{tpu_custom_call.1} parent=5 // pred_check_branch
        %149 = sbr.rel (%p146) target = $region12
      $region11: #{tpu_custom_call.1} parent=5 // pred_region
        %s150 = ssub.s32 %s16, 1
        // Predicated region
        $region13: #{tpu_custom_call.1} parent=11 // pred_check
          %p151 = pneg %p54
        $region14: #{tpu_custom_call.1} parent=11 // pred_check_branch
          %153 = sbr.rel (%p151) target = $region16
        $region15: #{tpu_custom_call.1} parent=11 // pred_region
          %p154 = scmp.lt.s32.totalorder %s25, 0
          %s155 = scalar_select %p154, %s25, 0
          %s156 = smul.addr %s155, 8
          %s157 = scalar_lea.vmem %s0, %s156
        $region16: #{tpu_custom_call.1} parent=11 // pred_fallthru
          _
        // Predicated region
        $region17: #{tpu_custom_call.1} parent=11 // pred_check
          %p158 = pneg %p80
        $region18: #{tpu_custom_call.1} parent=11 // pred_check_branch
          %160 = sbr.rel (%p158) target = $region20
        $region19: #{tpu_custom_call.1} parent=11 // pred_region
          %s162 = ssub.s32 384, 384
          %163 = vsyncadd [#allocation3], %s162
          %s164 = smul.addr %s25, 3
          %s165 = smul.addr %s164, 128
          %s166 = scalar_lea.hbm %s1, %s165
          %s168 = sshll.u32 [#allocation2], 4
          %s169 = int_to_ptr.vmem [resolvable:$true] %s168
          %171 = dma.hbm_to_vmem [thread:$0]  %s166, 384, %s169, [#allocation3]
        $region20: #{tpu_custom_call.1} parent=11 // pred_fallthru
          _
      $region12: #{tpu_custom_call.1} parent=5 // pred_fallthru
        _
      %p172 = scmp.lt.s32.totalorder %s16, 3
      // Predicated region
      $region21: #{tpu_custom_call.1} parent=5 // pred_check
        %p173 = pneg %p172
      $region22: #{tpu_custom_call.1} parent=5 // pred_check_branch
        %175 = sbr.rel (%p173) target = $region24
      $region23: #{tpu_custom_call.1} parent=5 // pred_region
        // Predicated region
        $region25: #{tpu_custom_call.1} parent=23 // pred_check
          %p176 = pneg %p102
        $region26: #{tpu_custom_call.1} parent=23 // pred_check_branch
          %178 = sbr.rel (%p176) target = $region28
        $region27: #{tpu_custom_call.1} parent=23 // pred_region
          %s179 = sand.u32 %s92, 1
          %s180 = scalar_lea.sflag [#allocation6], %s179
          %s181 = sand.u32 %s92, 1
          %s182 = smul.addr %s181, 8
          %s183 = scalar_lea.vmem [#allocation5], %s182
          %s185 = ssub.s32 128, 128
          %186 = vsyncadd %s180, %s185
          %s187 = smul.addr %s23, 3
          %s188 = sadd.s32 %s24, %s187
          %s189 = smul.addr %s188, 128
          %s190 = scalar_lea.hbm %s2, %s189
          %s192 = sshll.u32 %s183, 4
          %s193 = int_to_ptr.vmem [resolvable:$true] %s192
          %195 = dma.hbm_to_vmem [thread:$0]  %s190, 128, %s193, %s180
        $region28: #{tpu_custom_call.1} parent=23 // pred_fallthru
          _
      $region24: #{tpu_custom_call.1} parent=5 // pred_fallthru
        _
      %p196 = scmp.le.s32.totalorder 1, %s16
      %p197 = scmp.lt.s32.totalorder %s16, 4
      %p198 = pnand %p196, %p197
      %p199 = pneg %p198
      // Predicated region
      $region29: #{tpu_custom_call.1} parent=5 // pred_check
        _
      $region30: #{tpu_custom_call.1} parent=5 // pred_check_branch
        %201 = sbr.rel (%p198) target = $region32
      $region31: #{tpu_custom_call.1} parent=5 // pred_region
        %s202 = ssub.s32 %s16, 1
        // Predicated region
        $region33: #{tpu_custom_call.1} parent=31 // pred_check
          %p203 = pneg %p80
        $region34: #{tpu_custom_call.1} parent=31 // pred_check_branch
          %205 = sbr.rel (%p203) target = $region36
        $region35: #{tpu_custom_call.1} parent=31 // pred_region
          %206 = dma.done [#allocation3], 384
        $region36: #{tpu_custom_call.1} parent=31 // pred_fallthru
          _
        %s207 = sand.u32 %s95, 1
        %s208 = scalar_lea.sflag [#allocation6], %s207
        %s209 = sand.u32 %s95, 1
        %s210 = smul.addr %s209, 8
        %s211 = scalar_lea.vmem [#allocation5], %s210
        // Predicated region
        $region37: #{tpu_custom_call.1} parent=31 // pred_check
          %p212 = pneg %p108
        $region38: #{tpu_custom_call.1} parent=31 // pred_check_branch
          %214 = sbr.rel (%p212) target = $region40
        $region39: #{tpu_custom_call.1} parent=31 // pred_region
          %215 = dma.done %s208, 128
        $region40: #{tpu_custom_call.1} parent=31 // pred_fallthru
          _
        %p216 = scmp.lt.s32.totalorder %s25, 0
        %s217 = scalar_select %p216, %s25, 0
        %s218 = smul.addr %s217, 8
        %s219 = scalar_lea.vmem %s0, %s218
        %p220 = pneg %p54
        %p221 = pneg %p51
        %p222 = pneg %p80
        %p223 = pneg %p77
        %s224 = sand.u32 %s95, 1
        %s225 = scalar_lea.sflag [#allocation6], %s224
        %s226 = sand.u32 %s95, 1
        %s227 = smul.addr %s226, 8
        %s228 = scalar_lea.vmem [#allocation5], %s227
        %p229 = pneg %p108
        %p230 = pneg %p105
        %p231 = pneg %p136
        %p232 = pneg %p133
        %s233 = sand.u32 %s123, 1
        %s234 = scalar_lea.sflag [#allocation4], %s233
        %s235 = sand.u32 %s123, 1
        %s236 = smul.addr %s235, 8
        %s237 = scalar_lea.vmem [#allocation7], %s236
        %p238 = scmp.lt.s32.totalorder %s25, 0
        %s239 = scalar_select %p238, %s25, 0
        %s240 = smul.addr %s239, 8
        %s241 = scalar_lea.vmem %s0, %s240
        %s242 = smul.u32 %s26, 128
        %s243 = sshra.s32 %s242, 7
        %s244 = sand.u32 %s242, 127
        %s245 = smul.addr %s243, 8
        %s246 = scalar_lea.vmem [#allocation2], %s245
        %v247 = vld [vmem:[%s246] sm:$0xff]
        %v249 = vcombine.high %v247, %v247
        %v251 = vunpack.c.l.s4 1966171168
        %v252 = vunpack.c.0.s8 %v251
        %v253 = vlaneseq
        %v254 = vshrl.u32 %v253, 7
        %v255 = vsub.s32 %v252, %v254
        %v256 = vrot.slane %v247, %v255
        %v258 = vunpack.c.l.s4 1966171168
        %v259 = vunpack.c.0.s8 %v258
        %v260 = vlaneseq
        %v261 = vshrl.u32 %v260, 7
        %v262 = vsub.s32 %v259, %v261
        %v263 = vrot.slane %v249, %v262
        %v264 = vcombine.high %v256, %v256
        %v265 = vcombine.high %v263, %v263
        %v267 = vunpack.c.l.s4 1966171168
        %v268 = vunpack.c.0.s8 %v267
        %v269 = vlaneseq
        %v270 = vshrl.u32 %v269, 7
        %v271 = vsub.s32 %v268, %v270
        %v272 = vrot.slane %v256, %v271
        %v274 = vunpack.c.l.s4 1966171168
        %v275 = vunpack.c.0.s8 %v274
        %v276 = vlaneseq
        %v277 = vshrl.u32 %v276, 7
        %v278 = vsub.s32 %v275, %v277
        %v279 = vrot.slane %v263, %v278
        %v281 = vunpack.c.l.s4 1966171168
        %v282 = vunpack.c.0.s8 %v281
        %v283 = vlaneseq
        %v284 = vshrl.u32 %v283, 7
        %v285 = vsub.s32 %v282, %v284
        %v286 = vrot.slane %v264, %v285
        %v288 = vunpack.c.l.s4 1966171168
        %v289 = vunpack.c.0.s8 %v288
        %v290 = vlaneseq
        %v291 = vshrl.u32 %v290, 7
        %v292 = vsub.s32 %v289, %v291
        %v293 = vrot.slane %v265, %v292
        %v294 = vcombine.high %v272, %v272
        %v295 = vcombine.high %v279, %v279
        %v296 = vcombine.high %v286, %v286
        %v297 = vcombine.high %v293, %v293
        %v298 = vlaneseq
        %v299 = vshrl.u32 %v298, 7
        %v300 = vadd.s32 %v299, 8
        %v301 = vadd.s32 %v299, 16
        %v302 = vadd.s32 %v299, 24
        %v303 = vadd.s32 %v299, 32
        %v304 = vadd.s32 %v299, 40
        %v305 = vadd.s32 %v299, 48
        %v306 = vadd.s32 %v299, 56
        %v307 = vadd.s32 %v299, 64
        %v308 = vadd.s32 %v299, 72
        %v309 = vadd.s32 %v299, 80
        %v310 = vadd.s32 %v299, 88
        %v311 = vadd.s32 %v299, 96
        %v312 = vadd.s32 %v299, 104
        %v313 = vadd.s32 %v299, 112
        %v314 = vadd.s32 %v299, 120
        %v315 = vlaneseq
        %v316 = vand.u32 %v315, 127
        %v317 = vsub.s32 %v299, %v316
        %v318 = vsub.s32 %v300, %v316
        %v319 = vsub.s32 %v301, %v316
        %v320 = vsub.s32 %v302, %v316
        %v321 = vsub.s32 %v303, %v316
        %v322 = vsub.s32 %v304, %v316
        %v323 = vsub.s32 %v305, %v316
        %v324 = vsub.s32 %v306, %v316
        %v325 = vsub.s32 %v307, %v316
        %v326 = vsub.s32 %v308, %v316
        %v327 = vsub.s32 %v309, %v316
        %v328 = vsub.s32 %v310, %v316
        %v329 = vsub.s32 %v311, %v316
        %v330 = vsub.s32 %v312, %v316
        %v331 = vsub.s32 %v313, %v316
        %v332 = vsub.s32 %v314, %v316
        %v333 = vld [vmem:[#allocation2] sm:$0xff]
        %v334 = vlaneseq
        %v335 = vshrl.u32 %v334, 7
        %v336 = vsub.s32 0, %v335
        %v337 = vrot.slane %v333, %v336
        %339 = vbcast.lane.b32.xlu0 %v337, 256
        %v340 = vpop.permute.xlu0 %339
        %s342 = sor.u32 256, 8
        %343 = vbcast.lane.b32.xlu0 %v337, %s342
        %v344 = vpop.permute.xlu0 %343
        %s346 = sor.u32 256, 16
        %347 = vbcast.lane.b32.xlu0 %v337, %s346
        %v348 = vpop.permute.xlu0 %347
        %s350 = sor.u32 256, 24
        %351 = vbcast.lane.b32.xlu0 %v337, %s350
        %v352 = vpop.permute.xlu0 %351
        %s354 = sor.u32 256, 32
        %355 = vbcast.lane.b32.xlu0 %v337, %s354
        %v356 = vpop.permute.xlu0 %355
        %s358 = sor.u32 256, 40
        %359 = vbcast.lane.b32.xlu0 %v337, %s358
        %v360 = vpop.permute.xlu0 %359
        %s362 = sor.u32 256, 48
        %363 = vbcast.lane.b32.xlu0 %v337, %s362
        %v364 = vpop.permute.xlu0 %363
        %s366 = sor.u32 256, 56
        %367 = vbcast.lane.b32.xlu0 %v337, %s366
        %v368 = vpop.permute.xlu0 %367
        %s370 = sor.u32 256, 64
        %371 = vbcast.lane.b32.xlu0 %v337, %s370
        %v372 = vpop.permute.xlu0 %371
        %s374 = sor.u32 256, 72
        %375 = vbcast.lane.b32.xlu0 %v337, %s374
        %v376 = vpop.permute.xlu0 %375
        %s378 = sor.u32 256, 80
        %379 = vbcast.lane.b32.xlu0 %v337, %s378
        %v380 = vpop.permute.xlu0 %379
        %s382 = sor.u32 256, 88
        %383 = vbcast.lane.b32.xlu0 %v337, %s382
        %v384 = vpop.permute.xlu0 %383
        %s386 = sor.u32 256, 96
        %387 = vbcast.lane.b32.xlu0 %v337, %s386
        %v388 = vpop.permute.xlu0 %387
        %s390 = sor.u32 256, 104
        %391 = vbcast.lane.b32.xlu0 %v337, %s390
        %v392 = vpop.permute.xlu0 %391
        %s394 = sor.u32 256, 112
        %395 = vbcast.lane.b32.xlu0 %v337, %s394
        %v396 = vpop.permute.xlu0 %395
        %s398 = sor.u32 256, 120
        %399 = vbcast.lane.b32.xlu0 %v337, %s398
        %v400 = vpop.permute.xlu0 %399
        %v401 = vlaneseq
        %v402 = vshrl.u32 %v401, 7
        %v403 = vsub.s32 1, %v402
        %v404 = vrot.slane %v333, %v403
        %406 = vbcast.lane.b32.xlu0 %v404, 256
        %v407 = vpop.permute.xlu0 %406
        %s409 = sor.u32 256, 8
        %410 = vbcast.lane.b32.xlu0 %v404, %s409
        %v411 = vpop.permute.xlu0 %410
        %s413 = sor.u32 256, 16
        %414 = vbcast.lane.b32.xlu0 %v404, %s413
        %v415 = vpop.permute.xlu0 %414
        %s417 = sor.u32 256, 24
        %418 = vbcast.lane.b32.xlu0 %v404, %s417
        %v419 = vpop.permute.xlu0 %418
        %s421 = sor.u32 256, 32
        %422 = vbcast.lane.b32.xlu0 %v404, %s421
        %v423 = vpop.permute.xlu0 %422
        %s425 = sor.u32 256, 40
        %426 = vbcast.lane.b32.xlu0 %v404, %s425
        %v427 = vpop.permute.xlu0 %426
        %s429 = sor.u32 256, 48
        %430 = vbcast.lane.b32.xlu0 %v404, %s429
        %v431 = vpop.permute.xlu0 %430
        %s433 = sor.u32 256, 56
        %434 = vbcast.lane.b32.xlu0 %v404, %s433
        %v435 = vpop.permute.xlu0 %434
        %s437 = sor.u32 256, 64
        %438 = vbcast.lane.b32.xlu0 %v404, %s437
        %v439 = vpop.permute.xlu0 %438
        %s441 = sor.u32 256, 72
        %442 = vbcast.lane.b32.xlu0 %v404, %s441
        %v443 = vpop.permute.xlu0 %442
        %s445 = sor.u32 256, 80
        %446 = vbcast.lane.b32.xlu0 %v404, %s445
        %v447 = vpop.permute.xlu0 %446
        %s449 = sor.u32 256, 88
        %450 = vbcast.lane.b32.xlu0 %v404, %s449
        %v451 = vpop.permute.xlu0 %450
        %s453 = sor.u32 256, 96
        %454 = vbcast.lane.b32.xlu0 %v404, %s453
        %v455 = vpop.permute.xlu0 %454
        %s457 = sor.u32 256, 104
        %458 = vbcast.lane.b32.xlu0 %v404, %s457
        %v459 = vpop.permute.xlu0 %458
        %s461 = sor.u32 256, 112
        %462 = vbcast.lane.b32.xlu0 %v404, %s461
        %v463 = vpop.permute.xlu0 %462
        %s465 = sor.u32 256, 120
        %466 = vbcast.lane.b32.xlu0 %v404, %s465
        %v467 = vpop.permute.xlu0 %466
        %v468 = vlaneseq
        %v469 = vshrl.u32 %v468, 7
        %v470 = vsub.s32 2, %v469
        %v471 = vrot.slane %v333, %v470
        %473 = vbcast.lane.b32.xlu0 %v471, 256
        %v474 = vpop.permute.xlu0 %473
        %s476 = sor.u32 256, 8
        %477 = vbcast.lane.b32.xlu0 %v471, %s476
        %v478 = vpop.permute.xlu0 %477
        %s480 = sor.u32 256, 16
        %481 = vbcast.lane.b32.xlu0 %v471, %s480
        %v482 = vpop.permute.xlu0 %481
        %s484 = sor.u32 256, 24
        %485 = vbcast.lane.b32.xlu0 %v471, %s484
        %v486 = vpop.permute.xlu0 %485
        %s488 = sor.u32 256, 32
        %489 = vbcast.lane.b32.xlu0 %v471, %s488
        %v490 = vpop.permute.xlu0 %489
        %s492 = sor.u32 256, 40
        %493 = vbcast.lane.b32.xlu0 %v471, %s492
        %v494 = vpop.permute.xlu0 %493
        %s496 = sor.u32 256, 48
        %497 = vbcast.lane.b32.xlu0 %v471, %s496
        %v498 = vpop.permute.xlu0 %497
        %s500 = sor.u32 256, 56
        %501 = vbcast.lane.b32.xlu0 %v471, %s500
        %v502 = vpop.permute.xlu0 %501
        %s504 = sor.u32 256, 64
        %505 = vbcast.lane.b32.xlu0 %v471, %s504
        %v506 = vpop.permute.xlu0 %505
        %s508 = sor.u32 256, 72
        %509 = vbcast.lane.b32.xlu0 %v471, %s508
        %v510 = vpop.permute.xlu0 %509
        %s512 = sor.u32 256, 80
        %513 = vbcast.lane.b32.xlu0 %v471, %s512
        %v514 = vpop.permute.xlu0 %513
        %s516 = sor.u32 256, 88
        %517 = vbcast.lane.b32.xlu0 %v471, %s516
        %v518 = vpop.permute.xlu0 %517
        %s520 = sor.u32 256, 96
        %521 = vbcast.lane.b32.xlu0 %v471, %s520
        %v522 = vpop.permute.xlu0 %521
        %s524 = sor.u32 256, 104
        %525 = vbcast.lane.b32.xlu0 %v471, %s524
        %v526 = vpop.permute.xlu0 %525
        %s528 = sor.u32 256, 112
        %529 = vbcast.lane.b32.xlu0 %v471, %s528
        %v530 = vpop.permute.xlu0 %529
        %s532 = sor.u32 256, 120
        %533 = vbcast.lane.b32.xlu0 %v471, %s532
        %v534 = vpop.permute.xlu0 %533
        %v535 = vlaneseq
        %v536 = vshrl.u32 %v535, 7
        %v537 = vsub.s32 3, %v536
        %v538 = vrot.slane %v333, %v537
        %540 = vbcast.lane.b32.xlu0 %v538, 256
        %v541 = vpop.permute.xlu0 %540
        %s543 = sor.u32 256, 8
        %544 = vbcast.lane.b32.xlu0 %v538, %s543
        %v545 = vpop.permute.xlu0 %544
        %s547 = sor.u32 256, 16
        %548 = vbcast.lane.b32.xlu0 %v538, %s547
        %v549 = vpop.permute.xlu0 %548
        %s551 = sor.u32 256, 24
        %552 = vbcast.lane.b32.xlu0 %v538, %s551
        %v553 = vpop.permute.xlu0 %552
        %s555 = sor.u32 256, 32
        %556 = vbcast.lane.b32.xlu0 %v538, %s555
        %v557 = vpop.permute.xlu0 %556
        %s559 = sor.u32 256, 40
        %560 = vbcast.lane.b32.xlu0 %v538, %s559
        %v561 = vpop.permute.xlu0 %560
        %s563 = sor.u32 256, 48
        %564 = vbcast.lane.b32.xlu0 %v538, %s563
        %v565 = vpop.permute.xlu0 %564
        %s567 = sor.u32 256, 56
        %568 = vbcast.lane.b32.xlu0 %v538, %s567
        %v569 = vpop.permute.xlu0 %568
        %s571 = sor.u32 256, 64
        %572 = vbcast.lane.b32.xlu0 %v538, %s571
        %v573 = vpop.permute.xlu0 %572
        %s575 = sor.u32 256, 72
        %576 = vbcast.lane.b32.xlu0 %v538, %s575
        %v577 = vpop.permute.xlu0 %576
        %s579 = sor.u32 256, 80
        %580 = vbcast.lane.b32.xlu0 %v538, %s579
        %v581 = vpop.permute.xlu0 %580
        %s583 = sor.u32 256, 88
        %584 = vbcast.lane.b32.xlu0 %v538, %s583
        %v585 = vpop.permute.xlu0 %584
        %s587 = sor.u32 256, 96
        %588 = vbcast.lane.b32.xlu0 %v538, %s587
        %v589 = vpop.permute.xlu0 %588
        %s591 = sor.u32 256, 104
        %592 = vbcast.lane.b32.xlu0 %v538, %s591
        %v593 = vpop.permute.xlu0 %592
        %s595 = sor.u32 256, 112
        %596 = vbcast.lane.b32.xlu0 %v538, %s595
        %v597 = vpop.permute.xlu0 %596
        %s599 = sor.u32 256, 120
        %600 = vbcast.lane.b32.xlu0 %v538, %s599
        %v601 = vpop.permute.xlu0 %600
        %v602 = vlaneseq
        %v603 = vshrl.u32 %v602, 7
        %v604 = vsub.s32 4, %v603
        %v605 = vrot.slane %v333, %v604
        %607 = vbcast.lane.b32.xlu0 %v605, 256
        %v608 = vpop.permute.xlu0 %607
        %s610 = sor.u32 256, 8
        %611 = vbcast.lane.b32.xlu0 %v605, %s610
        %v612 = vpop.permute.xlu0 %611
        %s614 = sor.u32 256, 16
        %615 = vbcast.lane.b32.xlu0 %v605, %s614
        %v616 = vpop.permute.xlu0 %615
        %s618 = sor.u32 256, 24
        %619 = vbcast.lane.b32.xlu0 %v605, %s618
        %v620 = vpop.permute.xlu0 %619
        %s622 = sor.u32 256, 32
        %623 = vbcast.lane.b32.xlu0 %v605, %s622
        %v624 = vpop.permute.xlu0 %623
        %s626 = sor.u32 256, 40
        %627 = vbcast.lane.b32.xlu0 %v605, %s626
        %v628 = vpop.permute.xlu0 %627
        %s630 = sor.u32 256, 48
        %631 = vbcast.lane.b32.xlu0 %v605, %s630
        %v632 = vpop.permute.xlu0 %631
        %s634 = sor.u32 256, 56
        %635 = vbcast.lane.b32.xlu0 %v605, %s634
        %v636 = vpop.permute.xlu0 %635
        %s638 = sor.u32 256, 64
        %639 = vbcast.lane.b32.xlu0 %v605, %s638
        %v640 = vpop.permute.xlu0 %639
        %s642 = sor.u32 256, 72
        %643 = vbcast.lane.b32.xlu0 %v605, %s642
        %v644 = vpop.permute.xlu0 %643
        %s646 = sor.u32 256, 80
        %647 = vbcast.lane.b32.xlu0 %v605, %s646
        %v648 = vpop.permute.xlu0 %647
        %s650 = sor.u32 256, 88
        %651 = vbcast.lane.b32.xlu0 %v605, %s650
        %v652 = vpop.permute.xlu0 %651
        %s654 = sor.u32 256, 96
        %655 = vbcast.lane.b32.xlu0 %v605, %s654
        %v656 = vpop.permute.xlu0 %655
        %s658 = sor.u32 256, 104
        %659 = vbcast.lane.b32.xlu0 %v605, %s658
        %v660 = vpop.permute.xlu0 %659
        %s662 = sor.u32 256, 112
        %663 = vbcast.lane.b32.xlu0 %v605, %s662
        %v664 = vpop.permute.xlu0 %663
        %s666 = sor.u32 256, 120
        %667 = vbcast.lane.b32.xlu0 %v605, %s666
        %v668 = vpop.permute.xlu0 %667
        %v669 = vlaneseq
        %v670 = vshrl.u32 %v669, 7
        %v671 = vsub.s32 5, %v670
        %v672 = vrot.slane %v333, %v671
        %674 = vbcast.lane.b32.xlu0 %v672, 256
        %v675 = vpop.permute.xlu0 %674
        %s677 = sor.u32 256, 8
        %678 = vbcast.lane.b32.xlu0 %v672, %s677
        %v679 = vpop.permute.xlu0 %678
        %s681 = sor.u32 256, 16
        %682 = vbcast.lane.b32.xlu0 %v672, %s681
        %v683 = vpop.permute.xlu0 %682
        %s685 = sor.u32 256, 24
        %686 = vbcast.lane.b32.xlu0 %v672, %s685
        %v687 = vpop.permute.xlu0 %686
        %s689 = sor.u32 256, 32
        %690 = vbcast.lane.b32.xlu0 %v672, %s689
        %v691 = vpop.permute.xlu0 %690
        %s693 = sor.u32 256, 40
        %694 = vbcast.lane.b32.xlu0 %v672, %s693
        %v695 = vpop.permute.xlu0 %694
        %s697 = sor.u32 256, 48
        %698 = vbcast.lane.b32.xlu0 %v672, %s697
        %v699 = vpop.permute.xlu0 %698
        %s701 = sor.u32 256, 56
        %702 = vbcast.lane.b32.xlu0 %v672, %s701
        %v703 = vpop.permute.xlu0 %702
        %s705 = sor.u32 256, 64
        %706 = vbcast.lane.b32.xlu0 %v672, %s705
        %v707 = vpop.permute.xlu0 %706
        %s709 = sor.u32 256, 72
        %710 = vbcast.lane.b32.xlu0 %v672, %s709
        %v711 = vpop.permute.xlu0 %710
        %s713 = sor.u32 256, 80
        %714 = vbcast.lane.b32.xlu0 %v672, %s713
        %v715 = vpop.permute.xlu0 %714
        %s717 = sor.u32 256, 88
        %718 = vbcast.lane.b32.xlu0 %v672, %s717
        %v719 = vpop.permute.xlu0 %718
        %s721 = sor.u32 256, 96
        %722 = vbcast.lane.b32.xlu0 %v672, %s721
        %v723 = vpop.permute.xlu0 %722
        %s725 = sor.u32 256, 104
        %726 = vbcast.lane.b32.xlu0 %v672, %s725
        %v727 = vpop.permute.xlu0 %726
        %s729 = sor.u32 256, 112
        %730 = vbcast.lane.b32.xlu0 %v672, %s729
        %v731 = vpop.permute.xlu0 %730
        %s733 = sor.u32 256, 120
        %734 = vbcast.lane.b32.xlu0 %v672, %s733
        %v735 = vpop.permute.xlu0 %734
        %v736 = vlaneseq
        %v737 = vshrl.u32 %v736, 7
        %v738 = vsub.s32 6, %v737
        %v739 = vrot.slane %v333, %v738
        %741 = vbcast.lane.b32.xlu0 %v739, 256
        %v742 = vpop.permute.xlu0 %741
        %s744 = sor.u32 256, 8
        %745 = vbcast.lane.b32.xlu0 %v739, %s744
        %v746 = vpop.permute.xlu0 %745
        %s748 = sor.u32 256, 16
        %749 = vbcast.lane.b32.xlu0 %v739, %s748
        %v750 = vpop.permute.xlu0 %749
        %s752 = sor.u32 256, 24
        %753 = vbcast.lane.b32.xlu0 %v739, %s752
        %v754 = vpop.permute.xlu0 %753
        %s756 = sor.u32 256, 32
        %757 = vbcast.lane.b32.xlu0 %v739, %s756
        %v758 = vpop.permute.xlu0 %757
        %s760 = sor.u32 256, 40
        %761 = vbcast.lane.b32.xlu0 %v739, %s760
        %v762 = vpop.permute.xlu0 %761
        %s764 = sor.u32 256, 48
        %765 = vbcast.lane.b32.xlu0 %v739, %s764
        %v766 = vpop.permute.xlu0 %765
        %s768 = sor.u32 256, 56
        %769 = vbcast.lane.b32.xlu0 %v739, %s768
        %v770 = vpop.permute.xlu0 %769
        %s772 = sor.u32 256, 64
        %773 = vbcast.lane.b32.xlu0 %v739, %s772
        %v774 = vpop.permute.xlu0 %773
        %s776 = sor.u32 256, 72
        %777 = vbcast.lane.b32.xlu0 %v739, %s776
        %v778 = vpop.permute.xlu0 %777
        %s780 = sor.u32 256, 80
        %781 = vbcast.lane.b32.xlu0 %v739, %s780
        %v782 = vpop.permute.xlu0 %781
        %s784 = sor.u32 256, 88
        %785 = vbcast.lane.b32.xlu0 %v739, %s784
        %v786 = vpop.permute.xlu0 %785
        %s788 = sor.u32 256, 96
        %789 = vbcast.lane.b32.xlu0 %v739, %s788
        %v790 = vpop.permute.xlu0 %789
        %s792 = sor.u32 256, 104
        %793 = vbcast.lane.b32.xlu0 %v739, %s792
        %v794 = vpop.permute.xlu0 %793
        %s796 = sor.u32 256, 112
        %797 = vbcast.lane.b32.xlu0 %v739, %s796
        %v798 = vpop.permute.xlu0 %797
        %s800 = sor.u32 256, 120
        %801 = vbcast.lane.b32.xlu0 %v739, %s800
        %v802 = vpop.permute.xlu0 %801
        %v803 = vlaneseq
        %v804 = vshrl.u32 %v803, 7
        %v805 = vsub.s32 7, %v804
        %v806 = vrot.slane %v333, %v805
        %808 = vbcast.lane.b32.xlu0 %v806, 256
        %v809 = vpop.permute.xlu0 %808
        %s811 = sor.u32 256, 8
        %812 = vbcast.lane.b32.xlu0 %v806, %s811
        %v813 = vpop.permute.xlu0 %812
        %s815 = sor.u32 256, 16
        %816 = vbcast.lane.b32.xlu0 %v806, %s815
        %v817 = vpop.permute.xlu0 %816
        %s819 = sor.u32 256, 24
        %820 = vbcast.lane.b32.xlu0 %v806, %s819
        %v821 = vpop.permute.xlu0 %820
        %s823 = sor.u32 256, 32
        %824 = vbcast.lane.b32.xlu0 %v806, %s823
        %v825 = vpop.permute.xlu0 %824
        %s827 = sor.u32 256, 40
        %828 = vbcast.lane.b32.xlu0 %v806, %s827
        %v829 = vpop.permute.xlu0 %828
        %s831 = sor.u32 256, 48
        %832 = vbcast.lane.b32.xlu0 %v806, %s831
        %v833 = vpop.permute.xlu0 %832
        %s835 = sor.u32 256, 56
        %836 = vbcast.lane.b32.xlu0 %v806, %s835
        %v837 = vpop.permute.xlu0 %836
        %s839 = sor.u32 256, 64
        %840 = vbcast.lane.b32.xlu0 %v806, %s839
        %v841 = vpop.permute.xlu0 %840
        %s843 = sor.u32 256, 72
        %844 = vbcast.lane.b32.xlu0 %v806, %s843
        %v845 = vpop.permute.xlu0 %844
        %s847 = sor.u32 256, 80
        %848 = vbcast.lane.b32.xlu0 %v806, %s847
        %v849 = vpop.permute.xlu0 %848
        %s851 = sor.u32 256, 88
        %852 = vbcast.lane.b32.xlu0 %v806, %s851
        %v853 = vpop.permute.xlu0 %852
        %s855 = sor.u32 256, 96
        %856 = vbcast.lane.b32.xlu0 %v806, %s855
        %v857 = vpop.permute.xlu0 %856
        %s859 = sor.u32 256, 104
        %860 = vbcast.lane.b32.xlu0 %v806, %s859
        %v861 = vpop.permute.xlu0 %860
        %s863 = sor.u32 256, 112
        %864 = vbcast.lane.b32.xlu0 %v806, %s863
        %v865 = vpop.permute.xlu0 %864
        %s867 = sor.u32 256, 120
        %868 = vbcast.lane.b32.xlu0 %v806, %s867
        %v869 = vpop.permute.xlu0 %868
        %v870 = vlaneseq
        %v871 = vshrl.u32 %v870, 7
        %v872 = vsub.s32 0, %v871
        %v873 = vrot.slane %v272, %v872
        %v874 = vlaneseq
        %v875 = vshrl.u32 %v874, 7
        %v876 = vsub.s32 0, %v875
        %v877 = vrot.slane %v286, %v876
        %v878 = vlaneseq
        %v879 = vshrl.u32 %v878, 7
        %v880 = vsub.s32 0, %v879
        %v881 = vrot.slane %v294, %v880
        %v882 = vlaneseq
        %v883 = vshrl.u32 %v882, 7
        %v884 = vsub.s32 0, %v883
        %v885 = vrot.slane %v296, %v884
        %v886 = vlaneseq
        %v887 = vshrl.u32 %v886, 7
        %v888 = vsub.s32 0, %v887
        %v889 = vrot.slane %v279, %v888
        %v890 = vlaneseq
        %v891 = vshrl.u32 %v890, 7
        %v892 = vsub.s32 0, %v891
        %v893 = vrot.slane %v293, %v892
        %v894 = vlaneseq
        %v895 = vshrl.u32 %v894, 7
        %v896 = vsub.s32 0, %v895
        %v897 = vrot.slane %v295, %v896
        %v898 = vlaneseq
        %v899 = vshrl.u32 %v898, 7
        %v900 = vsub.s32 0, %v899
        %v901 = vrot.slane %v297, %v900
        %vm910 = vcmp.gt.f32.partialorder %v340, %v873
        %vm911 = vcmp.gt.f32.partialorder %v344, %v873
        %vm912 = vcmp.gt.f32.partialorder %v348, %v873
        %vm913 = vcmp.gt.f32.partialorder %v352, %v873
        %vm914 = vcmp.gt.f32.partialorder %v356, %v873
        %vm915 = vcmp.gt.f32.partialorder %v360, %v873
        %vm916 = vcmp.gt.f32.partialorder %v364, %v873
        %vm917 = vcmp.gt.f32.partialorder %v368, %v873
        %vm918 = vcmp.gt.f32.partialorder %v372, %v873
        %vm919 = vcmp.gt.f32.partialorder %v376, %v873
        %vm920 = vcmp.gt.f32.partialorder %v380, %v873
        %vm921 = vcmp.gt.f32.partialorder %v384, %v873
        %vm922 = vcmp.gt.f32.partialorder %v388, %v873
        %vm923 = vcmp.gt.f32.partialorder %v392, %v873
        %vm924 = vcmp.gt.f32.partialorder %v396, %v873
        %vm925 = vcmp.gt.f32.partialorder %v400, %v873
        %vm926 = vcmp.gt.f32.partialorder %v407, %v877
        %vm927 = vcmp.gt.f32.partialorder %v411, %v877
        %vm928 = vcmp.gt.f32.partialorder %v415, %v877
        %vm929 = vcmp.gt.f32.partialorder %v419, %v877
        %vm930 = vcmp.gt.f32.partialorder %v423, %v877
        %vm931 = vcmp.gt.f32.partialorder %v427, %v877
        %vm932 = vcmp.gt.f32.partialorder %v431, %v877
        %vm933 = vcmp.gt.f32.partialorder %v435, %v877
        %vm934 = vcmp.gt.f32.partialorder %v439, %v877
        %vm935 = vcmp.gt.f32.partialorder %v443, %v877
        %vm936 = vcmp.gt.f32.partialorder %v447, %v877
        %vm937 = vcmp.gt.f32.partialorder %v451, %v877
        %vm938 = vcmp.gt.f32.partialorder %v455, %v877
        %vm939 = vcmp.gt.f32.partialorder %v459, %v877
        %vm940 = vcmp.gt.f32.partialorder %v463, %v877
        %vm941 = vcmp.gt.f32.partialorder %v467, %v877
        %vm942 = vcmp.gt.f32.partialorder %v474, %v881
        %vm943 = vcmp.gt.f32.partialorder %v478, %v881
        %vm944 = vcmp.gt.f32.partialorder %v482, %v881
        %vm945 = vcmp.gt.f32.partialorder %v486, %v881
        %vm946 = vcmp.gt.f32.partialorder %v490, %v881
        %vm947 = vcmp.gt.f32.partialorder %v494, %v881
        %vm948 = vcmp.gt.f32.partialorder %v498, %v881
        %vm949 = vcmp.gt.f32.partialorder %v502, %v881
        %vm950 = vcmp.gt.f32.partialorder %v506, %v881
        %vm951 = vcmp.gt.f32.partialorder %v510, %v881
        %vm952 = vcmp.gt.f32.partialorder %v514, %v881
        %vm953 = vcmp.gt.f32.partialorder %v518, %v881
        %vm954 = vcmp.gt.f32.partialorder %v522, %v881
        %vm955 = vcmp.gt.f32.partialorder %v526, %v881
        %vm956 = vcmp.gt.f32.partialorder %v530, %v881
        %vm957 = vcmp.gt.f32.partialorder %v534, %v881
        %vm958 = vcmp.gt.f32.partialorder %v541, %v885
        %vm959 = vcmp.gt.f32.partialorder %v545, %v885
        %vm960 = vcmp.gt.f32.partialorder %v549, %v885
        %vm961 = vcmp.gt.f32.partialorder %v553, %v885
        %vm962 = vcmp.gt.f32.partialorder %v557, %v885
        %vm963 = vcmp.gt.f32.partialorder %v561, %v885
        %vm964 = vcmp.gt.f32.partialorder %v565, %v885
        %vm965 = vcmp.gt.f32.partialorder %v569, %v885
        %vm966 = vcmp.gt.f32.partialorder %v573, %v885
        %vm967 = vcmp.gt.f32.partialorder %v577, %v885
        %vm968 = vcmp.gt.f32.partialorder %v581, %v885
        %vm969 = vcmp.gt.f32.partialorder %v585, %v885
        %vm970 = vcmp.gt.f32.partialorder %v589, %v885
        %vm971 = vcmp.gt.f32.partialorder %v593, %v885
        %vm972 = vcmp.gt.f32.partialorder %v597, %v885
        %vm973 = vcmp.gt.f32.partialorder %v601, %v885
        %vm974 = vcmp.gt.f32.partialorder %v608, %v889
        %vm975 = vcmp.gt.f32.partialorder %v612, %v889
        %vm976 = vcmp.gt.f32.partialorder %v616, %v889
        %vm977 = vcmp.gt.f32.partialorder %v620, %v889
        %vm978 = vcmp.gt.f32.partialorder %v624, %v889
        %vm979 = vcmp.gt.f32.partialorder %v628, %v889
        %vm980 = vcmp.gt.f32.partialorder %v632, %v889
        %vm981 = vcmp.gt.f32.partialorder %v636, %v889
        %vm982 = vcmp.gt.f32.partialorder %v640, %v889
        %vm983 = vcmp.gt.f32.partialorder %v644, %v889
        %vm984 = vcmp.gt.f32.partialorder %v648, %v889
        %vm985 = vcmp.gt.f32.partialorder %v652, %v889
        %vm986 = vcmp.gt.f32.partialorder %v656, %v889
        %vm987 = vcmp.gt.f32.partialorder %v660, %v889
        %vm988 = vcmp.gt.f32.partialorder %v664, %v889
        %vm989 = vcmp.gt.f32.partialorder %v668, %v889
        %vm990 = vcmp.gt.f32.partialorder %v675, %v893
        %vm991 = vcmp.gt.f32.partialorder %v679, %v893
        %vm992 = vcmp.gt.f32.partialorder %v683, %v893
        %vm993 = vcmp.gt.f32.partialorder %v687, %v893
        %vm994 = vcmp.gt.f32.partialorder %v691, %v893
        %vm995 = vcmp.gt.f32.partialorder %v695, %v893
        %vm996 = vcmp.gt.f32.partialorder %v699, %v893
        %vm997 = vcmp.gt.f32.partialorder %v703, %v893
        %vm998 = vcmp.gt.f32.partialorder %v707, %v893
        %vm999 = vcmp.gt.f32.partialorder %v711, %v893
        %vm1000 = vcmp.gt.f32.partialorder %v715, %v893
        %vm1001 = vcmp.gt.f32.partialorder %v719, %v893
        %vm1002 = vcmp.gt.f32.partialorder %v723, %v893
        %vm1003 = vcmp.gt.f32.partialorder %v727, %v893
        %vm1004 = vcmp.gt.f32.partialorder %v731, %v893
        %vm1005 = vcmp.gt.f32.partialorder %v735, %v893
        %vm1006 = vcmp.gt.f32.partialorder %v742, %v897
        %vm1007 = vcmp.gt.f32.partialorder %v746, %v897
        %vm1008 = vcmp.gt.f32.partialorder %v750, %v897
        %vm1009 = vcmp.gt.f32.partialorder %v754, %v897
        %vm1010 = vcmp.gt.f32.partialorder %v758, %v897
        %vm1011 = vcmp.gt.f32.partialorder %v762, %v897
        %vm1012 = vcmp.gt.f32.partialorder %v766, %v897
        %vm1013 = vcmp.gt.f32.partialorder %v770, %v897
        %vm1014 = vcmp.gt.f32.partialorder %v774, %v897
        %vm1015 = vcmp.gt.f32.partialorder %v778, %v897
        %vm1016 = vcmp.gt.f32.partialorder %v782, %v897
        %vm1017 = vcmp.gt.f32.partialorder %v786, %v897
        %vm1018 = vcmp.gt.f32.partialorder %v790, %v897
        %vm1019 = vcmp.gt.f32.partialorder %v794, %v897
        %vm1020 = vcmp.gt.f32.partialorder %v798, %v897
        %vm1021 = vcmp.gt.f32.partialorder %v802, %v897
        %vm1022 = vcmp.gt.f32.partialorder %v809, %v901
        %vm1023 = vcmp.gt.f32.partialorder %v813, %v901
        %vm1024 = vcmp.gt.f32.partialorder %v817, %v901
        %vm1025 = vcmp.gt.f32.partialorder %v821, %v901
        %vm1026 = vcmp.gt.f32.partialorder %v825, %v901
        %vm1027 = vcmp.gt.f32.partialorder %v829, %v901
        %vm1028 = vcmp.gt.f32.partialorder %v833, %v901
        %vm1029 = vcmp.gt.f32.partialorder %v837, %v901
        %vm1030 = vcmp.gt.f32.partialorder %v841, %v901
        %vm1031 = vcmp.gt.f32.partialorder %v845, %v901
        %vm1032 = vcmp.gt.f32.partialorder %v849, %v901
        %vm1033 = vcmp.gt.f32.partialorder %v853, %v901
        %vm1034 = vcmp.gt.f32.partialorder %v857, %v901
        %vm1035 = vcmp.gt.f32.partialorder %v861, %v901
        %vm1036 = vcmp.gt.f32.partialorder %v865, %v901
        %vm1037 = vcmp.gt.f32.partialorder %v869, %v901
        %vm1038 = vcmp.eq.f32.partialorder %v340, %v873
        %vm1039 = vcmp.eq.f32.partialorder %v344, %v873
        %vm1040 = vcmp.eq.f32.partialorder %v348, %v873
        %vm1041 = vcmp.eq.f32.partialorder %v352, %v873
        %vm1042 = vcmp.eq.f32.partialorder %v356, %v873
        %vm1043 = vcmp.eq.f32.partialorder %v360, %v873
        %vm1044 = vcmp.eq.f32.partialorder %v364, %v873
        %vm1045 = vcmp.eq.f32.partialorder %v368, %v873
        %vm1046 = vcmp.eq.f32.partialorder %v372, %v873
        %vm1047 = vcmp.eq.f32.partialorder %v376, %v873
        %vm1048 = vcmp.eq.f32.partialorder %v380, %v873
        %vm1049 = vcmp.eq.f32.partialorder %v384, %v873
        %vm1050 = vcmp.eq.f32.partialorder %v388, %v873
        %vm1051 = vcmp.eq.f32.partialorder %v392, %v873
        %vm1052 = vcmp.eq.f32.partialorder %v396, %v873
        %vm1053 = vcmp.eq.f32.partialorder %v400, %v873
        %vm1054 = vcmp.eq.f32.partialorder %v407, %v877
        %vm1055 = vcmp.eq.f32.partialorder %v411, %v877
        %vm1056 = vcmp.eq.f32.partialorder %v415, %v877
        %vm1057 = vcmp.eq.f32.partialorder %v419, %v877
        %vm1058 = vcmp.eq.f32.partialorder %v423, %v877
        %vm1059 = vcmp.eq.f32.partialorder %v427, %v877
        %vm1060 = vcmp.eq.f32.partialorder %v431, %v877
        %vm1061 = vcmp.eq.f32.partialorder %v435, %v877
        %vm1062 = vcmp.eq.f32.partialorder %v439, %v877
        %vm1063 = vcmp.eq.f32.partialorder %v443, %v877
        %vm1064 = vcmp.eq.f32.partialorder %v447, %v877
        %vm1065 = vcmp.eq.f32.partialorder %v451, %v877
        %vm1066 = vcmp.eq.f32.partialorder %v455, %v877
        %vm1067 = vcmp.eq.f32.partialorder %v459, %v877
        %vm1068 = vcmp.eq.f32.partialorder %v463, %v877
        %vm1069 = vcmp.eq.f32.partialorder %v467, %v877
        %vm1070 = vcmp.eq.f32.partialorder %v474, %v881
        %vm1071 = vcmp.eq.f32.partialorder %v478, %v881
        %vm1072 = vcmp.eq.f32.partialorder %v482, %v881
        %vm1073 = vcmp.eq.f32.partialorder %v486, %v881
        %vm1074 = vcmp.eq.f32.partialorder %v490, %v881
        %vm1075 = vcmp.eq.f32.partialorder %v494, %v881
        %vm1076 = vcmp.eq.f32.partialorder %v498, %v881
        %vm1077 = vcmp.eq.f32.partialorder %v502, %v881
        %vm1078 = vcmp.eq.f32.partialorder %v506, %v881
        %vm1079 = vcmp.eq.f32.partialorder %v510, %v881
        %vm1080 = vcmp.eq.f32.partialorder %v514, %v881
        %vm1081 = vcmp.eq.f32.partialorder %v518, %v881
        %vm1082 = vcmp.eq.f32.partialorder %v522, %v881
        %vm1083 = vcmp.eq.f32.partialorder %v526, %v881
        %vm1084 = vcmp.eq.f32.partialorder %v530, %v881
        %vm1085 = vcmp.eq.f32.partialorder %v534, %v881
        %vm1086 = vcmp.eq.f32.partialorder %v541, %v885
        %vm1087 = vcmp.eq.f32.partialorder %v545, %v885
        %vm1088 = vcmp.eq.f32.partialorder %v549, %v885
        %vm1089 = vcmp.eq.f32.partialorder %v553, %v885
        %vm1090 = vcmp.eq.f32.partialorder %v557, %v885
        %vm1091 = vcmp.eq.f32.partialorder %v561, %v885
        %vm1092 = vcmp.eq.f32.partialorder %v565, %v885
        %vm1093 = vcmp.eq.f32.partialorder %v569, %v885
        %vm1094 = vcmp.eq.f32.partialorder %v573, %v885
        %vm1095 = vcmp.eq.f32.partialorder %v577, %v885
        %vm1096 = vcmp.eq.f32.partialorder %v581, %v885
        %vm1097 = vcmp.eq.f32.partialorder %v585, %v885
        %vm1098 = vcmp.eq.f32.partialorder %v589, %v885
        %vm1099 = vcmp.eq.f32.partialorder %v593, %v885
        %vm1100 = vcmp.eq.f32.partialorder %v597, %v885
        %vm1101 = vcmp.eq.f32.partialorder %v601, %v885
        %vm1102 = vcmp.eq.f32.partialorder %v608, %v889
        %vm1103 = vcmp.eq.f32.partialorder %v612, %v889
        %vm1104 = vcmp.eq.f32.partialorder %v616, %v889
        %vm1105 = vcmp.eq.f32.partialorder %v620, %v889
        %vm1106 = vcmp.eq.f32.partialorder %v624, %v889
        %vm1107 = vcmp.eq.f32.partialorder %v628, %v889
        %vm1108 = vcmp.eq.f32.partialorder %v632, %v889
        %vm1109 = vcmp.eq.f32.partialorder %v636, %v889
        %vm1110 = vcmp.eq.f32.partialorder %v640, %v889
        %vm1111 = vcmp.eq.f32.partialorder %v644, %v889
        %vm1112 = vcmp.eq.f32.partialorder %v648, %v889
        %vm1113 = vcmp.eq.f32.partialorder %v652, %v889
        %vm1114 = vcmp.eq.f32.partialorder %v656, %v889
        %vm1115 = vcmp.eq.f32.partialorder %v660, %v889
        %vm1116 = vcmp.eq.f32.partialorder %v664, %v889
        %vm1117 = vcmp.eq.f32.partialorder %v668, %v889
        %vm1118 = vcmp.eq.f32.partialorder %v675, %v893
        %vm1119 = vcmp.eq.f32.partialorder %v679, %v893
        %vm1120 = vcmp.eq.f32.partialorder %v683, %v893
        %vm1121 = vcmp.eq.f32.partialorder %v687, %v893
        %vm1122 = vcmp.eq.f32.partialorder %v691, %v893
        %vm1123 = vcmp.eq.f32.partialorder %v695, %v893
        %vm1124 = vcmp.eq.f32.partialorder %v699, %v893
        %vm1125 = vcmp.eq.f32.partialorder %v703, %v893
        %vm1126 = vcmp.eq.f32.partialorder %v707, %v893
        %vm1127 = vcmp.eq.f32.partialorder %v711, %v893
        %vm1128 = vcmp.eq.f32.partialorder %v715, %v893
        %vm1129 = vcmp.eq.f32.partialorder %v719, %v893
        %vm1130 = vcmp.eq.f32.partialorder %v723, %v893
        %vm1131 = vcmp.eq.f32.partialorder %v727, %v893
        %vm1132 = vcmp.eq.f32.partialorder %v731, %v893
        %vm1133 = vcmp.eq.f32.partialorder %v735, %v893
        %vm1134 = vcmp.eq.f32.partialorder %v742, %v897
        %vm1135 = vcmp.eq.f32.partialorder %v746, %v897
        %vm1136 = vcmp.eq.f32.partialorder %v750, %v897
        %vm1137 = vcmp.eq.f32.partialorder %v754, %v897
        %vm1138 = vcmp.eq.f32.partialorder %v758, %v897
        %vm1139 = vcmp.eq.f32.partialorder %v762, %v897
        %vm1140 = vcmp.eq.f32.partialorder %v766, %v897
        %vm1141 = vcmp.eq.f32.partialorder %v770, %v897
        %vm1142 = vcmp.eq.f32.partialorder %v774, %v897
        %vm1143 = vcmp.eq.f32.partialorder %v778, %v897
        %vm1144 = vcmp.eq.f32.partialorder %v782, %v897
        %vm1145 = vcmp.eq.f32.partialorder %v786, %v897
        %vm1146 = vcmp.eq.f32.partialorder %v790, %v897
        %vm1147 = vcmp.eq.f32.partialorder %v794, %v897
        %vm1148 = vcmp.eq.f32.partialorder %v798, %v897
        %vm1149 = vcmp.eq.f32.partialorder %v802, %v897
        %vm1150 = vcmp.eq.f32.partialorder %v809, %v901
        %vm1151 = vcmp.eq.f32.partialorder %v813, %v901
        %vm1152 = vcmp.eq.f32.partialorder %v817, %v901
        %vm1153 = vcmp.eq.f32.partialorder %v821, %v901
        %vm1154 = vcmp.eq.f32.partialorder %v825, %v901
        %vm1155 = vcmp.eq.f32.partialorder %v829, %v901
        %vm1156 = vcmp.eq.f32.partialorder %v833, %v901
        %vm1157 = vcmp.eq.f32.partialorder %v837, %v901
        %vm1158 = vcmp.eq.f32.partialorder %v841, %v901
        %vm1159 = vcmp.eq.f32.partialorder %v845, %v901
        %vm1160 = vcmp.eq.f32.partialorder %v849, %v901
        %vm1161 = vcmp.eq.f32.partialorder %v853, %v901
        %vm1162 = vcmp.eq.f32.partialorder %v857, %v901
        %vm1163 = vcmp.eq.f32.partialorder %v861, %v901
        %vm1164 = vcmp.eq.f32.partialorder %v865, %v901
        %vm1165 = vcmp.eq.f32.partialorder %v869, %v901
        %v1166 = vstv %s242
        %vm1167 = vcmp.lt.s32.totalorder %v317, %v1166
        %vm1168 = vcmp.lt.s32.totalorder %v318, %v1166
        %vm1169 = vcmp.lt.s32.totalorder %v319, %v1166
        %vm1170 = vcmp.lt.s32.totalorder %v320, %v1166
        %vm1171 = vcmp.lt.s32.totalorder %v321, %v1166
        %vm1172 = vcmp.lt.s32.totalorder %v322, %v1166
        %vm1173 = vcmp.lt.s32.totalorder %v323, %v1166
        %vm1174 = vcmp.lt.s32.totalorder %v324, %v1166
        %vm1175 = vcmp.lt.s32.totalorder %v325, %v1166
        %vm1176 = vcmp.lt.s32.totalorder %v326, %v1166
        %vm1177 = vcmp.lt.s32.totalorder %v327, %v1166
        %vm1178 = vcmp.lt.s32.totalorder %v328, %v1166
        %vm1179 = vcmp.lt.s32.totalorder %v329, %v1166
        %vm1180 = vcmp.lt.s32.totalorder %v330, %v1166
        %vm1181 = vcmp.lt.s32.totalorder %v331, %v1166
        %vm1182 = vcmp.lt.s32.totalorder %v332, %v1166
        %v1183 = vsel %vm1167, 1, 0
        %v1184 = vsel %vm1168, 1, 0
        %v1185 = vsel %vm1169, 1, 0
        %v1186 = vsel %vm1170, 1, 0
        %v1187 = vsel %vm1171, 1, 0
        %v1188 = vsel %vm1172, 1, 0
        %v1189 = vsel %vm1173, 1, 0
        %v1190 = vsel %vm1174, 1, 0
        %v1191 = vsel %vm1175, 1, 0
        %v1192 = vsel %vm1176, 1, 0
        %v1193 = vsel %vm1177, 1, 0
        %v1194 = vsel %vm1178, 1, 0
        %v1195 = vsel %vm1179, 1, 0
        %v1196 = vsel %vm1180, 1, 0
        %v1197 = vsel %vm1181, 1, 0
        %v1198 = vsel %vm1182, 1, 0
        %vm1199 = vcmp.eq.s32.totalorder %v1183, 1
        %vm1200 = vcmp.eq.s32.totalorder %v1184, 1
        %vm1201 = vcmp.eq.s32.totalorder %v1185, 1
        %vm1202 = vcmp.eq.s32.totalorder %v1186, 1
        %vm1203 = vcmp.eq.s32.totalorder %v1187, 1
        %vm1204 = vcmp.eq.s32.totalorder %v1188, 1
        %vm1205 = vcmp.eq.s32.totalorder %v1189, 1
        %vm1206 = vcmp.eq.s32.totalorder %v1190, 1
        %vm1207 = vcmp.eq.s32.totalorder %v1191, 1
        %vm1208 = vcmp.eq.s32.totalorder %v1192, 1
        %vm1209 = vcmp.eq.s32.totalorder %v1193, 1
        %vm1210 = vcmp.eq.s32.totalorder %v1194, 1
        %vm1211 = vcmp.eq.s32.totalorder %v1195, 1
        %vm1212 = vcmp.eq.s32.totalorder %v1196, 1
        %vm1213 = vcmp.eq.s32.totalorder %v1197, 1
        %vm1214 = vcmp.eq.s32.totalorder %v1198, 1
        %vm1215 = vmand %vm1038, %vm1199
        %vm1216 = vmand %vm1039, %vm1200
        %vm1217 = vmand %vm1040, %vm1201
        %vm1218 = vmand %vm1041, %vm1202
        %vm1219 = vmand %vm1042, %vm1203
        %vm1220 = vmand %vm1043, %vm1204
        %vm1221 = vmand %vm1044, %vm1205
        %vm1222 = vmand %vm1045, %vm1206
        %vm1223 = vmand %vm1046, %vm1207
        %vm1224 = vmand %vm1047, %vm1208
        %vm1225 = vmand %vm1048, %vm1209
        %vm1226 = vmand %vm1049, %vm1210
        %vm1227 = vmand %vm1050, %vm1211
        %vm1228 = vmand %vm1051, %vm1212
        %vm1229 = vmand %vm1052, %vm1213
        %vm1230 = vmand %vm1053, %vm1214
        %vm1231 = vmand %vm1054, %vm1199
        %vm1232 = vmand %vm1055, %vm1200
        %vm1233 = vmand %vm1056, %vm1201
        %vm1234 = vmand %vm1057, %vm1202
        %vm1235 = vmand %vm1058, %vm1203
        %vm1236 = vmand %vm1059, %vm1204
        %vm1237 = vmand %vm1060, %vm1205
        %vm1238 = vmand %vm1061, %vm1206
        %vm1239 = vmand %vm1062, %vm1207
        %vm1240 = vmand %vm1063, %vm1208
        %vm1241 = vmand %vm1064, %vm1209
        %vm1242 = vmand %vm1065, %vm1210
        %vm1243 = vmand %vm1066, %vm1211
        %vm1244 = vmand %vm1067, %vm1212
        %vm1245 = vmand %vm1068, %vm1213
        %vm1246 = vmand %vm1069, %vm1214
        %vm1247 = vmand %vm1070, %vm1199
        %vm1248 = vmand %vm1071, %vm1200
        %vm1249 = vmand %vm1072, %vm1201
        %vm1250 = vmand %vm1073, %vm1202
        %vm1251 = vmand %vm1074, %vm1203
        %vm1252 = vmand %vm1075, %vm1204
        %vm1253 = vmand %vm1076, %vm1205
        %vm1254 = vmand %vm1077, %vm1206
        %vm1255 = vmand %vm1078, %vm1207
        %vm1256 = vmand %vm1079, %vm1208
        %vm1257 = vmand %vm1080, %vm1209
        %vm1258 = vmand %vm1081, %vm1210
        %vm1259 = vmand %vm1082, %vm1211
        %vm1260 = vmand %vm1083, %vm1212
        %vm1261 = vmand %vm1084, %vm1213
        %vm1262 = vmand %vm1085, %vm1214
        %vm1263 = vmand %vm1086, %vm1199
        %vm1264 = vmand %vm1087, %vm1200
        %vm1265 = vmand %vm1088, %vm1201
        %vm1266 = vmand %vm1089, %vm1202
        %vm1267 = vmand %vm1090, %vm1203
        %vm1268 = vmand %vm1091, %vm1204
        %vm1269 = vmand %vm1092, %vm1205
        %vm1270 = vmand %vm1093, %vm1206
        %vm1271 = vmand %vm1094, %vm1207
        %vm1272 = vmand %vm1095, %vm1208
        %vm1273 = vmand %vm1096, %vm1209
        %vm1274 = vmand %vm1097, %vm1210
        %vm1275 = vmand %vm1098, %vm1211
        %vm1276 = vmand %vm1099, %vm1212
        %vm1277 = vmand %vm1100, %vm1213
        %vm1278 = vmand %vm1101, %vm1214
        %vm1279 = vmand %vm1102, %vm1199
        %vm1280 = vmand %vm1103, %vm1200
        %vm1281 = vmand %vm1104, %vm1201
        %vm1282 = vmand %vm1105, %vm1202
        %vm1283 = vmand %vm1106, %vm1203
        %vm1284 = vmand %vm1107, %vm1204
        %vm1285 = vmand %vm1108, %vm1205
        %vm1286 = vmand %vm1109, %vm1206
        %vm1287 = vmand %vm1110, %vm1207
        %vm1288 = vmand %vm1111, %vm1208
        %vm1289 = vmand %vm1112, %vm1209
        %vm1290 = vmand %vm1113, %vm1210
        %vm1291 = vmand %vm1114, %vm1211
        %vm1292 = vmand %vm1115, %vm1212
        %vm1293 = vmand %vm1116, %vm1213
        %vm1294 = vmand %vm1117, %vm1214
        %vm1295 = vmand %vm1118, %vm1199
        %vm1296 = vmand %vm1119, %vm1200
        %vm1297 = vmand %vm1120, %vm1201
        %vm1298 = vmand %vm1121, %vm1202
        %vm1299 = vmand %vm1122, %vm1203
        %vm1300 = vmand %vm1123, %vm1204
        %vm1301 = vmand %vm1124, %vm1205
        %vm1302 = vmand %vm1125, %vm1206
        %vm1303 = vmand %vm1126, %vm1207
        %vm1304 = vmand %vm1127, %vm1208
        %vm1305 = vmand %vm1128, %vm1209
        %vm1306 = vmand %vm1129, %vm1210
        %vm1307 = vmand %vm1130, %vm1211
        %vm1308 = vmand %vm1131, %vm1212
        %vm1309 = vmand %vm1132, %vm1213
        %vm1310 = vmand %vm1133, %vm1214
        %vm1311 = vmand %vm1134, %vm1199
        %vm1312 = vmand %vm1135, %vm1200
        %vm1313 = vmand %vm1136, %vm1201
        %vm1314 = vmand %vm1137, %vm1202
        %vm1315 = vmand %vm1138, %vm1203
        %vm1316 = vmand %vm1139, %vm1204
        %vm1317 = vmand %vm1140, %vm1205
        %vm1318 = vmand %vm1141, %vm1206
        %vm1319 = vmand %vm1142, %vm1207
        %vm1320 = vmand %vm1143, %vm1208
        %vm1321 = vmand %vm1144, %vm1209
        %vm1322 = vmand %vm1145, %vm1210
        %vm1323 = vmand %vm1146, %vm1211
        %vm1324 = vmand %vm1147, %vm1212
        %vm1325 = vmand %vm1148, %vm1213
        %vm1326 = vmand %vm1149, %vm1214
        %vm1327 = vmand %vm1150, %vm1199
        %vm1328 = vmand %vm1151, %vm1200
        %vm1329 = vmand %vm1152, %vm1201
        %vm1330 = vmand %vm1153, %vm1202
        %vm1331 = vmand %vm1154, %vm1203
        %vm1332 = vmand %vm1155, %vm1204
        %vm1333 = vmand %vm1156, %vm1205
        %vm1334 = vmand %vm1157, %vm1206
        %vm1335 = vmand %vm1158, %vm1207
        %vm1336 = vmand %vm1159, %vm1208
        %vm1337 = vmand %vm1160, %vm1209
        %vm1338 = vmand %vm1161, %vm1210
        %vm1339 = vmand %vm1162, %vm1211
        %vm1340 = vmand %vm1163, %vm1212
        %vm1341 = vmand %vm1164, %vm1213
        %vm1342 = vmand %vm1165, %vm1214
        %vm1343 = vmor %vm910, %vm1215
        %vm1344 = vmor %vm911, %vm1216
        %vm1345 = vmor %vm912, %vm1217
        %vm1346 = vmor %vm913, %vm1218
        %vm1347 = vmor %vm914, %vm1219
        %vm1348 = vmor %vm915, %vm1220
        %vm1349 = vmor %vm916, %vm1221
        %vm1350 = vmor %vm917, %vm1222
        %vm1351 = vmor %vm918, %vm1223
        %vm1352 = vmor %vm919, %vm1224
        %vm1353 = vmor %vm920, %vm1225
        %vm1354 = vmor %vm921, %vm1226
        %vm1355 = vmor %vm922, %vm1227
        %vm1356 = vmor %vm923, %vm1228
        %vm1357 = vmor %vm924, %vm1229
        %vm1358 = vmor %vm925, %vm1230
        %vm1359 = vmor %vm926, %vm1231
        %vm1360 = vmor %vm927, %vm1232
        %vm1361 = vmor %vm928, %vm1233
        %vm1362 = vmor %vm929, %vm1234
        %vm1363 = vmor %vm930, %vm1235
        %vm1364 = vmor %vm931, %vm1236
        %vm1365 = vmor %vm932, %vm1237
        %vm1366 = vmor %vm933, %vm1238
        %vm1367 = vmor %vm934, %vm1239
        %vm1368 = vmor %vm935, %vm1240
        %vm1369 = vmor %vm936, %vm1241
        %vm1370 = vmor %vm937, %vm1242
        %vm1371 = vmor %vm938, %vm1243
        %vm1372 = vmor %vm939, %vm1244
        %vm1373 = vmor %vm940, %vm1245
        %vm1374 = vmor %vm941, %vm1246
        %vm1375 = vmor %vm942, %vm1247
        %vm1376 = vmor %vm943, %vm1248
        %vm1377 = vmor %vm944, %vm1249
        %vm1378 = vmor %vm945, %vm1250
        %vm1379 = vmor %vm946, %vm1251
        %vm1380 = vmor %vm947, %vm1252
        %vm1381 = vmor %vm948, %vm1253
        %vm1382 = vmor %vm949, %vm1254
        %vm1383 = vmor %vm950, %vm1255
        %vm1384 = vmor %vm951, %vm1256
        %vm1385 = vmor %vm952, %vm1257
        %vm1386 = vmor %vm953, %vm1258
        %vm1387 = vmor %vm954, %vm1259
        %vm1388 = vmor %vm955, %vm1260
        %vm1389 = vmor %vm956, %vm1261
        %vm1390 = vmor %vm957, %vm1262
        %vm1391 = vmor %vm958, %vm1263
        %vm1392 = vmor %vm959, %vm1264
        %vm1393 = vmor %vm960, %vm1265
        %vm1394 = vmor %vm961, %vm1266
        %vm1395 = vmor %vm962, %vm1267
        %vm1396 = vmor %vm963, %vm1268
        %vm1397 = vmor %vm964, %vm1269
        %vm1398 = vmor %vm965, %vm1270
        %vm1399 = vmor %vm966, %vm1271
        %vm1400 = vmor %vm967, %vm1272
        %vm1401 = vmor %vm968, %vm1273
        %vm1402 = vmor %vm969, %vm1274
        %vm1403 = vmor %vm970, %vm1275
        %vm1404 = vmor %vm971, %vm1276
        %vm1405 = vmor %vm972, %vm1277
        %vm1406 = vmor %vm973, %vm1278
        %vm1407 = vmor %vm974, %vm1279
        %vm1408 = vmor %vm975, %vm1280
        %vm1409 = vmor %vm976, %vm1281
        %vm1410 = vmor %vm977, %vm1282
        %vm1411 = vmor %vm978, %vm1283
        %vm1412 = vmor %vm979, %vm1284
        %vm1413 = vmor %vm980, %vm1285
        %vm1414 = vmor %vm981, %vm1286
        %vm1415 = vmor %vm982, %vm1287
        %vm1416 = vmor %vm983, %vm1288
        %vm1417 = vmor %vm984, %vm1289
        %vm1418 = vmor %vm985, %vm1290
        %vm1419 = vmor %vm986, %vm1291
        %vm1420 = vmor %vm987, %vm1292
        %vm1421 = vmor %vm988, %vm1293
        %vm1422 = vmor %vm989, %vm1294
        %vm1423 = vmor %vm990, %vm1295
        %vm1424 = vmor %vm991, %vm1296
        %vm1425 = vmor %vm992, %vm1297
        %vm1426 = vmor %vm993, %vm1298
        %vm1427 = vmor %vm994, %vm1299
        %vm1428 = vmor %vm995, %vm1300
        %vm1429 = vmor %vm996, %vm1301
        %vm1430 = vmor %vm997, %vm1302
        %vm1431 = vmor %vm998, %vm1303
        %vm1432 = vmor %vm999, %vm1304
        %vm1433 = vmor %vm1000, %vm1305
        %vm1434 = vmor %vm1001, %vm1306
        %vm1435 = vmor %vm1002, %vm1307
        %vm1436 = vmor %vm1003, %vm1308
        %vm1437 = vmor %vm1004, %vm1309
        %vm1438 = vmor %vm1005, %vm1310
        %vm1439 = vmor %vm1006, %vm1311
        %vm1440 = vmor %vm1007, %vm1312
        %vm1441 = vmor %vm1008, %vm1313
        %vm1442 = vmor %vm1009, %vm1314
        %vm1443 = vmor %vm1010, %vm1315
        %vm1444 = vmor %vm1011, %vm1316
        %vm1445 = vmor %vm1012, %vm1317
        %vm1446 = vmor %vm1013, %vm1318
        %vm1447 = vmor %vm1014, %vm1319
        %vm1448 = vmor %vm1015, %vm1320
        %vm1449 = vmor %vm1016, %vm1321
        %vm1450 = vmor %vm1017, %vm1322
        %vm1451 = vmor %vm1018, %vm1323
        %vm1452 = vmor %vm1019, %vm1324
        %vm1453 = vmor %vm1020, %vm1325
        %vm1454 = vmor %vm1021, %vm1326
        %vm1455 = vmor %vm1022, %vm1327
        %vm1456 = vmor %vm1023, %vm1328
        %vm1457 = vmor %vm1024, %vm1329
        %vm1458 = vmor %vm1025, %vm1330
        %vm1459 = vmor %vm1026, %vm1331
        %vm1460 = vmor %vm1027, %vm1332
        %vm1461 = vmor %vm1028, %vm1333
        %vm1462 = vmor %vm1029, %vm1334
        %vm1463 = vmor %vm1030, %vm1335
        %vm1464 = vmor %vm1031, %vm1336
        %vm1465 = vmor %vm1032, %vm1337
        %vm1466 = vmor %vm1033, %vm1338
        %vm1467 = vmor %vm1034, %vm1339
        %vm1468 = vmor %vm1035, %vm1340
        %vm1469 = vmor %vm1036, %vm1341
        %vm1470 = vmor %vm1037, %vm1342
        %v1471 = vsel %vm1343, 1, 0
        %v1472 = vsel %vm1344, 1, 0
        %v1473 = vsel %vm1345, 1, 0
        %v1474 = vsel %vm1346, 1, 0
        %v1475 = vsel %vm1347, 1, 0
        %v1476 = vsel %vm1348, 1, 0
        %v1477 = vsel %vm1349, 1, 0
        %v1478 = vsel %vm1350, 1, 0
        %v1479 = vsel %vm1351, 1, 0
        %v1480 = vsel %vm1352, 1, 0
        %v1481 = vsel %vm1353, 1, 0
        %v1482 = vsel %vm1354, 1, 0
        %v1483 = vsel %vm1355, 1, 0
        %v1484 = vsel %vm1356, 1, 0
        %v1485 = vsel %vm1357, 1, 0
        %v1486 = vsel %vm1358, 1, 0
        %v1487 = vsel %vm1359, 1, 0
        %v1488 = vsel %vm1360, 1, 0
        %v1489 = vsel %vm1361, 1, 0
        %v1490 = vsel %vm1362, 1, 0
        %v1491 = vsel %vm1363, 1, 0
        %v1492 = vsel %vm1364, 1, 0
        %v1493 = vsel %vm1365, 1, 0
        %v1494 = vsel %vm1366, 1, 0
        %v1495 = vsel %vm1367, 1, 0
        %v1496 = vsel %vm1368, 1, 0
        %v1497 = vsel %vm1369, 1, 0
        %v1498 = vsel %vm1370, 1, 0
        %v1499 = vsel %vm1371, 1, 0
        %v1500 = vsel %vm1372, 1, 0
        %v1501 = vsel %vm1373, 1, 0
        %v1502 = vsel %vm1374, 1, 0
        %v1503 = vsel %vm1375, 1, 0
        %v1504 = vsel %vm1376, 1, 0
        %v1505 = vsel %vm1377, 1, 0
        %v1506 = vsel %vm1378, 1, 0
        %v1507 = vsel %vm1379, 1, 0
        %v1508 = vsel %vm1380, 1, 0
        %v1509 = vsel %vm1381, 1, 0
        %v1510 = vsel %vm1382, 1, 0
        %v1511 = vsel %vm1383, 1, 0
        %v1512 = vsel %vm1384, 1, 0
        %v1513 = vsel %vm1385, 1, 0
        %v1514 = vsel %vm1386, 1, 0
        %v1515 = vsel %vm1387, 1, 0
        %v1516 = vsel %vm1388, 1, 0
        %v1517 = vsel %vm1389, 1, 0
        %v1518 = vsel %vm1390, 1, 0
        %v1519 = vsel %vm1391, 1, 0
        %v1520 = vsel %vm1392, 1, 0
        %v1521 = vsel %vm1393, 1, 0
        %v1522 = vsel %vm1394, 1, 0
        %v1523 = vsel %vm1395, 1, 0
        %v1524 = vsel %vm1396, 1, 0
        %v1525 = vsel %vm1397, 1, 0
        %v1526 = vsel %vm1398, 1, 0
        %v1527 = vsel %vm1399, 1, 0
        %v1528 = vsel %vm1400, 1, 0
        %v1529 = vsel %vm1401, 1, 0
        %v1530 = vsel %vm1402, 1, 0
        %v1531 = vsel %vm1403, 1, 0
        %v1532 = vsel %vm1404, 1, 0
        %v1533 = vsel %vm1405, 1, 0
        %v1534 = vsel %vm1406, 1, 0
        %v1535 = vsel %vm1407, 1, 0
        %v1536 = vsel %vm1408, 1, 0
        %v1537 = vsel %vm1409, 1, 0
        %v1538 = vsel %vm1410, 1, 0
        %v1539 = vsel %vm1411, 1, 0
        %v1540 = vsel %vm1412, 1, 0
        %v1541 = vsel %vm1413, 1, 0
        %v1542 = vsel %vm1414, 1, 0
        %v1543 = vsel %vm1415, 1, 0
        %v1544 = vsel %vm1416, 1, 0
        %v1545 = vsel %vm1417, 1, 0
        %v1546 = vsel %vm1418, 1, 0
        %v1547 = vsel %vm1419, 1, 0
        %v1548 = vsel %vm1420, 1, 0
        %v1549 = vsel %vm1421, 1, 0
        %v1550 = vsel %vm1422, 1, 0
        %v1551 = vsel %vm1423, 1, 0
        %v1552 = vsel %vm1424, 1, 0
        %v1553 = vsel %vm1425, 1, 0
        %v1554 = vsel %vm1426, 1, 0
        %v1555 = vsel %vm1427, 1, 0
        %v1556 = vsel %vm1428, 1, 0
        %v1557 = vsel %vm1429, 1, 0
        %v1558 = vsel %vm1430, 1, 0
        %v1559 = vsel %vm1431, 1, 0
        %v1560 = vsel %vm1432, 1, 0
        %v1561 = vsel %vm1433, 1, 0
        %v1562 = vsel %vm1434, 1, 0
        %v1563 = vsel %vm1435, 1, 0
        %v1564 = vsel %vm1436, 1, 0
        %v1565 = vsel %vm1437, 1, 0
        %v1566 = vsel %vm1438, 1, 0
        %v1567 = vsel %vm1439, 1, 0
        %v1568 = vsel %vm1440, 1, 0
        %v1569 = vsel %vm1441, 1, 0
        %v1570 = vsel %vm1442, 1, 0
        %v1571 = vsel %vm1443, 1, 0
        %v1572 = vsel %vm1444, 1, 0
        %v1573 = vsel %vm1445, 1, 0
        %v1574 = vsel %vm1446, 1, 0
        %v1575 = vsel %vm1447, 1, 0
        %v1576 = vsel %vm1448, 1, 0
        %v1577 = vsel %vm1449, 1, 0
        %v1578 = vsel %vm1450, 1, 0
        %v1579 = vsel %vm1451, 1, 0
        %v1580 = vsel %vm1452, 1, 0
        %v1581 = vsel %vm1453, 1, 0
        %v1582 = vsel %vm1454, 1, 0
        %v1583 = vsel %vm1455, 1, 0
        %v1584 = vsel %vm1456, 1, 0
        %v1585 = vsel %vm1457, 1, 0
        %v1586 = vsel %vm1458, 1, 0
        %v1587 = vsel %vm1459, 1, 0
        %v1588 = vsel %vm1460, 1, 0
        %v1589 = vsel %vm1461, 1, 0
        %v1590 = vsel %vm1462, 1, 0
        %v1591 = vsel %vm1463, 1, 0
        %v1592 = vsel %vm1464, 1, 0
        %v1593 = vsel %vm1465, 1, 0
        %v1594 = vsel %vm1466, 1, 0
        %v1595 = vsel %vm1467, 1, 0
        %v1596 = vsel %vm1468, 1, 0
        %v1597 = vsel %vm1469, 1, 0
        %v1598 = vsel %vm1470, 1, 0
        %v1599 = vcvt.s32.f32 %v1471
        %v1600 = vcvt.s32.f32 %v1472
        %v1601 = vcvt.s32.f32 %v1473
        %v1602 = vcvt.s32.f32 %v1474
        %v1603 = vcvt.s32.f32 %v1475
        %v1604 = vcvt.s32.f32 %v1476
        %v1605 = vcvt.s32.f32 %v1477
        %v1606 = vcvt.s32.f32 %v1478
        %v1607 = vcvt.s32.f32 %v1479
        %v1608 = vcvt.s32.f32 %v1480
        %v1609 = vcvt.s32.f32 %v1481
        %v1610 = vcvt.s32.f32 %v1482
        %v1611 = vcvt.s32.f32 %v1483
        %v1612 = vcvt.s32.f32 %v1484
        %v1613 = vcvt.s32.f32 %v1485
        %v1614 = vcvt.s32.f32 %v1486
        %v1615 = vcvt.s32.f32 %v1487
        %v1616 = vcvt.s32.f32 %v1488
        %v1617 = vcvt.s32.f32 %v1489
        %v1618 = vcvt.s32.f32 %v1490
        %v1619 = vcvt.s32.f32 %v1491
        %v1620 = vcvt.s32.f32 %v1492
        %v1621 = vcvt.s32.f32 %v1493
        %v1622 = vcvt.s32.f32 %v1494
        %v1623 = vcvt.s32.f32 %v1495
        %v1624 = vcvt.s32.f32 %v1496
        %v1625 = vcvt.s32.f32 %v1497
        %v1626 = vcvt.s32.f32 %v1498
        %v1627 = vcvt.s32.f32 %v1499
        %v1628 = vcvt.s32.f32 %v1500
        %v1629 = vcvt.s32.f32 %v1501
        %v1630 = vcvt.s32.f32 %v1502
        %v1631 = vcvt.s32.f32 %v1503
        %v1632 = vcvt.s32.f32 %v1504
        %v1633 = vcvt.s32.f32 %v1505
        %v1634 = vcvt.s32.f32 %v1506
        %v1635 = vcvt.s32.f32 %v1507
        %v1636 = vcvt.s32.f32 %v1508
        %v1637 = vcvt.s32.f32 %v1509
        %v1638 = vcvt.s32.f32 %v1510
        %v1639 = vcvt.s32.f32 %v1511
        %v1640 = vcvt.s32.f32 %v1512
        %v1641 = vcvt.s32.f32 %v1513
        %v1642 = vcvt.s32.f32 %v1514
        %v1643 = vcvt.s32.f32 %v1515
        %v1644 = vcvt.s32.f32 %v1516
        %v1645 = vcvt.s32.f32 %v1517
        %v1646 = vcvt.s32.f32 %v1518
        %v1647 = vcvt.s32.f32 %v1519
        %v1648 = vcvt.s32.f32 %v1520
        %v1649 = vcvt.s32.f32 %v1521
        %v1650 = vcvt.s32.f32 %v1522
        %v1651 = vcvt.s32.f32 %v1523
        %v1652 = vcvt.s32.f32 %v1524
        %v1653 = vcvt.s32.f32 %v1525
        %v1654 = vcvt.s32.f32 %v1526
        %v1655 = vcvt.s32.f32 %v1527
        %v1656 = vcvt.s32.f32 %v1528
        %v1657 = vcvt.s32.f32 %v1529
        %v1658 = vcvt.s32.f32 %v1530
        %v1659 = vcvt.s32.f32 %v1531
        %v1660 = vcvt.s32.f32 %v1532
        %v1661 = vcvt.s32.f32 %v1533
        %v1662 = vcvt.s32.f32 %v1534
        %v1663 = vcvt.s32.f32 %v1535
        %v1664 = vcvt.s32.f32 %v1536
        %v1665 = vcvt.s32.f32 %v1537
        %v1666 = vcvt.s32.f32 %v1538
        %v1667 = vcvt.s32.f32 %v1539
        %v1668 = vcvt.s32.f32 %v1540
        %v1669 = vcvt.s32.f32 %v1541
        %v1670 = vcvt.s32.f32 %v1542
        %v1671 = vcvt.s32.f32 %v1543
        %v1672 = vcvt.s32.f32 %v1544
        %v1673 = vcvt.s32.f32 %v1545
        %v1674 = vcvt.s32.f32 %v1546
        %v1675 = vcvt.s32.f32 %v1547
        %v1676 = vcvt.s32.f32 %v1548
        %v1677 = vcvt.s32.f32 %v1549
        %v1678 = vcvt.s32.f32 %v1550
        %v1679 = vcvt.s32.f32 %v1551
        %v1680 = vcvt.s32.f32 %v1552
        %v1681 = vcvt.s32.f32 %v1553
        %v1682 = vcvt.s32.f32 %v1554
        %v1683 = vcvt.s32.f32 %v1555
        %v1684 = vcvt.s32.f32 %v1556
        %v1685 = vcvt.s32.f32 %v1557
        %v1686 = vcvt.s32.f32 %v1558
        %v1687 = vcvt.s32.f32 %v1559
        %v1688 = vcvt.s32.f32 %v1560
        %v1689 = vcvt.s32.f32 %v1561
        %v1690 = vcvt.s32.f32 %v1562
        %v1691 = vcvt.s32.f32 %v1563
        %v1692 = vcvt.s32.f32 %v1564
        %v1693 = vcvt.s32.f32 %v1565
        %v1694 = vcvt.s32.f32 %v1566
        %v1695 = vcvt.s32.f32 %v1567
        %v1696 = vcvt.s32.f32 %v1568
        %v1697 = vcvt.s32.f32 %v1569
        %v1698 = vcvt.s32.f32 %v1570
        %v1699 = vcvt.s32.f32 %v1571
        %v1700 = vcvt.s32.f32 %v1572
        %v1701 = vcvt.s32.f32 %v1573
        %v1702 = vcvt.s32.f32 %v1574
        %v1703 = vcvt.s32.f32 %v1575
        %v1704 = vcvt.s32.f32 %v1576
        %v1705 = vcvt.s32.f32 %v1577
        %v1706 = vcvt.s32.f32 %v1578
        %v1707 = vcvt.s32.f32 %v1579
        %v1708 = vcvt.s32.f32 %v1580
        %v1709 = vcvt.s32.f32 %v1581
        %v1710 = vcvt.s32.f32 %v1582
        %v1711 = vcvt.s32.f32 %v1583
        %v1712 = vcvt.s32.f32 %v1584
        %v1713 = vcvt.s32.f32 %v1585
        %v1714 = vcvt.s32.f32 %v1586
        %v1715 = vcvt.s32.f32 %v1587
        %v1716 = vcvt.s32.f32 %v1588
        %v1717 = vcvt.s32.f32 %v1589
        %v1718 = vcvt.s32.f32 %v1590
        %v1719 = vcvt.s32.f32 %v1591
        %v1720 = vcvt.s32.f32 %v1592
        %v1721 = vcvt.s32.f32 %v1593
        %v1722 = vcvt.s32.f32 %v1594
        %v1723 = vcvt.s32.f32 %v1595
        %v1724 = vcvt.s32.f32 %v1596
        %v1725 = vcvt.s32.f32 %v1597
        %v1726 = vcvt.s32.f32 %v1598
        %v1727 = vadd.f32 %v1599, %v1600
        %v1728 = vadd.f32 %v1727, %v1601
        %v1729 = vadd.f32 %v1728, %v1602
        %v1730 = vadd.f32 %v1729, %v1603
        %v1731 = vadd.f32 %v1730, %v1604
        %v1732 = vadd.f32 %v1731, %v1605
        %v1733 = vadd.f32 %v1732, %v1606
        %v1734 = vadd.f32 %v1733, %v1607
        %v1735 = vadd.f32 %v1734, %v1608
        %v1736 = vadd.f32 %v1735, %v1609
        %v1737 = vadd.f32 %v1736, %v1610
        %v1738 = vadd.f32 %v1737, %v1611
        %v1739 = vadd.f32 %v1738, %v1612
        %v1740 = vadd.f32 %v1739, %v1613
        %v1741 = vadd.f32 %v1740, %v1614
        %v1742 = vrot.slane %v1741, 4
        %v1743 = vadd.f32 %v1741, %v1742
        %v1744 = vrot.slane %v1743, 2
        %v1745 = vadd.f32 %v1743, %v1744
        %v1746 = vrot.slane %v1745, 1
        %v1747 = vadd.f32 %v1745, %v1746
        %v1748 = vadd.f32 %v1615, %v1616
        %v1749 = vadd.f32 %v1748, %v1617
        %v1750 = vadd.f32 %v1749, %v1618
        %v1751 = vadd.f32 %v1750, %v1619
        %v1752 = vadd.f32 %v1751, %v1620
        %v1753 = vadd.f32 %v1752, %v1621
        %v1754 = vadd.f32 %v1753, %v1622
        %v1755 = vadd.f32 %v1754, %v1623
        %v1756 = vadd.f32 %v1755, %v1624
        %v1757 = vadd.f32 %v1756, %v1625
        %v1758 = vadd.f32 %v1757, %v1626
        %v1759 = vadd.f32 %v1758, %v1627
        %v1760 = vadd.f32 %v1759, %v1628
        %v1761 = vadd.f32 %v1760, %v1629
        %v1762 = vadd.f32 %v1761, %v1630
        %v1763 = vrot.slane %v1762, 4
        %v1764 = vadd.f32 %v1762, %v1763
        %v1765 = vrot.slane %v1764, 2
        %v1766 = vadd.f32 %v1764, %v1765
        %v1767 = vrot.slane %v1766, 1
        %v1768 = vadd.f32 %v1766, %v1767
        %v1769 = vadd.f32 %v1631, %v1632
        %v1770 = vadd.f32 %v1769, %v1633
        %v1771 = vadd.f32 %v1770, %v1634
        %v1772 = vadd.f32 %v1771, %v1635
        %v1773 = vadd.f32 %v1772, %v1636
        %v1774 = vadd.f32 %v1773, %v1637
        %v1775 = vadd.f32 %v1774, %v1638
        %v1776 = vadd.f32 %v1775, %v1639
        %v1777 = vadd.f32 %v1776, %v1640
        %v1778 = vadd.f32 %v1777, %v1641
        %v1779 = vadd.f32 %v1778, %v1642
        %v1780 = vadd.f32 %v1779, %v1643
        %v1781 = vadd.f32 %v1780, %v1644
        %v1782 = vadd.f32 %v1781, %v1645
        %v1783 = vadd.f32 %v1782, %v1646
        %v1784 = vrot.slane %v1783, 4
        %v1785 = vadd.f32 %v1783, %v1784
        %v1786 = vrot.slane %v1785, 2
        %v1787 = vadd.f32 %v1785, %v1786
        %v1788 = vrot.slane %v1787, 1
        %v1789 = vadd.f32 %v1787, %v1788
        %v1790 = vadd.f32 %v1647, %v1648
        %v1791 = vadd.f32 %v1790, %v1649
        %v1792 = vadd.f32 %v1791, %v1650
        %v1793 = vadd.f32 %v1792, %v1651
        %v1794 = vadd.f32 %v1793, %v1652
        %v1795 = vadd.f32 %v1794, %v1653
        %v1796 = vadd.f32 %v1795, %v1654
        %v1797 = vadd.f32 %v1796, %v1655
        %v1798 = vadd.f32 %v1797, %v1656
        %v1799 = vadd.f32 %v1798, %v1657
        %v1800 = vadd.f32 %v1799, %v1658
        %v1801 = vadd.f32 %v1800, %v1659
        %v1802 = vadd.f32 %v1801, %v1660
        %v1803 = vadd.f32 %v1802, %v1661
        %v1804 = vadd.f32 %v1803, %v1662
        %v1805 = vrot.slane %v1804, 4
        %v1806 = vadd.f32 %v1804, %v1805
        %v1807 = vrot.slane %v1806, 2
        %v1808 = vadd.f32 %v1806, %v1807
        %v1809 = vrot.slane %v1808, 1
        %v1810 = vadd.f32 %v1808, %v1809
        %v1811 = vadd.f32 %v1663, %v1664
        %v1812 = vadd.f32 %v1811, %v1665
        %v1813 = vadd.f32 %v1812, %v1666
        %v1814 = vadd.f32 %v1813, %v1667
        %v1815 = vadd.f32 %v1814, %v1668
        %v1816 = vadd.f32 %v1815, %v1669
        %v1817 = vadd.f32 %v1816, %v1670
        %v1818 = vadd.f32 %v1817, %v1671
        %v1819 = vadd.f32 %v1818, %v1672
        %v1820 = vadd.f32 %v1819, %v1673
        %v1821 = vadd.f32 %v1820, %v1674
        %v1822 = vadd.f32 %v1821, %v1675
        %v1823 = vadd.f32 %v1822, %v1676
        %v1824 = vadd.f32 %v1823, %v1677
        %v1825 = vadd.f32 %v1824, %v1678
        %v1826 = vrot.slane %v1825, 4
        %v1827 = vadd.f32 %v1825, %v1826
        %v1828 = vrot.slane %v1827, 2
        %v1829 = vadd.f32 %v1827, %v1828
        %v1830 = vrot.slane %v1829, 1
        %v1831 = vadd.f32 %v1829, %v1830
        %v1832 = vadd.f32 %v1679, %v1680
        %v1833 = vadd.f32 %v1832, %v1681
        %v1834 = vadd.f32 %v1833, %v1682
        %v1835 = vadd.f32 %v1834, %v1683
        %v1836 = vadd.f32 %v1835, %v1684
        %v1837 = vadd.f32 %v1836, %v1685
        %v1838 = vadd.f32 %v1837, %v1686
        %v1839 = vadd.f32 %v1838, %v1687
        %v1840 = vadd.f32 %v1839, %v1688
        %v1841 = vadd.f32 %v1840, %v1689
        %v1842 = vadd.f32 %v1841, %v1690
        %v1843 = vadd.f32 %v1842, %v1691
        %v1844 = vadd.f32 %v1843, %v1692
        %v1845 = vadd.f32 %v1844, %v1693
        %v1846 = vadd.f32 %v1845, %v1694
        %v1847 = vrot.slane %v1846, 4
        %v1848 = vadd.f32 %v1846, %v1847
        %v1849 = vrot.slane %v1848, 2
        %v1850 = vadd.f32 %v1848, %v1849
        %v1851 = vrot.slane %v1850, 1
        %v1852 = vadd.f32 %v1850, %v1851
        %v1853 = vadd.f32 %v1695, %v1696
        %v1854 = vadd.f32 %v1853, %v1697
        %v1855 = vadd.f32 %v1854, %v1698
        %v1856 = vadd.f32 %v1855, %v1699
        %v1857 = vadd.f32 %v1856, %v1700
        %v1858 = vadd.f32 %v1857, %v1701
        %v1859 = vadd.f32 %v1858, %v1702
        %v1860 = vadd.f32 %v1859, %v1703
        %v1861 = vadd.f32 %v1860, %v1704
        %v1862 = vadd.f32 %v1861, %v1705
        %v1863 = vadd.f32 %v1862, %v1706
        %v1864 = vadd.f32 %v1863, %v1707
        %v1865 = vadd.f32 %v1864, %v1708
        %v1866 = vadd.f32 %v1865, %v1709
        %v1867 = vadd.f32 %v1866, %v1710
        %v1868 = vrot.slane %v1867, 4
        %v1869 = vadd.f32 %v1867, %v1868
        %v1870 = vrot.slane %v1869, 2
        %v1871 = vadd.f32 %v1869, %v1870
        %v1872 = vrot.slane %v1871, 1
        %v1873 = vadd.f32 %v1871, %v1872
        %v1874 = vadd.f32 %v1711, %v1712
        %v1875 = vadd.f32 %v1874, %v1713
        %v1876 = vadd.f32 %v1875, %v1714
        %v1877 = vadd.f32 %v1876, %v1715
        %v1878 = vadd.f32 %v1877, %v1716
        %v1879 = vadd.f32 %v1878, %v1717
        %v1880 = vadd.f32 %v1879, %v1718
        %v1881 = vadd.f32 %v1880, %v1719
        %v1882 = vadd.f32 %v1881, %v1720
        %v1883 = vadd.f32 %v1882, %v1721
        %v1884 = vadd.f32 %v1883, %v1722
        %v1885 = vadd.f32 %v1884, %v1723
        %v1886 = vadd.f32 %v1885, %v1724
        %v1887 = vadd.f32 %v1886, %v1725
        %v1888 = vadd.f32 %v1887, %v1726
        %v1889 = vrot.slane %v1888, 4
        %v1890 = vadd.f32 %v1888, %v1889
        %v1891 = vrot.slane %v1890, 2
        %v1892 = vadd.f32 %v1890, %v1891
        %v1893 = vrot.slane %v1892, 1
        %v1894 = vadd.f32 %v1892, %v1893
        %v1895 = vadd.f32 %v1747, 0.0
        %v1896 = vadd.f32 %v1768, 0.0
        %v1897 = vadd.f32 %v1789, 0.0
        %v1898 = vadd.f32 %v1810, 0.0
        %v1899 = vadd.f32 %v1831, 0.0
        %v1900 = vadd.f32 %v1852, 0.0
        %v1901 = vadd.f32 %v1873, 0.0
        %v1902 = vadd.f32 %v1894, 0.0
        %v1903 = vld [vmem:[#allocation2 + $0x8] sm:$0xff]
        %v1904 = vlaneseq
        %v1905 = vshrl.u32 %v1904, 7
        %v1906 = vsub.s32 0, %v1905
        %v1907 = vrot.slane %v1903, %v1906
        %1909 = vbcast.lane.b32.xlu0 %v1907, 256
        %v1910 = vpop.permute.xlu0 %1909
        %s1912 = sor.u32 256, 8
        %1913 = vbcast.lane.b32.xlu0 %v1907, %s1912
        %v1914 = vpop.permute.xlu0 %1913
        %s1916 = sor.u32 256, 16
        %1917 = vbcast.lane.b32.xlu0 %v1907, %s1916
        %v1918 = vpop.permute.xlu0 %1917
        %s1920 = sor.u32 256, 24
        %1921 = vbcast.lane.b32.xlu0 %v1907, %s1920
        %v1922 = vpop.permute.xlu0 %1921
        %s1924 = sor.u32 256, 32
        %1925 = vbcast.lane.b32.xlu0 %v1907, %s1924
        %v1926 = vpop.permute.xlu0 %1925
        %s1928 = sor.u32 256, 40
        %1929 = vbcast.lane.b32.xlu0 %v1907, %s1928
        %v1930 = vpop.permute.xlu0 %1929
        %s1932 = sor.u32 256, 48
        %1933 = vbcast.lane.b32.xlu0 %v1907, %s1932
        %v1934 = vpop.permute.xlu0 %1933
        %s1936 = sor.u32 256, 56
        %1937 = vbcast.lane.b32.xlu0 %v1907, %s1936
        %v1938 = vpop.permute.xlu0 %1937
        %s1940 = sor.u32 256, 64
        %1941 = vbcast.lane.b32.xlu0 %v1907, %s1940
        %v1942 = vpop.permute.xlu0 %1941
        %s1944 = sor.u32 256, 72
        %1945 = vbcast.lane.b32.xlu0 %v1907, %s1944
        %v1946 = vpop.permute.xlu0 %1945
        %s1948 = sor.u32 256, 80
        %1949 = vbcast.lane.b32.xlu0 %v1907, %s1948
        %v1950 = vpop.permute.xlu0 %1949
        %s1952 = sor.u32 256, 88
        %1953 = vbcast.lane.b32.xlu0 %v1907, %s1952
        %v1954 = vpop.permute.xlu0 %1953
        %s1956 = sor.u32 256, 96
        %1957 = vbcast.lane.b32.xlu0 %v1907, %s1956
        %v1958 = vpop.permute.xlu0 %1957
        %s1960 = sor.u32 256, 104
        %1961 = vbcast.lane.b32.xlu0 %v1907, %s1960
        %v1962 = vpop.permute.xlu0 %1961
        %s1964 = sor.u32 256, 112
        %1965 = vbcast.lane.b32.xlu0 %v1907, %s1964
        %v1966 = vpop.permute.xlu0 %1965
        %s1968 = sor.u32 256, 120
        %1969 = vbcast.lane.b32.xlu0 %v1907, %s1968
        %v1970 = vpop.permute.xlu0 %1969
        %v1971 = vlaneseq
        %v1972 = vshrl.u32 %v1971, 7
        %v1973 = vsub.s32 1, %v1972
        %v1974 = vrot.slane %v1903, %v1973
        %1976 = vbcast.lane.b32.xlu0 %v1974, 256
        %v1977 = vpop.permute.xlu0 %1976
        %s1979 = sor.u32 256, 8
        %1980 = vbcast.lane.b32.xlu0 %v1974, %s1979
        %v1981 = vpop.permute.xlu0 %1980
        %s1983 = sor.u32 256, 16
        %1984 = vbcast.lane.b32.xlu0 %v1974, %s1983
        %v1985 = vpop.permute.xlu0 %1984
        %s1987 = sor.u32 256, 24
        %1988 = vbcast.lane.b32.xlu0 %v1974, %s1987
        %v1989 = vpop.permute.xlu0 %1988
        %s1991 = sor.u32 256, 32
        %1992 = vbcast.lane.b32.xlu0 %v1974, %s1991
        %v1993 = vpop.permute.xlu0 %1992
        %s1995 = sor.u32 256, 40
        %1996 = vbcast.lane.b32.xlu0 %v1974, %s1995
        %v1997 = vpop.permute.xlu0 %1996
        %s1999 = sor.u32 256, 48
        %2000 = vbcast.lane.b32.xlu0 %v1974, %s1999
        %v2001 = vpop.permute.xlu0 %2000
        %s2003 = sor.u32 256, 56
        %2004 = vbcast.lane.b32.xlu0 %v1974, %s2003
        %v2005 = vpop.permute.xlu0 %2004
        %s2007 = sor.u32 256, 64
        %2008 = vbcast.lane.b32.xlu0 %v1974, %s2007
        %v2009 = vpop.permute.xlu0 %2008
        %s2011 = sor.u32 256, 72
        %2012 = vbcast.lane.b32.xlu0 %v1974, %s2011
        %v2013 = vpop.permute.xlu0 %2012
        %s2015 = sor.u32 256, 80
        %2016 = vbcast.lane.b32.xlu0 %v1974, %s2015
        %v2017 = vpop.permute.xlu0 %2016
        %s2019 = sor.u32 256, 88
        %2020 = vbcast.lane.b32.xlu0 %v1974, %s2019
        %v2021 = vpop.permute.xlu0 %2020
        %s2023 = sor.u32 256, 96
        %2024 = vbcast.lane.b32.xlu0 %v1974, %s2023
        %v2025 = vpop.permute.xlu0 %2024
        %s2027 = sor.u32 256, 104
        %2028 = vbcast.lane.b32.xlu0 %v1974, %s2027
        %v2029 = vpop.permute.xlu0 %2028
        %s2031 = sor.u32 256, 112
        %2032 = vbcast.lane.b32.xlu0 %v1974, %s2031
        %v2033 = vpop.permute.xlu0 %2032
        %s2035 = sor.u32 256, 120
        %2036 = vbcast.lane.b32.xlu0 %v1974, %s2035
        %v2037 = vpop.permute.xlu0 %2036
        %v2038 = vlaneseq
        %v2039 = vshrl.u32 %v2038, 7
        %v2040 = vsub.s32 2, %v2039
        %v2041 = vrot.slane %v1903, %v2040
        %2043 = vbcast.lane.b32.xlu0 %v2041, 256
        %v2044 = vpop.permute.xlu0 %2043
        %s2046 = sor.u32 256, 8
        %2047 = vbcast.lane.b32.xlu0 %v2041, %s2046
        %v2048 = vpop.permute.xlu0 %2047
        %s2050 = sor.u32 256, 16
        %2051 = vbcast.lane.b32.xlu0 %v2041, %s2050
        %v2052 = vpop.permute.xlu0 %2051
        %s2054 = sor.u32 256, 24
        %2055 = vbcast.lane.b32.xlu0 %v2041, %s2054
        %v2056 = vpop.permute.xlu0 %2055
        %s2058 = sor.u32 256, 32
        %2059 = vbcast.lane.b32.xlu0 %v2041, %s2058
        %v2060 = vpop.permute.xlu0 %2059
        %s2062 = sor.u32 256, 40
        %2063 = vbcast.lane.b32.xlu0 %v2041, %s2062
        %v2064 = vpop.permute.xlu0 %2063
        %s2066 = sor.u32 256, 48
        %2067 = vbcast.lane.b32.xlu0 %v2041, %s2066
        %v2068 = vpop.permute.xlu0 %2067
        %s2070 = sor.u32 256, 56
        %2071 = vbcast.lane.b32.xlu0 %v2041, %s2070
        %v2072 = vpop.permute.xlu0 %2071
        %s2074 = sor.u32 256, 64
        %2075 = vbcast.lane.b32.xlu0 %v2041, %s2074
        %v2076 = vpop.permute.xlu0 %2075
        %s2078 = sor.u32 256, 72
        %2079 = vbcast.lane.b32.xlu0 %v2041, %s2078
        %v2080 = vpop.permute.xlu0 %2079
        %s2082 = sor.u32 256, 80
        %2083 = vbcast.lane.b32.xlu0 %v2041, %s2082
        %v2084 = vpop.permute.xlu0 %2083
        %s2086 = sor.u32 256, 88
        %2087 = vbcast.lane.b32.xlu0 %v2041, %s2086
        %v2088 = vpop.permute.xlu0 %2087
        %s2090 = sor.u32 256, 96
        %2091 = vbcast.lane.b32.xlu0 %v2041, %s2090
        %v2092 = vpop.permute.xlu0 %2091
        %s2094 = sor.u32 256, 104
        %2095 = vbcast.lane.b32.xlu0 %v2041, %s2094
        %v2096 = vpop.permute.xlu0 %2095
        %s2098 = sor.u32 256, 112
        %2099 = vbcast.lane.b32.xlu0 %v2041, %s2098
        %v2100 = vpop.permute.xlu0 %2099
        %s2102 = sor.u32 256, 120
        %2103 = vbcast.lane.b32.xlu0 %v2041, %s2102
        %v2104 = vpop.permute.xlu0 %2103
        %v2105 = vlaneseq
        %v2106 = vshrl.u32 %v2105, 7
        %v2107 = vsub.s32 3, %v2106
        %v2108 = vrot.slane %v1903, %v2107
        %2110 = vbcast.lane.b32.xlu0 %v2108, 256
        %v2111 = vpop.permute.xlu0 %2110
        %s2113 = sor.u32 256, 8
        %2114 = vbcast.lane.b32.xlu0 %v2108, %s2113
        %v2115 = vpop.permute.xlu0 %2114
        %s2117 = sor.u32 256, 16
        %2118 = vbcast.lane.b32.xlu0 %v2108, %s2117
        %v2119 = vpop.permute.xlu0 %2118
        %s2121 = sor.u32 256, 24
        %2122 = vbcast.lane.b32.xlu0 %v2108, %s2121
        %v2123 = vpop.permute.xlu0 %2122
        %s2125 = sor.u32 256, 32
        %2126 = vbcast.lane.b32.xlu0 %v2108, %s2125
        %v2127 = vpop.permute.xlu0 %2126
        %s2129 = sor.u32 256, 40
        %2130 = vbcast.lane.b32.xlu0 %v2108, %s2129
        %v2131 = vpop.permute.xlu0 %2130
        %s2133 = sor.u32 256, 48
        %2134 = vbcast.lane.b32.xlu0 %v2108, %s2133
        %v2135 = vpop.permute.xlu0 %2134
        %s2137 = sor.u32 256, 56
        %2138 = vbcast.lane.b32.xlu0 %v2108, %s2137
        %v2139 = vpop.permute.xlu0 %2138
        %s2141 = sor.u32 256, 64
        %2142 = vbcast.lane.b32.xlu0 %v2108, %s2141
        %v2143 = vpop.permute.xlu0 %2142
        %s2145 = sor.u32 256, 72
        %2146 = vbcast.lane.b32.xlu0 %v2108, %s2145
        %v2147 = vpop.permute.xlu0 %2146
        %s2149 = sor.u32 256, 80
        %2150 = vbcast.lane.b32.xlu0 %v2108, %s2149
        %v2151 = vpop.permute.xlu0 %2150
        %s2153 = sor.u32 256, 88
        %2154 = vbcast.lane.b32.xlu0 %v2108, %s2153
        %v2155 = vpop.permute.xlu0 %2154
        %s2157 = sor.u32 256, 96
        %2158 = vbcast.lane.b32.xlu0 %v2108, %s2157
        %v2159 = vpop.permute.xlu0 %2158
        %s2161 = sor.u32 256, 104
        %2162 = vbcast.lane.b32.xlu0 %v2108, %s2161
        %v2163 = vpop.permute.xlu0 %2162
        %s2165 = sor.u32 256, 112
        %2166 = vbcast.lane.b32.xlu0 %v2108, %s2165
        %v2167 = vpop.permute.xlu0 %2166
        %s2169 = sor.u32 256, 120
        %2170 = vbcast.lane.b32.xlu0 %v2108, %s2169
        %v2171 = vpop.permute.xlu0 %2170
        %v2172 = vlaneseq
        %v2173 = vshrl.u32 %v2172, 7
        %v2174 = vsub.s32 4, %v2173
        %v2175 = vrot.slane %v1903, %v2174
        %2177 = vbcast.lane.b32.xlu0 %v2175, 256
        %v2178 = vpop.permute.xlu0 %2177
        %s2180 = sor.u32 256, 8
        %2181 = vbcast.lane.b32.xlu0 %v2175, %s2180
        %v2182 = vpop.permute.xlu0 %2181
        %s2184 = sor.u32 256, 16
        %2185 = vbcast.lane.b32.xlu0 %v2175, %s2184
        %v2186 = vpop.permute.xlu0 %2185
        %s2188 = sor.u32 256, 24
        %2189 = vbcast.lane.b32.xlu0 %v2175, %s2188
        %v2190 = vpop.permute.xlu0 %2189
        %s2192 = sor.u32 256, 32
        %2193 = vbcast.lane.b32.xlu0 %v2175, %s2192
        %v2194 = vpop.permute.xlu0 %2193
        %s2196 = sor.u32 256, 40
        %2197 = vbcast.lane.b32.xlu0 %v2175, %s2196
        %v2198 = vpop.permute.xlu0 %2197
        %s2200 = sor.u32 256, 48
        %2201 = vbcast.lane.b32.xlu0 %v2175, %s2200
        %v2202 = vpop.permute.xlu0 %2201
        %s2204 = sor.u32 256, 56
        %2205 = vbcast.lane.b32.xlu0 %v2175, %s2204
        %v2206 = vpop.permute.xlu0 %2205
        %s2208 = sor.u32 256, 64
        %2209 = vbcast.lane.b32.xlu0 %v2175, %s2208
        %v2210 = vpop.permute.xlu0 %2209
        %s2212 = sor.u32 256, 72
        %2213 = vbcast.lane.b32.xlu0 %v2175, %s2212
        %v2214 = vpop.permute.xlu0 %2213
        %s2216 = sor.u32 256, 80
        %2217 = vbcast.lane.b32.xlu0 %v2175, %s2216
        %v2218 = vpop.permute.xlu0 %2217
        %s2220 = sor.u32 256, 88
        %2221 = vbcast.lane.b32.xlu0 %v2175, %s2220
        %v2222 = vpop.permute.xlu0 %2221
        %s2224 = sor.u32 256, 96
        %2225 = vbcast.lane.b32.xlu0 %v2175, %s2224
        %v2226 = vpop.permute.xlu0 %2225
        %s2228 = sor.u32 256, 104
        %2229 = vbcast.lane.b32.xlu0 %v2175, %s2228
        %v2230 = vpop.permute.xlu0 %2229
        %s2232 = sor.u32 256, 112
        %2233 = vbcast.lane.b32.xlu0 %v2175, %s2232
        %v2234 = vpop.permute.xlu0 %2233
        %s2236 = sor.u32 256, 120
        %2237 = vbcast.lane.b32.xlu0 %v2175, %s2236
        %v2238 = vpop.permute.xlu0 %2237
        %v2239 = vlaneseq
        %v2240 = vshrl.u32 %v2239, 7
        %v2241 = vsub.s32 5, %v2240
        %v2242 = vrot.slane %v1903, %v2241
        %2244 = vbcast.lane.b32.xlu0 %v2242, 256
        %v2245 = vpop.permute.xlu0 %2244
        %s2247 = sor.u32 256, 8
        %2248 = vbcast.lane.b32.xlu0 %v2242, %s2247
        %v2249 = vpop.permute.xlu0 %2248
        %s2251 = sor.u32 256, 16
        %2252 = vbcast.lane.b32.xlu0 %v2242, %s2251
        %v2253 = vpop.permute.xlu0 %2252
        %s2255 = sor.u32 256, 24
        %2256 = vbcast.lane.b32.xlu0 %v2242, %s2255
        %v2257 = vpop.permute.xlu0 %2256
        %s2259 = sor.u32 256, 32
        %2260 = vbcast.lane.b32.xlu0 %v2242, %s2259
        %v2261 = vpop.permute.xlu0 %2260
        %s2263 = sor.u32 256, 40
        %2264 = vbcast.lane.b32.xlu0 %v2242, %s2263
        %v2265 = vpop.permute.xlu0 %2264
        %s2267 = sor.u32 256, 48
        %2268 = vbcast.lane.b32.xlu0 %v2242, %s2267
        %v2269 = vpop.permute.xlu0 %2268
        %s2271 = sor.u32 256, 56
        %2272 = vbcast.lane.b32.xlu0 %v2242, %s2271
        %v2273 = vpop.permute.xlu0 %2272
        %s2275 = sor.u32 256, 64
        %2276 = vbcast.lane.b32.xlu0 %v2242, %s2275
        %v2277 = vpop.permute.xlu0 %2276
        %s2279 = sor.u32 256, 72
        %2280 = vbcast.lane.b32.xlu0 %v2242, %s2279
        %v2281 = vpop.permute.xlu0 %2280
        %s2283 = sor.u32 256, 80
        %2284 = vbcast.lane.b32.xlu0 %v2242, %s2283
        %v2285 = vpop.permute.xlu0 %2284
        %s2287 = sor.u32 256, 88
        %2288 = vbcast.lane.b32.xlu0 %v2242, %s2287
        %v2289 = vpop.permute.xlu0 %2288
        %s2291 = sor.u32 256, 96
        %2292 = vbcast.lane.b32.xlu0 %v2242, %s2291
        %v2293 = vpop.permute.xlu0 %2292
        %s2295 = sor.u32 256, 104
        %2296 = vbcast.lane.b32.xlu0 %v2242, %s2295
        %v2297 = vpop.permute.xlu0 %2296
        %s2299 = sor.u32 256, 112
        %2300 = vbcast.lane.b32.xlu0 %v2242, %s2299
        %v2301 = vpop.permute.xlu0 %2300
        %s2303 = sor.u32 256, 120
        %2304 = vbcast.lane.b32.xlu0 %v2242, %s2303
        %v2305 = vpop.permute.xlu0 %2304
        %v2306 = vlaneseq
        %v2307 = vshrl.u32 %v2306, 7
        %v2308 = vsub.s32 6, %v2307
        %v2309 = vrot.slane %v1903, %v2308
        %2311 = vbcast.lane.b32.xlu0 %v2309, 256
        %v2312 = vpop.permute.xlu0 %2311
        %s2314 = sor.u32 256, 8
        %2315 = vbcast.lane.b32.xlu0 %v2309, %s2314
        %v2316 = vpop.permute.xlu0 %2315
        %s2318 = sor.u32 256, 16
        %2319 = vbcast.lane.b32.xlu0 %v2309, %s2318
        %v2320 = vpop.permute.xlu0 %2319
        %s2322 = sor.u32 256, 24
        %2323 = vbcast.lane.b32.xlu0 %v2309, %s2322
        %v2324 = vpop.permute.xlu0 %2323
        %s2326 = sor.u32 256, 32
        %2327 = vbcast.lane.b32.xlu0 %v2309, %s2326
        %v2328 = vpop.permute.xlu0 %2327
        %s2330 = sor.u32 256, 40
        %2331 = vbcast.lane.b32.xlu0 %v2309, %s2330
        %v2332 = vpop.permute.xlu0 %2331
        %s2334 = sor.u32 256, 48
        %2335 = vbcast.lane.b32.xlu0 %v2309, %s2334
        %v2336 = vpop.permute.xlu0 %2335
        %s2338 = sor.u32 256, 56
        %2339 = vbcast.lane.b32.xlu0 %v2309, %s2338
        %v2340 = vpop.permute.xlu0 %2339
        %s2342 = sor.u32 256, 64
        %2343 = vbcast.lane.b32.xlu0 %v2309, %s2342
        %v2344 = vpop.permute.xlu0 %2343
        %s2346 = sor.u32 256, 72
        %2347 = vbcast.lane.b32.xlu0 %v2309, %s2346
        %v2348 = vpop.permute.xlu0 %2347
        %s2350 = sor.u32 256, 80
        %2351 = vbcast.lane.b32.xlu0 %v2309, %s2350
        %v2352 = vpop.permute.xlu0 %2351
        %s2354 = sor.u32 256, 88
        %2355 = vbcast.lane.b32.xlu0 %v2309, %s2354
        %v2356 = vpop.permute.xlu0 %2355
        %s2358 = sor.u32 256, 96
        %2359 = vbcast.lane.b32.xlu0 %v2309, %s2358
        %v2360 = vpop.permute.xlu0 %2359
        %s2362 = sor.u32 256, 104
        %2363 = vbcast.lane.b32.xlu0 %v2309, %s2362
        %v2364 = vpop.permute.xlu0 %2363
        %s2366 = sor.u32 256, 112
        %2367 = vbcast.lane.b32.xlu0 %v2309, %s2366
        %v2368 = vpop.permute.xlu0 %2367
        %s2370 = sor.u32 256, 120
        %2371 = vbcast.lane.b32.xlu0 %v2309, %s2370
        %v2372 = vpop.permute.xlu0 %2371
        %v2373 = vlaneseq
        %v2374 = vshrl.u32 %v2373, 7
        %v2375 = vsub.s32 7, %v2374
        %v2376 = vrot.slane %v1903, %v2375
        %2378 = vbcast.lane.b32.xlu0 %v2376, 256
        %v2379 = vpop.permute.xlu0 %2378
        %s2381 = sor.u32 256, 8
        %2382 = vbcast.lane.b32.xlu0 %v2376, %s2381
        %v2383 = vpop.permute.xlu0 %2382
        %s2385 = sor.u32 256, 16
        %2386 = vbcast.lane.b32.xlu0 %v2376, %s2385
        %v2387 = vpop.permute.xlu0 %2386
        %s2389 = sor.u32 256, 24
        %2390 = vbcast.lane.b32.xlu0 %v2376, %s2389
        %v2391 = vpop.permute.xlu0 %2390
        %s2393 = sor.u32 256, 32
        %2394 = vbcast.lane.b32.xlu0 %v2376, %s2393
        %v2395 = vpop.permute.xlu0 %2394
        %s2397 = sor.u32 256, 40
        %2398 = vbcast.lane.b32.xlu0 %v2376, %s2397
        %v2399 = vpop.permute.xlu0 %2398
        %s2401 = sor.u32 256, 48
        %2402 = vbcast.lane.b32.xlu0 %v2376, %s2401
        %v2403 = vpop.permute.xlu0 %2402
        %s2405 = sor.u32 256, 56
        %2406 = vbcast.lane.b32.xlu0 %v2376, %s2405
        %v2407 = vpop.permute.xlu0 %2406
        %s2409 = sor.u32 256, 64
        %2410 = vbcast.lane.b32.xlu0 %v2376, %s2409
        %v2411 = vpop.permute.xlu0 %2410
        %s2413 = sor.u32 256, 72
        %2414 = vbcast.lane.b32.xlu0 %v2376, %s2413
        %v2415 = vpop.permute.xlu0 %2414
        %s2417 = sor.u32 256, 80
        %2418 = vbcast.lane.b32.xlu0 %v2376, %s2417
        %v2419 = vpop.permute.xlu0 %2418
        %s2421 = sor.u32 256, 88
        %2422 = vbcast.lane.b32.xlu0 %v2376, %s2421
        %v2423 = vpop.permute.xlu0 %2422
        %s2425 = sor.u32 256, 96
        %2426 = vbcast.lane.b32.xlu0 %v2376, %s2425
        %v2427 = vpop.permute.xlu0 %2426
        %s2429 = sor.u32 256, 104
        %2430 = vbcast.lane.b32.xlu0 %v2376, %s2429
        %v2431 = vpop.permute.xlu0 %2430
        %s2433 = sor.u32 256, 112
        %2434 = vbcast.lane.b32.xlu0 %v2376, %s2433
        %v2435 = vpop.permute.xlu0 %2434
        %s2437 = sor.u32 256, 120
        %2438 = vbcast.lane.b32.xlu0 %v2376, %s2437
        %v2439 = vpop.permute.xlu0 %2438
        %vm2440 = vcmp.gt.f32.partialorder %v1910, %v873
        %vm2441 = vcmp.gt.f32.partialorder %v1914, %v873
        %vm2442 = vcmp.gt.f32.partialorder %v1918, %v873
        %vm2443 = vcmp.gt.f32.partialorder %v1922, %v873
        %vm2444 = vcmp.gt.f32.partialorder %v1926, %v873
        %vm2445 = vcmp.gt.f32.partialorder %v1930, %v873
        %vm2446 = vcmp.gt.f32.partialorder %v1934, %v873
        %vm2447 = vcmp.gt.f32.partialorder %v1938, %v873
        %vm2448 = vcmp.gt.f32.partialorder %v1942, %v873
        %vm2449 = vcmp.gt.f32.partialorder %v1946, %v873
        %vm2450 = vcmp.gt.f32.partialorder %v1950, %v873
        %vm2451 = vcmp.gt.f32.partialorder %v1954, %v873
        %vm2452 = vcmp.gt.f32.partialorder %v1958, %v873
        %vm2453 = vcmp.gt.f32.partialorder %v1962, %v873
        %vm2454 = vcmp.gt.f32.partialorder %v1966, %v873
        %vm2455 = vcmp.gt.f32.partialorder %v1970, %v873
        %vm2456 = vcmp.gt.f32.partialorder %v1977, %v877
        %vm2457 = vcmp.gt.f32.partialorder %v1981, %v877
        %vm2458 = vcmp.gt.f32.partialorder %v1985, %v877
        %vm2459 = vcmp.gt.f32.partialorder %v1989, %v877
        %vm2460 = vcmp.gt.f32.partialorder %v1993, %v877
        %vm2461 = vcmp.gt.f32.partialorder %v1997, %v877
        %vm2462 = vcmp.gt.f32.partialorder %v2001, %v877
        %vm2463 = vcmp.gt.f32.partialorder %v2005, %v877
        %vm2464 = vcmp.gt.f32.partialorder %v2009, %v877
        %vm2465 = vcmp.gt.f32.partialorder %v2013, %v877
        %vm2466 = vcmp.gt.f32.partialorder %v2017, %v877
        %vm2467 = vcmp.gt.f32.partialorder %v2021, %v877
        %vm2468 = vcmp.gt.f32.partialorder %v2025, %v877
        %vm2469 = vcmp.gt.f32.partialorder %v2029, %v877
        %vm2470 = vcmp.gt.f32.partialorder %v2033, %v877
        %vm2471 = vcmp.gt.f32.partialorder %v2037, %v877
        %vm2472 = vcmp.gt.f32.partialorder %v2044, %v881
        %vm2473 = vcmp.gt.f32.partialorder %v2048, %v881
        %vm2474 = vcmp.gt.f32.partialorder %v2052, %v881
        %vm2475 = vcmp.gt.f32.partialorder %v2056, %v881
        %vm2476 = vcmp.gt.f32.partialorder %v2060, %v881
        %vm2477 = vcmp.gt.f32.partialorder %v2064, %v881
        %vm2478 = vcmp.gt.f32.partialorder %v2068, %v881
        %vm2479 = vcmp.gt.f32.partialorder %v2072, %v881
        %vm2480 = vcmp.gt.f32.partialorder %v2076, %v881
        %vm2481 = vcmp.gt.f32.partialorder %v2080, %v881
        %vm2482 = vcmp.gt.f32.partialorder %v2084, %v881
        %vm2483 = vcmp.gt.f32.partialorder %v2088, %v881
        %vm2484 = vcmp.gt.f32.partialorder %v2092, %v881
        %vm2485 = vcmp.gt.f32.partialorder %v2096, %v881
        %vm2486 = vcmp.gt.f32.partialorder %v2100, %v881
        %vm2487 = vcmp.gt.f32.partialorder %v2104, %v881
        %vm2488 = vcmp.gt.f32.partialorder %v2111, %v885
        %vm2489 = vcmp.gt.f32.partialorder %v2115, %v885
        %vm2490 = vcmp.gt.f32.partialorder %v2119, %v885
        %vm2491 = vcmp.gt.f32.partialorder %v2123, %v885
        %vm2492 = vcmp.gt.f32.partialorder %v2127, %v885
        %vm2493 = vcmp.gt.f32.partialorder %v2131, %v885
        %vm2494 = vcmp.gt.f32.partialorder %v2135, %v885
        %vm2495 = vcmp.gt.f32.partialorder %v2139, %v885
        %vm2496 = vcmp.gt.f32.partialorder %v2143, %v885
        %vm2497 = vcmp.gt.f32.partialorder %v2147, %v885
        %vm2498 = vcmp.gt.f32.partialorder %v2151, %v885
        %vm2499 = vcmp.gt.f32.partialorder %v2155, %v885
        %vm2500 = vcmp.gt.f32.partialorder %v2159, %v885
        %vm2501 = vcmp.gt.f32.partialorder %v2163, %v885
        %vm2502 = vcmp.gt.f32.partialorder %v2167, %v885
        %vm2503 = vcmp.gt.f32.partialorder %v2171, %v885
        %vm2504 = vcmp.gt.f32.partialorder %v2178, %v889
        %vm2505 = vcmp.gt.f32.partialorder %v2182, %v889
        %vm2506 = vcmp.gt.f32.partialorder %v2186, %v889
        %vm2507 = vcmp.gt.f32.partialorder %v2190, %v889
        %vm2508 = vcmp.gt.f32.partialorder %v2194, %v889
        %vm2509 = vcmp.gt.f32.partialorder %v2198, %v889
        %vm2510 = vcmp.gt.f32.partialorder %v2202, %v889
        %vm2511 = vcmp.gt.f32.partialorder %v2206, %v889
        %vm2512 = vcmp.gt.f32.partialorder %v2210, %v889
        %vm2513 = vcmp.gt.f32.partialorder %v2214, %v889
        %vm2514 = vcmp.gt.f32.partialorder %v2218, %v889
        %vm2515 = vcmp.gt.f32.partialorder %v2222, %v889
        %vm2516 = vcmp.gt.f32.partialorder %v2226, %v889
        %vm2517 = vcmp.gt.f32.partialorder %v2230, %v889
        %vm2518 = vcmp.gt.f32.partialorder %v2234, %v889
        %vm2519 = vcmp.gt.f32.partialorder %v2238, %v889
        %vm2520 = vcmp.gt.f32.partialorder %v2245, %v893
        %vm2521 = vcmp.gt.f32.partialorder %v2249, %v893
        %vm2522 = vcmp.gt.f32.partialorder %v2253, %v893
        %vm2523 = vcmp.gt.f32.partialorder %v2257, %v893
        %vm2524 = vcmp.gt.f32.partialorder %v2261, %v893
        %vm2525 = vcmp.gt.f32.partialorder %v2265, %v893
        %vm2526 = vcmp.gt.f32.partialorder %v2269, %v893
        %vm2527 = vcmp.gt.f32.partialorder %v2273, %v893
        %vm2528 = vcmp.gt.f32.partialorder %v2277, %v893
        %vm2529 = vcmp.gt.f32.partialorder %v2281, %v893
        %vm2530 = vcmp.gt.f32.partialorder %v2285, %v893
        %vm2531 = vcmp.gt.f32.partialorder %v2289, %v893
        %vm2532 = vcmp.gt.f32.partialorder %v2293, %v893
        %vm2533 = vcmp.gt.f32.partialorder %v2297, %v893
        %vm2534 = vcmp.gt.f32.partialorder %v2301, %v893
        %vm2535 = vcmp.gt.f32.partialorder %v2305, %v893
        %vm2536 = vcmp.gt.f32.partialorder %v2312, %v897
        %vm2537 = vcmp.gt.f32.partialorder %v2316, %v897
        %vm2538 = vcmp.gt.f32.partialorder %v2320, %v897
        %vm2539 = vcmp.gt.f32.partialorder %v2324, %v897
        %vm2540 = vcmp.gt.f32.partialorder %v2328, %v897
        %vm2541 = vcmp.gt.f32.partialorder %v2332, %v897
        %vm2542 = vcmp.gt.f32.partialorder %v2336, %v897
        %vm2543 = vcmp.gt.f32.partialorder %v2340, %v897
        %vm2544 = vcmp.gt.f32.partialorder %v2344, %v897
        %vm2545 = vcmp.gt.f32.partialorder %v2348, %v897
        %vm2546 = vcmp.gt.f32.partialorder %v2352, %v897
        %vm2547 = vcmp.gt.f32.partialorder %v2356, %v897
        %vm2548 = vcmp.gt.f32.partialorder %v2360, %v897
        %vm2549 = vcmp.gt.f32.partialorder %v2364, %v897
        %vm2550 = vcmp.gt.f32.partialorder %v2368, %v897
        %vm2551 = vcmp.gt.f32.partialorder %v2372, %v897
        %vm2552 = vcmp.gt.f32.partialorder %v2379, %v901
        %vm2553 = vcmp.gt.f32.partialorder %v2383, %v901
        %vm2554 = vcmp.gt.f32.partialorder %v2387, %v901
        %vm2555 = vcmp.gt.f32.partialorder %v2391, %v901
        %vm2556 = vcmp.gt.f32.partialorder %v2395, %v901
        %vm2557 = vcmp.gt.f32.partialorder %v2399, %v901
        %vm2558 = vcmp.gt.f32.partialorder %v2403, %v901
        %vm2559 = vcmp.gt.f32.partialorder %v2407, %v901
        %vm2560 = vcmp.gt.f32.partialorder %v2411, %v901
        %vm2561 = vcmp.gt.f32.partialorder %v2415, %v901
        %vm2562 = vcmp.gt.f32.partialorder %v2419, %v901
        %vm2563 = vcmp.gt.f32.partialorder %v2423, %v901
        %vm2564 = vcmp.gt.f32.partialorder %v2427, %v901
        %vm2565 = vcmp.gt.f32.partialorder %v2431, %v901
        %vm2566 = vcmp.gt.f32.partialorder %v2435, %v901
        %vm2567 = vcmp.gt.f32.partialorder %v2439, %v901
        %vm2568 = vcmp.eq.f32.partialorder %v1910, %v873
        %vm2569 = vcmp.eq.f32.partialorder %v1914, %v873
        %vm2570 = vcmp.eq.f32.partialorder %v1918, %v873
        %vm2571 = vcmp.eq.f32.partialorder %v1922, %v873
        %vm2572 = vcmp.eq.f32.partialorder %v1926, %v873
        %vm2573 = vcmp.eq.f32.partialorder %v1930, %v873
        %vm2574 = vcmp.eq.f32.partialorder %v1934, %v873
        %vm2575 = vcmp.eq.f32.partialorder %v1938, %v873
        %vm2576 = vcmp.eq.f32.partialorder %v1942, %v873
        %vm2577 = vcmp.eq.f32.partialorder %v1946, %v873
        %vm2578 = vcmp.eq.f32.partialorder %v1950, %v873
        %vm2579 = vcmp.eq.f32.partialorder %v1954, %v873
        %vm2580 = vcmp.eq.f32.partialorder %v1958, %v873
        %vm2581 = vcmp.eq.f32.partialorder %v1962, %v873
        %vm2582 = vcmp.eq.f32.partialorder %v1966, %v873
        %vm2583 = vcmp.eq.f32.partialorder %v1970, %v873
        %vm2584 = vcmp.eq.f32.partialorder %v1977, %v877
        %vm2585 = vcmp.eq.f32.partialorder %v1981, %v877
        %vm2586 = vcmp.eq.f32.partialorder %v1985, %v877
        %vm2587 = vcmp.eq.f32.partialorder %v1989, %v877
        %vm2588 = vcmp.eq.f32.partialorder %v1993, %v877
        %vm2589 = vcmp.eq.f32.partialorder %v1997, %v877
        %vm2590 = vcmp.eq.f32.partialorder %v2001, %v877
        %vm2591 = vcmp.eq.f32.partialorder %v2005, %v877
        %vm2592 = vcmp.eq.f32.partialorder %v2009, %v877
        %vm2593 = vcmp.eq.f32.partialorder %v2013, %v877
        %vm2594 = vcmp.eq.f32.partialorder %v2017, %v877
        %vm2595 = vcmp.eq.f32.partialorder %v2021, %v877
        %vm2596 = vcmp.eq.f32.partialorder %v2025, %v877
        %vm2597 = vcmp.eq.f32.partialorder %v2029, %v877
        %vm2598 = vcmp.eq.f32.partialorder %v2033, %v877
        %vm2599 = vcmp.eq.f32.partialorder %v2037, %v877
        %vm2600 = vcmp.eq.f32.partialorder %v2044, %v881
        %vm2601 = vcmp.eq.f32.partialorder %v2048, %v881
        %vm2602 = vcmp.eq.f32.partialorder %v2052, %v881
        %vm2603 = vcmp.eq.f32.partialorder %v2056, %v881
        %vm2604 = vcmp.eq.f32.partialorder %v2060, %v881
        %vm2605 = vcmp.eq.f32.partialorder %v2064, %v881
        %vm2606 = vcmp.eq.f32.partialorder %v2068, %v881
        %vm2607 = vcmp.eq.f32.partialorder %v2072, %v881
        %vm2608 = vcmp.eq.f32.partialorder %v2076, %v881
        %vm2609 = vcmp.eq.f32.partialorder %v2080, %v881
        %vm2610 = vcmp.eq.f32.partialorder %v2084, %v881
        %vm2611 = vcmp.eq.f32.partialorder %v2088, %v881
        %vm2612 = vcmp.eq.f32.partialorder %v2092, %v881
        %vm2613 = vcmp.eq.f32.partialorder %v2096, %v881
        %vm2614 = vcmp.eq.f32.partialorder %v2100, %v881
        %vm2615 = vcmp.eq.f32.partialorder %v2104, %v881
        %vm2616 = vcmp.eq.f32.partialorder %v2111, %v885
        %vm2617 = vcmp.eq.f32.partialorder %v2115, %v885
        %vm2618 = vcmp.eq.f32.partialorder %v2119, %v885
        %vm2619 = vcmp.eq.f32.partialorder %v2123, %v885
        %vm2620 = vcmp.eq.f32.partialorder %v2127, %v885
        %vm2621 = vcmp.eq.f32.partialorder %v2131, %v885
        %vm2622 = vcmp.eq.f32.partialorder %v2135, %v885
        %vm2623 = vcmp.eq.f32.partialorder %v2139, %v885
        %vm2624 = vcmp.eq.f32.partialorder %v2143, %v885
        %vm2625 = vcmp.eq.f32.partialorder %v2147, %v885
        %vm2626 = vcmp.eq.f32.partialorder %v2151, %v885
        %vm2627 = vcmp.eq.f32.partialorder %v2155, %v885
        %vm2628 = vcmp.eq.f32.partialorder %v2159, %v885
        %vm2629 = vcmp.eq.f32.partialorder %v2163, %v885
        %vm2630 = vcmp.eq.f32.partialorder %v2167, %v885
        %vm2631 = vcmp.eq.f32.partialorder %v2171, %v885
        %vm2632 = vcmp.eq.f32.partialorder %v2178, %v889
        %vm2633 = vcmp.eq.f32.partialorder %v2182, %v889
        %vm2634 = vcmp.eq.f32.partialorder %v2186, %v889
        %vm2635 = vcmp.eq.f32.partialorder %v2190, %v889
        %vm2636 = vcmp.eq.f32.partialorder %v2194, %v889
        %vm2637 = vcmp.eq.f32.partialorder %v2198, %v889
        %vm2638 = vcmp.eq.f32.partialorder %v2202, %v889
        %vm2639 = vcmp.eq.f32.partialorder %v2206, %v889
        %vm2640 = vcmp.eq.f32.partialorder %v2210, %v889
        %vm2641 = vcmp.eq.f32.partialorder %v2214, %v889
        %vm2642 = vcmp.eq.f32.partialorder %v2218, %v889
        %vm2643 = vcmp.eq.f32.partialorder %v2222, %v889
        %vm2644 = vcmp.eq.f32.partialorder %v2226, %v889
        %vm2645 = vcmp.eq.f32.partialorder %v2230, %v889
        %vm2646 = vcmp.eq.f32.partialorder %v2234, %v889
        %vm2647 = vcmp.eq.f32.partialorder %v2238, %v889
        %vm2648 = vcmp.eq.f32.partialorder %v2245, %v893
        %vm2649 = vcmp.eq.f32.partialorder %v2249, %v893
        %vm2650 = vcmp.eq.f32.partialorder %v2253, %v893
        %vm2651 = vcmp.eq.f32.partialorder %v2257, %v893
        %vm2652 = vcmp.eq.f32.partialorder %v2261, %v893
        %vm2653 = vcmp.eq.f32.partialorder %v2265, %v893
        %vm2654 = vcmp.eq.f32.partialorder %v2269, %v893
        %vm2655 = vcmp.eq.f32.partialorder %v2273, %v893
        %vm2656 = vcmp.eq.f32.partialorder %v2277, %v893
        %vm2657 = vcmp.eq.f32.partialorder %v2281, %v893
        %vm2658 = vcmp.eq.f32.partialorder %v2285, %v893
        %vm2659 = vcmp.eq.f32.partialorder %v2289, %v893
        %vm2660 = vcmp.eq.f32.partialorder %v2293, %v893
        %vm2661 = vcmp.eq.f32.partialorder %v2297, %v893
        %vm2662 = vcmp.eq.f32.partialorder %v2301, %v893
        %vm2663 = vcmp.eq.f32.partialorder %v2305, %v893
        %vm2664 = vcmp.eq.f32.partialorder %v2312, %v897
        %vm2665 = vcmp.eq.f32.partialorder %v2316, %v897
        %vm2666 = vcmp.eq.f32.partialorder %v2320, %v897
        %vm2667 = vcmp.eq.f32.partialorder %v2324, %v897
        %vm2668 = vcmp.eq.f32.partialorder %v2328, %v897
        %vm2669 = vcmp.eq.f32.partialorder %v2332, %v897
        %vm2670 = vcmp.eq.f32.partialorder %v2336, %v897
        %vm2671 = vcmp.eq.f32.partialorder %v2340, %v897
        %vm2672 = vcmp.eq.f32.partialorder %v2344, %v897
        %vm2673 = vcmp.eq.f32.partialorder %v2348, %v897
        %vm2674 = vcmp.eq.f32.partialorder %v2352, %v897
        %vm2675 = vcmp.eq.f32.partialorder %v2356, %v897
        %vm2676 = vcmp.eq.f32.partialorder %v2360, %v897
        %vm2677 = vcmp.eq.f32.partialorder %v2364, %v897
        %vm2678 = vcmp.eq.f32.partialorder %v2368, %v897
        %vm2679 = vcmp.eq.f32.partialorder %v2372, %v897
        %vm2680 = vcmp.eq.f32.partialorder %v2379, %v901
        %vm2681 = vcmp.eq.f32.partialorder %v2383, %v901
        %vm2682 = vcmp.eq.f32.partialorder %v2387, %v901
        %vm2683 = vcmp.eq.f32.partialorder %v2391, %v901
        %vm2684 = vcmp.eq.f32.partialorder %v2395, %v901
        %vm2685 = vcmp.eq.f32.partialorder %v2399, %v901
        %vm2686 = vcmp.eq.f32.partialorder %v2403, %v901
        %vm2687 = vcmp.eq.f32.partialorder %v2407, %v901
        %vm2688 = vcmp.eq.f32.partialorder %v2411, %v901
        %vm2689 = vcmp.eq.f32.partialorder %v2415, %v901
        %vm2690 = vcmp.eq.f32.partialorder %v2419, %v901
        %vm2691 = vcmp.eq.f32.partialorder %v2423, %v901
        %vm2692 = vcmp.eq.f32.partialorder %v2427, %v901
        %vm2693 = vcmp.eq.f32.partialorder %v2431, %v901
        %vm2694 = vcmp.eq.f32.partialorder %v2435, %v901
        %vm2695 = vcmp.eq.f32.partialorder %v2439, %v901
        %s2696 = ssub.s32 %s242, 128
        %v2697 = vstv %s2696
        %vm2698 = vcmp.lt.s32.totalorder %v317, %v2697
        %vm2699 = vcmp.lt.s32.totalorder %v318, %v2697
        %vm2700 = vcmp.lt.s32.totalorder %v319, %v2697
        %vm2701 = vcmp.lt.s32.totalorder %v320, %v2697
        %vm2702 = vcmp.lt.s32.totalorder %v321, %v2697
        %vm2703 = vcmp.lt.s32.totalorder %v322, %v2697
        %vm2704 = vcmp.lt.s32.totalorder %v323, %v2697
        %vm2705 = vcmp.lt.s32.totalorder %v324, %v2697
        %vm2706 = vcmp.lt.s32.totalorder %v325, %v2697
        %vm2707 = vcmp.lt.s32.totalorder %v326, %v2697
        %vm2708 = vcmp.lt.s32.totalorder %v327, %v2697
        %vm2709 = vcmp.lt.s32.totalorder %v328, %v2697
        %vm2710 = vcmp.lt.s32.totalorder %v329, %v2697
        %vm2711 = vcmp.lt.s32.totalorder %v330, %v2697
        %vm2712 = vcmp.lt.s32.totalorder %v331, %v2697
        %vm2713 = vcmp.lt.s32.totalorder %v332, %v2697
        %v2714 = vsel %vm2698, 1, 0
        %v2715 = vsel %vm2699, 1, 0
        %v2716 = vsel %vm2700, 1, 0
        %v2717 = vsel %vm2701, 1, 0
        %v2718 = vsel %vm2702, 1, 0
        %v2719 = vsel %vm2703, 1, 0
        %v2720 = vsel %vm2704, 1, 0
        %v2721 = vsel %vm2705, 1, 0
        %v2722 = vsel %vm2706, 1, 0
        %v2723 = vsel %vm2707, 1, 0
        %v2724 = vsel %vm2708, 1, 0
        %v2725 = vsel %vm2709, 1, 0
        %v2726 = vsel %vm2710, 1, 0
        %v2727 = vsel %vm2711, 1, 0
        %v2728 = vsel %vm2712, 1, 0
        %v2729 = vsel %vm2713, 1, 0
        %vm2730 = vcmp.eq.s32.totalorder %v2714, 1
        %vm2731 = vcmp.eq.s32.totalorder %v2715, 1
        %vm2732 = vcmp.eq.s32.totalorder %v2716, 1
        %vm2733 = vcmp.eq.s32.totalorder %v2717, 1
        %vm2734 = vcmp.eq.s32.totalorder %v2718, 1
        %vm2735 = vcmp.eq.s32.totalorder %v2719, 1
        %vm2736 = vcmp.eq.s32.totalorder %v2720, 1
        %vm2737 = vcmp.eq.s32.totalorder %v2721, 1
        %vm2738 = vcmp.eq.s32.totalorder %v2722, 1
        %vm2739 = vcmp.eq.s32.totalorder %v2723, 1
        %vm2740 = vcmp.eq.s32.totalorder %v2724, 1
        %vm2741 = vcmp.eq.s32.totalorder %v2725, 1
        %vm2742 = vcmp.eq.s32.totalorder %v2726, 1
        %vm2743 = vcmp.eq.s32.totalorder %v2727, 1
        %vm2744 = vcmp.eq.s32.totalorder %v2728, 1
        %vm2745 = vcmp.eq.s32.totalorder %v2729, 1
        %vm2746 = vmand %vm2568, %vm2730
        %vm2747 = vmand %vm2569, %vm2731
        %vm2748 = vmand %vm2570, %vm2732
        %vm2749 = vmand %vm2571, %vm2733
        %vm2750 = vmand %vm2572, %vm2734
        %vm2751 = vmand %vm2573, %vm2735
        %vm2752 = vmand %vm2574, %vm2736
        %vm2753 = vmand %vm2575, %vm2737
        %vm2754 = vmand %vm2576, %vm2738
        %vm2755 = vmand %vm2577, %vm2739
        %vm2756 = vmand %vm2578, %vm2740
        %vm2757 = vmand %vm2579, %vm2741
        %vm2758 = vmand %vm2580, %vm2742
        %vm2759 = vmand %vm2581, %vm2743
        %vm2760 = vmand %vm2582, %vm2744
        %vm2761 = vmand %vm2583, %vm2745
        %vm2762 = vmand %vm2584, %vm2730
        %vm2763 = vmand %vm2585, %vm2731
        %vm2764 = vmand %vm2586, %vm2732
        %vm2765 = vmand %vm2587, %vm2733
        %vm2766 = vmand %vm2588, %vm2734
        %vm2767 = vmand %vm2589, %vm2735
        %vm2768 = vmand %vm2590, %vm2736
        %vm2769 = vmand %vm2591, %vm2737
        %vm2770 = vmand %vm2592, %vm2738
        %vm2771 = vmand %vm2593, %vm2739
        %vm2772 = vmand %vm2594, %vm2740
        %vm2773 = vmand %vm2595, %vm2741
        %vm2774 = vmand %vm2596, %vm2742
        %vm2775 = vmand %vm2597, %vm2743
        %vm2776 = vmand %vm2598, %vm2744
        %vm2777 = vmand %vm2599, %vm2745
        %vm2778 = vmand %vm2600, %vm2730
        %vm2779 = vmand %vm2601, %vm2731
        %vm2780 = vmand %vm2602, %vm2732
        %vm2781 = vmand %vm2603, %vm2733
        %vm2782 = vmand %vm2604, %vm2734
        %vm2783 = vmand %vm2605, %vm2735
        %vm2784 = vmand %vm2606, %vm2736
        %vm2785 = vmand %vm2607, %vm2737
        %vm2786 = vmand %vm2608, %vm2738
        %vm2787 = vmand %vm2609, %vm2739
        %vm2788 = vmand %vm2610, %vm2740
        %vm2789 = vmand %vm2611, %vm2741
        %vm2790 = vmand %vm2612, %vm2742
        %vm2791 = vmand %vm2613, %vm2743
        %vm2792 = vmand %vm2614, %vm2744
        %vm2793 = vmand %vm2615, %vm2745
        %vm2794 = vmand %vm2616, %vm2730
        %vm2795 = vmand %vm2617, %vm2731
        %vm2796 = vmand %vm2618, %vm2732
        %vm2797 = vmand %vm2619, %vm2733
        %vm2798 = vmand %vm2620, %vm2734
        %vm2799 = vmand %vm2621, %vm2735
        %vm2800 = vmand %vm2622, %vm2736
        %vm2801 = vmand %vm2623, %vm2737
        %vm2802 = vmand %vm2624, %vm2738
        %vm2803 = vmand %vm2625, %vm2739
        %vm2804 = vmand %vm2626, %vm2740
        %vm2805 = vmand %vm2627, %vm2741
        %vm2806 = vmand %vm2628, %vm2742
        %vm2807 = vmand %vm2629, %vm2743
        %vm2808 = vmand %vm2630, %vm2744
        %vm2809 = vmand %vm2631, %vm2745
        %vm2810 = vmand %vm2632, %vm2730
        %vm2811 = vmand %vm2633, %vm2731
        %vm2812 = vmand %vm2634, %vm2732
        %vm2813 = vmand %vm2635, %vm2733
        %vm2814 = vmand %vm2636, %vm2734
        %vm2815 = vmand %vm2637, %vm2735
        %vm2816 = vmand %vm2638, %vm2736
        %vm2817 = vmand %vm2639, %vm2737
        %vm2818 = vmand %vm2640, %vm2738
        %vm2819 = vmand %vm2641, %vm2739
        %vm2820 = vmand %vm2642, %vm2740
        %vm2821 = vmand %vm2643, %vm2741
        %vm2822 = vmand %vm2644, %vm2742
        %vm2823 = vmand %vm2645, %vm2743
        %vm2824 = vmand %vm2646, %vm2744
        %vm2825 = vmand %vm2647, %vm2745
        %vm2826 = vmand %vm2648, %vm2730
        %vm2827 = vmand %vm2649, %vm2731
        %vm2828 = vmand %vm2650, %vm2732
        %vm2829 = vmand %vm2651, %vm2733
        %vm2830 = vmand %vm2652, %vm2734
        %vm2831 = vmand %vm2653, %vm2735
        %vm2832 = vmand %vm2654, %vm2736
        %vm2833 = vmand %vm2655, %vm2737
        %vm2834 = vmand %vm2656, %vm2738
        %vm2835 = vmand %vm2657, %vm2739
        %vm2836 = vmand %vm2658, %vm2740
        %vm2837 = vmand %vm2659, %vm2741
        %vm2838 = vmand %vm2660, %vm2742
        %vm2839 = vmand %vm2661, %vm2743
        %vm2840 = vmand %vm2662, %vm2744
        %vm2841 = vmand %vm2663, %vm2745
        %vm2842 = vmand %vm2664, %vm2730
        %vm2843 = vmand %vm2665, %vm2731
        %vm2844 = vmand %vm2666, %vm2732
        %vm2845 = vmand %vm2667, %vm2733
        %vm2846 = vmand %vm2668, %vm2734
        %vm2847 = vmand %vm2669, %vm2735
        %vm2848 = vmand %vm2670, %vm2736
        %vm2849 = vmand %vm2671, %vm2737
        %vm2850 = vmand %vm2672, %vm2738
        %vm2851 = vmand %vm2673, %vm2739
        %vm2852 = vmand %vm2674, %vm2740
        %vm2853 = vmand %vm2675, %vm2741
        %vm2854 = vmand %vm2676, %vm2742
        %vm2855 = vmand %vm2677, %vm2743
        %vm2856 = vmand %vm2678, %vm2744
        %vm2857 = vmand %vm2679, %vm2745
        %vm2858 = vmand %vm2680, %vm2730
        %vm2859 = vmand %vm2681, %vm2731
        %vm2860 = vmand %vm2682, %vm2732
        %vm2861 = vmand %vm2683, %vm2733
        %vm2862 = vmand %vm2684, %vm2734
        %vm2863 = vmand %vm2685, %vm2735
        %vm2864 = vmand %vm2686, %vm2736
        %vm2865 = vmand %vm2687, %vm2737
        %vm2866 = vmand %vm2688, %vm2738
        %vm2867 = vmand %vm2689, %vm2739
        %vm2868 = vmand %vm2690, %vm2740
        %vm2869 = vmand %vm2691, %vm2741
        %vm2870 = vmand %vm2692, %vm2742
        %vm2871 = vmand %vm2693, %vm2743
        %vm2872 = vmand %vm2694, %vm2744
        %vm2873 = vmand %vm2695, %vm2745
        %vm2874 = vmor %vm2440, %vm2746
        %vm2875 = vmor %vm2441, %vm2747
        %vm2876 = vmor %vm2442, %vm2748
        %vm2877 = vmor %vm2443, %vm2749
        %vm2878 = vmor %vm2444, %vm2750
        %vm2879 = vmor %vm2445, %vm2751
        %vm2880 = vmor %vm2446, %vm2752
        %vm2881 = vmor %vm2447, %vm2753
        %vm2882 = vmor %vm2448, %vm2754
        %vm2883 = vmor %vm2449, %vm2755
        %vm2884 = vmor %vm2450, %vm2756
        %vm2885 = vmor %vm2451, %vm2757
        %vm2886 = vmor %vm2452, %vm2758
        %vm2887 = vmor %vm2453, %vm2759
        %vm2888 = vmor %vm2454, %vm2760
        %vm2889 = vmor %vm2455, %vm2761
        %vm2890 = vmor %vm2456, %vm2762
        %vm2891 = vmor %vm2457, %vm2763
        %vm2892 = vmor %vm2458, %vm2764
        %vm2893 = vmor %vm2459, %vm2765
        %vm2894 = vmor %vm2460, %vm2766
        %vm2895 = vmor %vm2461, %vm2767
        %vm2896 = vmor %vm2462, %vm2768
        %vm2897 = vmor %vm2463, %vm2769
        %vm2898 = vmor %vm2464, %vm2770
        %vm2899 = vmor %vm2465, %vm2771
        %vm2900 = vmor %vm2466, %vm2772
        %vm2901 = vmor %vm2467, %vm2773
        %vm2902 = vmor %vm2468, %vm2774
        %vm2903 = vmor %vm2469, %vm2775
        %vm2904 = vmor %vm2470, %vm2776
        %vm2905 = vmor %vm2471, %vm2777
        %vm2906 = vmor %vm2472, %vm2778
        %vm2907 = vmor %vm2473, %vm2779
        %vm2908 = vmor %vm2474, %vm2780
        %vm2909 = vmor %vm2475, %vm2781
        %vm2910 = vmor %vm2476, %vm2782
        %vm2911 = vmor %vm2477, %vm2783
        %vm2912 = vmor %vm2478, %vm2784
        %vm2913 = vmor %vm2479, %vm2785
        %vm2914 = vmor %vm2480, %vm2786
        %vm2915 = vmor %vm2481, %vm2787
        %vm2916 = vmor %vm2482, %vm2788
        %vm2917 = vmor %vm2483, %vm2789
        %vm2918 = vmor %vm2484, %vm2790
        %vm2919 = vmor %vm2485, %vm2791
        %vm2920 = vmor %vm2486, %vm2792
        %vm2921 = vmor %vm2487, %vm2793
        %vm2922 = vmor %vm2488, %vm2794
        %vm2923 = vmor %vm2489, %vm2795
        %vm2924 = vmor %vm2490, %vm2796
        %vm2925 = vmor %vm2491, %vm2797
        %vm2926 = vmor %vm2492, %vm2798
        %vm2927 = vmor %vm2493, %vm2799
        %vm2928 = vmor %vm2494, %vm2800
        %vm2929 = vmor %vm2495, %vm2801
        %vm2930 = vmor %vm2496, %vm2802
        %vm2931 = vmor %vm2497, %vm2803
        %vm2932 = vmor %vm2498, %vm2804
        %vm2933 = vmor %vm2499, %vm2805
        %vm2934 = vmor %vm2500, %vm2806
        %vm2935 = vmor %vm2501, %vm2807
        %vm2936 = vmor %vm2502, %vm2808
        %vm2937 = vmor %vm2503, %vm2809
        %vm2938 = vmor %vm2504, %vm2810
        %vm2939 = vmor %vm2505, %vm2811
        %vm2940 = vmor %vm2506, %vm2812
        %vm2941 = vmor %vm2507, %vm2813
        %vm2942 = vmor %vm2508, %vm2814
        %vm2943 = vmor %vm2509, %vm2815
        %vm2944 = vmor %vm2510, %vm2816
        %vm2945 = vmor %vm2511, %vm2817
        %vm2946 = vmor %vm2512, %vm2818
        %vm2947 = vmor %vm2513, %vm2819
        %vm2948 = vmor %vm2514, %vm2820
        %vm2949 = vmor %vm2515, %vm2821
        %vm2950 = vmor %vm2516, %vm2822
        %vm2951 = vmor %vm2517, %vm2823
        %vm2952 = vmor %vm2518, %vm2824
        %vm2953 = vmor %vm2519, %vm2825
        %vm2954 = vmor %vm2520, %vm2826
        %vm2955 = vmor %vm2521, %vm2827
        %vm2956 = vmor %vm2522, %vm2828
        %vm2957 = vmor %vm2523, %vm2829
        %vm2958 = vmor %vm2524, %vm2830
        %vm2959 = vmor %vm2525, %vm2831
        %vm2960 = vmor %vm2526, %vm2832
        %vm2961 = vmor %vm2527, %vm2833
        %vm2962 = vmor %vm2528, %vm2834
        %vm2963 = vmor %vm2529, %vm2835
        %vm2964 = vmor %vm2530, %vm2836
        %vm2965 = vmor %vm2531, %vm2837
        %vm2966 = vmor %vm2532, %vm2838
        %vm2967 = vmor %vm2533, %vm2839
        %vm2968 = vmor %vm2534, %vm2840
        %vm2969 = vmor %vm2535, %vm2841
        %vm2970 = vmor %vm2536, %vm2842
        %vm2971 = vmor %vm2537, %vm2843
        %vm2972 = vmor %vm2538, %vm2844
        %vm2973 = vmor %vm2539, %vm2845
        %vm2974 = vmor %vm2540, %vm2846
        %vm2975 = vmor %vm2541, %vm2847
        %vm2976 = vmor %vm2542, %vm2848
        %vm2977 = vmor %vm2543, %vm2849
        %vm2978 = vmor %vm2544, %vm2850
        %vm2979 = vmor %vm2545, %vm2851
        %vm2980 = vmor %vm2546, %vm2852
        %vm2981 = vmor %vm2547, %vm2853
        %vm2982 = vmor %vm2548, %vm2854
        %vm2983 = vmor %vm2549, %vm2855
        %vm2984 = vmor %vm2550, %vm2856
        %vm2985 = vmor %vm2551, %vm2857
        %vm2986 = vmor %vm2552, %vm2858
        %vm2987 = vmor %vm2553, %vm2859
        %vm2988 = vmor %vm2554, %vm2860
        %vm2989 = vmor %vm2555, %vm2861
        %vm2990 = vmor %vm2556, %vm2862
        %vm2991 = vmor %vm2557, %vm2863
        %vm2992 = vmor %vm2558, %vm2864
        %vm2993 = vmor %vm2559, %vm2865
        %vm2994 = vmor %vm2560, %vm2866
        %vm2995 = vmor %vm2561, %vm2867
        %vm2996 = vmor %vm2562, %vm2868
        %vm2997 = vmor %vm2563, %vm2869
        %vm2998 = vmor %vm2564, %vm2870
        %vm2999 = vmor %vm2565, %vm2871
        %vm3000 = vmor %vm2566, %vm2872
        %vm3001 = vmor %vm2567, %vm2873
        %v3002 = vsel %vm2874, 1, 0
        %v3003 = vsel %vm2875, 1, 0
        %v3004 = vsel %vm2876, 1, 0
        %v3005 = vsel %vm2877, 1, 0
        %v3006 = vsel %vm2878, 1, 0
        %v3007 = vsel %vm2879, 1, 0
        %v3008 = vsel %vm2880, 1, 0
        %v3009 = vsel %vm2881, 1, 0
        %v3010 = vsel %vm2882, 1, 0
        %v3011 = vsel %vm2883, 1, 0
        %v3012 = vsel %vm2884, 1, 0
        %v3013 = vsel %vm2885, 1, 0
        %v3014 = vsel %vm2886, 1, 0
        %v3015 = vsel %vm2887, 1, 0
        %v3016 = vsel %vm2888, 1, 0
        %v3017 = vsel %vm2889, 1, 0
        %v3018 = vsel %vm2890, 1, 0
        %v3019 = vsel %vm2891, 1, 0
        %v3020 = vsel %vm2892, 1, 0
        %v3021 = vsel %vm2893, 1, 0
        %v3022 = vsel %vm2894, 1, 0
        %v3023 = vsel %vm2895, 1, 0
        %v3024 = vsel %vm2896, 1, 0
        %v3025 = vsel %vm2897, 1, 0
        %v3026 = vsel %vm2898, 1, 0
        %v3027 = vsel %vm2899, 1, 0
        %v3028 = vsel %vm2900, 1, 0
        %v3029 = vsel %vm2901, 1, 0
        %v3030 = vsel %vm2902, 1, 0
        %v3031 = vsel %vm2903, 1, 0
        %v3032 = vsel %vm2904, 1, 0
        %v3033 = vsel %vm2905, 1, 0
        %v3034 = vsel %vm2906, 1, 0
        %v3035 = vsel %vm2907, 1, 0
        %v3036 = vsel %vm2908, 1, 0
        %v3037 = vsel %vm2909, 1, 0
        %v3038 = vsel %vm2910, 1, 0
        %v3039 = vsel %vm2911, 1, 0
        %v3040 = vsel %vm2912, 1, 0
        %v3041 = vsel %vm2913, 1, 0
        %v3042 = vsel %vm2914, 1, 0
        %v3043 = vsel %vm2915, 1, 0
        %v3044 = vsel %vm2916, 1, 0
        %v3045 = vsel %vm2917, 1, 0
        %v3046 = vsel %vm2918, 1, 0
        %v3047 = vsel %vm2919, 1, 0
        %v3048 = vsel %vm2920, 1, 0
        %v3049 = vsel %vm2921, 1, 0
        %v3050 = vsel %vm2922, 1, 0
        %v3051 = vsel %vm2923, 1, 0
        %v3052 = vsel %vm2924, 1, 0
        %v3053 = vsel %vm2925, 1, 0
        %v3054 = vsel %vm2926, 1, 0
        %v3055 = vsel %vm2927, 1, 0
        %v3056 = vsel %vm2928, 1, 0
        %v3057 = vsel %vm2929, 1, 0
        %v3058 = vsel %vm2930, 1, 0
        %v3059 = vsel %vm2931, 1, 0
        %v3060 = vsel %vm2932, 1, 0
        %v3061 = vsel %vm2933, 1, 0
        %v3062 = vsel %vm2934, 1, 0
        %v3063 = vsel %vm2935, 1, 0
        %v3064 = vsel %vm2936, 1, 0
        %v3065 = vsel %vm2937, 1, 0
        %v3066 = vsel %vm2938, 1, 0
        %v3067 = vsel %vm2939, 1, 0
        %v3068 = vsel %vm2940, 1, 0
        %v3069 = vsel %vm2941, 1, 0
        %v3070 = vsel %vm2942, 1, 0
        %v3071 = vsel %vm2943, 1, 0
        %v3072 = vsel %vm2944, 1, 0
        %v3073 = vsel %vm2945, 1, 0
        %v3074 = vsel %vm2946, 1, 0
        %v3075 = vsel %vm2947, 1, 0
        %v3076 = vsel %vm2948, 1, 0
        %v3077 = vsel %vm2949, 1, 0
        %v3078 = vsel %vm2950, 1, 0
        %v3079 = vsel %vm2951, 1, 0
        %v3080 = vsel %vm2952, 1, 0
        %v3081 = vsel %vm2953, 1, 0
        %v3082 = vsel %vm2954, 1, 0
        %v3083 = vsel %vm2955, 1, 0
        %v3084 = vsel %vm2956, 1, 0
        %v3085 = vsel %vm2957, 1, 0
        %v3086 = vsel %vm2958, 1, 0
        %v3087 = vsel %vm2959, 1, 0
        %v3088 = vsel %vm2960, 1, 0
        %v3089 = vsel %vm2961, 1, 0
        %v3090 = vsel %vm2962, 1, 0
        %v3091 = vsel %vm2963, 1, 0
        %v3092 = vsel %vm2964, 1, 0
        %v3093 = vsel %vm2965, 1, 0
        %v3094 = vsel %vm2966, 1, 0
        %v3095 = vsel %vm2967, 1, 0
        %v3096 = vsel %vm2968, 1, 0
        %v3097 = vsel %vm2969, 1, 0
        %v3098 = vsel %vm2970, 1, 0
        %v3099 = vsel %vm2971, 1, 0
        %v3100 = vsel %vm2972, 1, 0
        %v3101 = vsel %vm2973, 1, 0
        %v3102 = vsel %vm2974, 1, 0
        %v3103 = vsel %vm2975, 1, 0
        %v3104 = vsel %vm2976, 1, 0
        %v3105 = vsel %vm2977, 1, 0
        %v3106 = vsel %vm2978, 1, 0
        %v3107 = vsel %vm2979, 1, 0
        %v3108 = vsel %vm2980, 1, 0
        %v3109 = vsel %vm2981, 1, 0
        %v3110 = vsel %vm2982, 1, 0
        %v3111 = vsel %vm2983, 1, 0
        %v3112 = vsel %vm2984, 1, 0
        %v3113 = vsel %vm2985, 1, 0
        %v3114 = vsel %vm2986, 1, 0
        %v3115 = vsel %vm2987, 1, 0
        %v3116 = vsel %vm2988, 1, 0
        %v3117 = vsel %vm2989, 1, 0
        %v3118 = vsel %vm2990, 1, 0
        %v3119 = vsel %vm2991, 1, 0
        %v3120 = vsel %vm2992, 1, 0
        %v3121 = vsel %vm2993, 1, 0
        %v3122 = vsel %vm2994, 1, 0
        %v3123 = vsel %vm2995, 1, 0
        %v3124 = vsel %vm2996, 1, 0
        %v3125 = vsel %vm2997, 1, 0
        %v3126 = vsel %vm2998, 1, 0
        %v3127 = vsel %vm2999, 1, 0
        %v3128 = vsel %vm3000, 1, 0
        %v3129 = vsel %vm3001, 1, 0
        %v3130 = vcvt.s32.f32 %v3002
        %v3131 = vcvt.s32.f32 %v3003
        %v3132 = vcvt.s32.f32 %v3004
        %v3133 = vcvt.s32.f32 %v3005
        %v3134 = vcvt.s32.f32 %v3006
        %v3135 = vcvt.s32.f32 %v3007
        %v3136 = vcvt.s32.f32 %v3008
        %v3137 = vcvt.s32.f32 %v3009
        %v3138 = vcvt.s32.f32 %v3010
        %v3139 = vcvt.s32.f32 %v3011
        %v3140 = vcvt.s32.f32 %v3012
        %v3141 = vcvt.s32.f32 %v3013
        %v3142 = vcvt.s32.f32 %v3014
        %v3143 = vcvt.s32.f32 %v3015
        %v3144 = vcvt.s32.f32 %v3016
        %v3145 = vcvt.s32.f32 %v3017
        %v3146 = vcvt.s32.f32 %v3018
        %v3147 = vcvt.s32.f32 %v3019
        %v3148 = vcvt.s32.f32 %v3020
        %v3149 = vcvt.s32.f32 %v3021
        %v3150 = vcvt.s32.f32 %v3022
        %v3151 = vcvt.s32.f32 %v3023
        %v3152 = vcvt.s32.f32 %v3024
        %v3153 = vcvt.s32.f32 %v3025
        %v3154 = vcvt.s32.f32 %v3026
        %v3155 = vcvt.s32.f32 %v3027
        %v3156 = vcvt.s32.f32 %v3028
        %v3157 = vcvt.s32.f32 %v3029
        %v3158 = vcvt.s32.f32 %v3030
        %v3159 = vcvt.s32.f32 %v3031
        %v3160 = vcvt.s32.f32 %v3032
        %v3161 = vcvt.s32.f32 %v3033
        %v3162 = vcvt.s32.f32 %v3034
        %v3163 = vcvt.s32.f32 %v3035
        %v3164 = vcvt.s32.f32 %v3036
        %v3165 = vcvt.s32.f32 %v3037
        %v3166 = vcvt.s32.f32 %v3038
        %v3167 = vcvt.s32.f32 %v3039
        %v3168 = vcvt.s32.f32 %v3040
        %v3169 = vcvt.s32.f32 %v3041
        %v3170 = vcvt.s32.f32 %v3042
        %v3171 = vcvt.s32.f32 %v3043
        %v3172 = vcvt.s32.f32 %v3044
        %v3173 = vcvt.s32.f32 %v3045
        %v3174 = vcvt.s32.f32 %v3046
        %v3175 = vcvt.s32.f32 %v3047
        %v3176 = vcvt.s32.f32 %v3048
        %v3177 = vcvt.s32.f32 %v3049
        %v3178 = vcvt.s32.f32 %v3050
        %v3179 = vcvt.s32.f32 %v3051
        %v3180 = vcvt.s32.f32 %v3052
        %v3181 = vcvt.s32.f32 %v3053
        %v3182 = vcvt.s32.f32 %v3054
        %v3183 = vcvt.s32.f32 %v3055
        %v3184 = vcvt.s32.f32 %v3056
        %v3185 = vcvt.s32.f32 %v3057
        %v3186 = vcvt.s32.f32 %v3058
        %v3187 = vcvt.s32.f32 %v3059
        %v3188 = vcvt.s32.f32 %v3060
        %v3189 = vcvt.s32.f32 %v3061
        %v3190 = vcvt.s32.f32 %v3062
        %v3191 = vcvt.s32.f32 %v3063
        %v3192 = vcvt.s32.f32 %v3064
        %v3193 = vcvt.s32.f32 %v3065
        %v3194 = vcvt.s32.f32 %v3066
        %v3195 = vcvt.s32.f32 %v3067
        %v3196 = vcvt.s32.f32 %v3068
        %v3197 = vcvt.s32.f32 %v3069
        %v3198 = vcvt.s32.f32 %v3070
        %v3199 = vcvt.s32.f32 %v3071
        %v3200 = vcvt.s32.f32 %v3072
        %v3201 = vcvt.s32.f32 %v3073
        %v3202 = vcvt.s32.f32 %v3074
        %v3203 = vcvt.s32.f32 %v3075
        %v3204 = vcvt.s32.f32 %v3076
        %v3205 = vcvt.s32.f32 %v3077
        %v3206 = vcvt.s32.f32 %v3078
        %v3207 = vcvt.s32.f32 %v3079
        %v3208 = vcvt.s32.f32 %v3080
        %v3209 = vcvt.s32.f32 %v3081
        %v3210 = vcvt.s32.f32 %v3082
        %v3211 = vcvt.s32.f32 %v3083
        %v3212 = vcvt.s32.f32 %v3084
        %v3213 = vcvt.s32.f32 %v3085
        %v3214 = vcvt.s32.f32 %v3086
        %v3215 = vcvt.s32.f32 %v3087
        %v3216 = vcvt.s32.f32 %v3088
        %v3217 = vcvt.s32.f32 %v3089
        %v3218 = vcvt.s32.f32 %v3090
        %v3219 = vcvt.s32.f32 %v3091
        %v3220 = vcvt.s32.f32 %v3092
        %v3221 = vcvt.s32.f32 %v3093
        %v3222 = vcvt.s32.f32 %v3094
        %v3223 = vcvt.s32.f32 %v3095
        %v3224 = vcvt.s32.f32 %v3096
        %v3225 = vcvt.s32.f32 %v3097
        %v3226 = vcvt.s32.f32 %v3098
        %v3227 = vcvt.s32.f32 %v3099
        %v3228 = vcvt.s32.f32 %v3100
        %v3229 = vcvt.s32.f32 %v3101
        %v3230 = vcvt.s32.f32 %v3102
        %v3231 = vcvt.s32.f32 %v3103
        %v3232 = vcvt.s32.f32 %v3104
        %v3233 = vcvt.s32.f32 %v3105
        %v3234 = vcvt.s32.f32 %v3106
        %v3235 = vcvt.s32.f32 %v3107
        %v3236 = vcvt.s32.f32 %v3108
        %v3237 = vcvt.s32.f32 %v3109
        %v3238 = vcvt.s32.f32 %v3110
        %v3239 = vcvt.s32.f32 %v3111
        %v3240 = vcvt.s32.f32 %v3112
        %v3241 = vcvt.s32.f32 %v3113
        %v3242 = vcvt.s32.f32 %v3114
        %v3243 = vcvt.s32.f32 %v3115
        %v3244 = vcvt.s32.f32 %v3116
        %v3245 = vcvt.s32.f32 %v3117
        %v3246 = vcvt.s32.f32 %v3118
        %v3247 = vcvt.s32.f32 %v3119
        %v3248 = vcvt.s32.f32 %v3120
        %v3249 = vcvt.s32.f32 %v3121
        %v3250 = vcvt.s32.f32 %v3122
        %v3251 = vcvt.s32.f32 %v3123
        %v3252 = vcvt.s32.f32 %v3124
        %v3253 = vcvt.s32.f32 %v3125
        %v3254 = vcvt.s32.f32 %v3126
        %v3255 = vcvt.s32.f32 %v3127
        %v3256 = vcvt.s32.f32 %v3128
        %v3257 = vcvt.s32.f32 %v3129
        %v3258 = vadd.f32 %v3130, %v3131
        %v3259 = vadd.f32 %v3258, %v3132
        %v3260 = vadd.f32 %v3259, %v3133
        %v3261 = vadd.f32 %v3260, %v3134
        %v3262 = vadd.f32 %v3261, %v3135
        %v3263 = vadd.f32 %v3262, %v3136
        %v3264 = vadd.f32 %v3263, %v3137
        %v3265 = vadd.f32 %v3264, %v3138
        %v3266 = vadd.f32 %v3265, %v3139
        %v3267 = vadd.f32 %v3266, %v3140
        %v3268 = vadd.f32 %v3267, %v3141
        %v3269 = vadd.f32 %v3268, %v3142
        %v3270 = vadd.f32 %v3269, %v3143
        %v3271 = vadd.f32 %v3270, %v3144
        %v3272 = vadd.f32 %v3271, %v3145
        %v3273 = vrot.slane %v3272, 4
        %v3274 = vadd.f32 %v3272, %v3273
        %v3275 = vrot.slane %v3274, 2
        %v3276 = vadd.f32 %v3274, %v3275
        %v3277 = vrot.slane %v3276, 1
        %v3278 = vadd.f32 %v3276, %v3277
        %v3279 = vadd.f32 %v3146, %v3147
        %v3280 = vadd.f32 %v3279, %v3148
        %v3281 = vadd.f32 %v3280, %v3149
        %v3282 = vadd.f32 %v3281, %v3150
        %v3283 = vadd.f32 %v3282, %v3151
        %v3284 = vadd.f32 %v3283, %v3152
        %v3285 = vadd.f32 %v3284, %v3153
        %v3286 = vadd.f32 %v3285, %v3154
        %v3287 = vadd.f32 %v3286, %v3155
        %v3288 = vadd.f32 %v3287, %v3156
        %v3289 = vadd.f32 %v3288, %v3157
        %v3290 = vadd.f32 %v3289, %v3158
        %v3291 = vadd.f32 %v3290, %v3159
        %v3292 = vadd.f32 %v3291, %v3160
        %v3293 = vadd.f32 %v3292, %v3161
        %v3294 = vrot.slane %v3293, 4
        %v3295 = vadd.f32 %v3293, %v3294
        %v3296 = vrot.slane %v3295, 2
        %v3297 = vadd.f32 %v3295, %v3296
        %v3298 = vrot.slane %v3297, 1
        %v3299 = vadd.f32 %v3297, %v3298
        %v3300 = vadd.f32 %v3162, %v3163
        %v3301 = vadd.f32 %v3300, %v3164
        %v3302 = vadd.f32 %v3301, %v3165
        %v3303 = vadd.f32 %v3302, %v3166
        %v3304 = vadd.f32 %v3303, %v3167
        %v3305 = vadd.f32 %v3304, %v3168
        %v3306 = vadd.f32 %v3305, %v3169
        %v3307 = vadd.f32 %v3306, %v3170
        %v3308 = vadd.f32 %v3307, %v3171
        %v3309 = vadd.f32 %v3308, %v3172
        %v3310 = vadd.f32 %v3309, %v3173
        %v3311 = vadd.f32 %v3310, %v3174
        %v3312 = vadd.f32 %v3311, %v3175
        %v3313 = vadd.f32 %v3312, %v3176
        %v3314 = vadd.f32 %v3313, %v3177
        %v3315 = vrot.slane %v3314, 4
        %v3316 = vadd.f32 %v3314, %v3315
        %v3317 = vrot.slane %v3316, 2
        %v3318 = vadd.f32 %v3316, %v3317
        %v3319 = vrot.slane %v3318, 1
        %v3320 = vadd.f32 %v3318, %v3319
        %v3321 = vadd.f32 %v3178, %v3179
        %v3322 = vadd.f32 %v3321, %v3180
        %v3323 = vadd.f32 %v3322, %v3181
        %v3324 = vadd.f32 %v3323, %v3182
        %v3325 = vadd.f32 %v3324, %v3183
        %v3326 = vadd.f32 %v3325, %v3184
        %v3327 = vadd.f32 %v3326, %v3185
        %v3328 = vadd.f32 %v3327, %v3186
        %v3329 = vadd.f32 %v3328, %v3187
        %v3330 = vadd.f32 %v3329, %v3188
        %v3331 = vadd.f32 %v3330, %v3189
        %v3332 = vadd.f32 %v3331, %v3190
        %v3333 = vadd.f32 %v3332, %v3191
        %v3334 = vadd.f32 %v3333, %v3192
        %v3335 = vadd.f32 %v3334, %v3193
        %v3336 = vrot.slane %v3335, 4
        %v3337 = vadd.f32 %v3335, %v3336
        %v3338 = vrot.slane %v3337, 2
        %v3339 = vadd.f32 %v3337, %v3338
        %v3340 = vrot.slane %v3339, 1
        %v3341 = vadd.f32 %v3339, %v3340
        %v3342 = vadd.f32 %v3194, %v3195
        %v3343 = vadd.f32 %v3342, %v3196
        %v3344 = vadd.f32 %v3343, %v3197
        %v3345 = vadd.f32 %v3344, %v3198
        %v3346 = vadd.f32 %v3345, %v3199
        %v3347 = vadd.f32 %v3346, %v3200
        %v3348 = vadd.f32 %v3347, %v3201
        %v3349 = vadd.f32 %v3348, %v3202
        %v3350 = vadd.f32 %v3349, %v3203
        %v3351 = vadd.f32 %v3350, %v3204
        %v3352 = vadd.f32 %v3351, %v3205
        %v3353 = vadd.f32 %v3352, %v3206
        %v3354 = vadd.f32 %v3353, %v3207
        %v3355 = vadd.f32 %v3354, %v3208
        %v3356 = vadd.f32 %v3355, %v3209
        %v3357 = vrot.slane %v3356, 4
        %v3358 = vadd.f32 %v3356, %v3357
        %v3359 = vrot.slane %v3358, 2
        %v3360 = vadd.f32 %v3358, %v3359
        %v3361 = vrot.slane %v3360, 1
        %v3362 = vadd.f32 %v3360, %v3361
        %v3363 = vadd.f32 %v3210, %v3211
        %v3364 = vadd.f32 %v3363, %v3212
        %v3365 = vadd.f32 %v3364, %v3213
        %v3366 = vadd.f32 %v3365, %v3214
        %v3367 = vadd.f32 %v3366, %v3215
        %v3368 = vadd.f32 %v3367, %v3216
        %v3369 = vadd.f32 %v3368, %v3217
        %v3370 = vadd.f32 %v3369, %v3218
        %v3371 = vadd.f32 %v3370, %v3219
        %v3372 = vadd.f32 %v3371, %v3220
        %v3373 = vadd.f32 %v3372, %v3221
        %v3374 = vadd.f32 %v3373, %v3222
        %v3375 = vadd.f32 %v3374, %v3223
        %v3376 = vadd.f32 %v3375, %v3224
        %v3377 = vadd.f32 %v3376, %v3225
        %v3378 = vrot.slane %v3377, 4
        %v3379 = vadd.f32 %v3377, %v3378
        %v3380 = vrot.slane %v3379, 2
        %v3381 = vadd.f32 %v3379, %v3380
        %v3382 = vrot.slane %v3381, 1
        %v3383 = vadd.f32 %v3381, %v3382
        %v3384 = vadd.f32 %v3226, %v3227
        %v3385 = vadd.f32 %v3384, %v3228
        %v3386 = vadd.f32 %v3385, %v3229
        %v3387 = vadd.f32 %v3386, %v3230
        %v3388 = vadd.f32 %v3387, %v3231
        %v3389 = vadd.f32 %v3388, %v3232
        %v3390 = vadd.f32 %v3389, %v3233
        %v3391 = vadd.f32 %v3390, %v3234
        %v3392 = vadd.f32 %v3391, %v3235
        %v3393 = vadd.f32 %v3392, %v3236
        %v3394 = vadd.f32 %v3393, %v3237
        %v3395 = vadd.f32 %v3394, %v3238
        %v3396 = vadd.f32 %v3395, %v3239
        %v3397 = vadd.f32 %v3396, %v3240
        %v3398 = vadd.f32 %v3397, %v3241
        %v3399 = vrot.slane %v3398, 4
        %v3400 = vadd.f32 %v3398, %v3399
        %v3401 = vrot.slane %v3400, 2
        %v3402 = vadd.f32 %v3400, %v3401
        %v3403 = vrot.slane %v3402, 1
        %v3404 = vadd.f32 %v3402, %v3403
        %v3405 = vadd.f32 %v3242, %v3243
        %v3406 = vadd.f32 %v3405, %v3244
        %v3407 = vadd.f32 %v3406, %v3245
        %v3408 = vadd.f32 %v3407, %v3246
        %v3409 = vadd.f32 %v3408, %v3247
        %v3410 = vadd.f32 %v3409, %v3248
        %v3411 = vadd.f32 %v3410, %v3249
        %v3412 = vadd.f32 %v3411, %v3250
        %v3413 = vadd.f32 %v3412, %v3251
        %v3414 = vadd.f32 %v3413, %v3252
        %v3415 = vadd.f32 %v3414, %v3253
        %v3416 = vadd.f32 %v3415, %v3254
        %v3417 = vadd.f32 %v3416, %v3255
        %v3418 = vadd.f32 %v3417, %v3256
        %v3419 = vadd.f32 %v3418, %v3257
        %v3420 = vrot.slane %v3419, 4
        %v3421 = vadd.f32 %v3419, %v3420
        %v3422 = vrot.slane %v3421, 2
        %v3423 = vadd.f32 %v3421, %v3422
        %v3424 = vrot.slane %v3423, 1
        %v3425 = vadd.f32 %v3423, %v3424
        %v3426 = vadd.f32 %v1895, %v3278
        %v3427 = vadd.f32 %v1896, %v3299
        %v3428 = vadd.f32 %v1897, %v3320
        %v3429 = vadd.f32 %v1898, %v3341
        %v3430 = vadd.f32 %v1899, %v3362
        %v3431 = vadd.f32 %v1900, %v3383
        %v3432 = vadd.f32 %v1901, %v3404
        %v3433 = vadd.f32 %v1902, %v3425
        %v3434 = vld [vmem:[#allocation2 + $0x10] sm:$0xff]
        %v3435 = vlaneseq
        %v3436 = vshrl.u32 %v3435, 7
        %v3437 = vsub.s32 0, %v3436
        %v3438 = vrot.slane %v3434, %v3437
        %3440 = vbcast.lane.b32.xlu0 %v3438, 256
        %v3441 = vpop.permute.xlu0 %3440
        %s3443 = sor.u32 256, 8
        %3444 = vbcast.lane.b32.xlu0 %v3438, %s3443
        %v3445 = vpop.permute.xlu0 %3444
        %s3447 = sor.u32 256, 16
        %3448 = vbcast.lane.b32.xlu0 %v3438, %s3447
        %v3449 = vpop.permute.xlu0 %3448
        %s3451 = sor.u32 256, 24
        %3452 = vbcast.lane.b32.xlu0 %v3438, %s3451
        %v3453 = vpop.permute.xlu0 %3452
        %s3455 = sor.u32 256, 32
        %3456 = vbcast.lane.b32.xlu0 %v3438, %s3455
        %v3457 = vpop.permute.xlu0 %3456
        %s3459 = sor.u32 256, 40
        %3460 = vbcast.lane.b32.xlu0 %v3438, %s3459
        %v3461 = vpop.permute.xlu0 %3460
        %s3463 = sor.u32 256, 48
        %3464 = vbcast.lane.b32.xlu0 %v3438, %s3463
        %v3465 = vpop.permute.xlu0 %3464
        %s3467 = sor.u32 256, 56
        %3468 = vbcast.lane.b32.xlu0 %v3438, %s3467
        %v3469 = vpop.permute.xlu0 %3468
        %s3471 = sor.u32 256, 64
        %3472 = vbcast.lane.b32.xlu0 %v3438, %s3471
        %v3473 = vpop.permute.xlu0 %3472
        %s3475 = sor.u32 256, 72
        %3476 = vbcast.lane.b32.xlu0 %v3438, %s3475
        %v3477 = vpop.permute.xlu0 %3476
        %s3479 = sor.u32 256, 80
        %3480 = vbcast.lane.b32.xlu0 %v3438, %s3479
        %v3481 = vpop.permute.xlu0 %3480
        %s3483 = sor.u32 256, 88
        %3484 = vbcast.lane.b32.xlu0 %v3438, %s3483
        %v3485 = vpop.permute.xlu0 %3484
        %s3487 = sor.u32 256, 96
        %3488 = vbcast.lane.b32.xlu0 %v3438, %s3487
        %v3489 = vpop.permute.xlu0 %3488
        %s3491 = sor.u32 256, 104
        %3492 = vbcast.lane.b32.xlu0 %v3438, %s3491
        %v3493 = vpop.permute.xlu0 %3492
        %s3495 = sor.u32 256, 112
        %3496 = vbcast.lane.b32.xlu0 %v3438, %s3495
        %v3497 = vpop.permute.xlu0 %3496
        %s3499 = sor.u32 256, 120
        %3500 = vbcast.lane.b32.xlu0 %v3438, %s3499
        %v3501 = vpop.permute.xlu0 %3500
        %v3502 = vlaneseq
        %v3503 = vshrl.u32 %v3502, 7
        %v3504 = vsub.s32 1, %v3503
        %v3505 = vrot.slane %v3434, %v3504
        %3507 = vbcast.lane.b32.xlu0 %v3505, 256
        %v3508 = vpop.permute.xlu0 %3507
        %s3510 = sor.u32 256, 8
        %3511 = vbcast.lane.b32.xlu0 %v3505, %s3510
        %v3512 = vpop.permute.xlu0 %3511
        %s3514 = sor.u32 256, 16
        %3515 = vbcast.lane.b32.xlu0 %v3505, %s3514
        %v3516 = vpop.permute.xlu0 %3515
        %s3518 = sor.u32 256, 24
        %3519 = vbcast.lane.b32.xlu0 %v3505, %s3518
        %v3520 = vpop.permute.xlu0 %3519
        %s3522 = sor.u32 256, 32
        %3523 = vbcast.lane.b32.xlu0 %v3505, %s3522
        %v3524 = vpop.permute.xlu0 %3523
        %s3526 = sor.u32 256, 40
        %3527 = vbcast.lane.b32.xlu0 %v3505, %s3526
        %v3528 = vpop.permute.xlu0 %3527
        %s3530 = sor.u32 256, 48
        %3531 = vbcast.lane.b32.xlu0 %v3505, %s3530
        %v3532 = vpop.permute.xlu0 %3531
        %s3534 = sor.u32 256, 56
        %3535 = vbcast.lane.b32.xlu0 %v3505, %s3534
        %v3536 = vpop.permute.xlu0 %3535
        %s3538 = sor.u32 256, 64
        %3539 = vbcast.lane.b32.xlu0 %v3505, %s3538
        %v3540 = vpop.permute.xlu0 %3539
        %s3542 = sor.u32 256, 72
        %3543 = vbcast.lane.b32.xlu0 %v3505, %s3542
        %v3544 = vpop.permute.xlu0 %3543
        %s3546 = sor.u32 256, 80
        %3547 = vbcast.lane.b32.xlu0 %v3505, %s3546
        %v3548 = vpop.permute.xlu0 %3547
        %s3550 = sor.u32 256, 88
        %3551 = vbcast.lane.b32.xlu0 %v3505, %s3550
        %v3552 = vpop.permute.xlu0 %3551
        %s3554 = sor.u32 256, 96
        %3555 = vbcast.lane.b32.xlu0 %v3505, %s3554
        %v3556 = vpop.permute.xlu0 %3555
        %s3558 = sor.u32 256, 104
        %3559 = vbcast.lane.b32.xlu0 %v3505, %s3558
        %v3560 = vpop.permute.xlu0 %3559
        %s3562 = sor.u32 256, 112
        %3563 = vbcast.lane.b32.xlu0 %v3505, %s3562
        %v3564 = vpop.permute.xlu0 %3563
        %s3566 = sor.u32 256, 120
        %3567 = vbcast.lane.b32.xlu0 %v3505, %s3566
        %v3568 = vpop.permute.xlu0 %3567
        %v3569 = vlaneseq
        %v3570 = vshrl.u32 %v3569, 7
        %v3571 = vsub.s32 2, %v3570
        %v3572 = vrot.slane %v3434, %v3571
        %3574 = vbcast.lane.b32.xlu0 %v3572, 256
        %v3575 = vpop.permute.xlu0 %3574
        %s3577 = sor.u32 256, 8
        %3578 = vbcast.lane.b32.xlu0 %v3572, %s3577
        %v3579 = vpop.permute.xlu0 %3578
        %s3581 = sor.u32 256, 16
        %3582 = vbcast.lane.b32.xlu0 %v3572, %s3581
        %v3583 = vpop.permute.xlu0 %3582
        %s3585 = sor.u32 256, 24
        %3586 = vbcast.lane.b32.xlu0 %v3572, %s3585
        %v3587 = vpop.permute.xlu0 %3586
        %s3589 = sor.u32 256, 32
        %3590 = vbcast.lane.b32.xlu0 %v3572, %s3589
        %v3591 = vpop.permute.xlu0 %3590
        %s3593 = sor.u32 256, 40
        %3594 = vbcast.lane.b32.xlu0 %v3572, %s3593
        %v3595 = vpop.permute.xlu0 %3594
        %s3597 = sor.u32 256, 48
        %3598 = vbcast.lane.b32.xlu0 %v3572, %s3597
        %v3599 = vpop.permute.xlu0 %3598
        %s3601 = sor.u32 256, 56
        %3602 = vbcast.lane.b32.xlu0 %v3572, %s3601
        %v3603 = vpop.permute.xlu0 %3602
        %s3605 = sor.u32 256, 64
        %3606 = vbcast.lane.b32.xlu0 %v3572, %s3605
        %v3607 = vpop.permute.xlu0 %3606
        %s3609 = sor.u32 256, 72
        %3610 = vbcast.lane.b32.xlu0 %v3572, %s3609
        %v3611 = vpop.permute.xlu0 %3610
        %s3613 = sor.u32 256, 80
        %3614 = vbcast.lane.b32.xlu0 %v3572, %s3613
        %v3615 = vpop.permute.xlu0 %3614
        %s3617 = sor.u32 256, 88
        %3618 = vbcast.lane.b32.xlu0 %v3572, %s3617
        %v3619 = vpop.permute.xlu0 %3618
        %s3621 = sor.u32 256, 96
        %3622 = vbcast.lane.b32.xlu0 %v3572, %s3621
        %v3623 = vpop.permute.xlu0 %3622
        %s3625 = sor.u32 256, 104
        %3626 = vbcast.lane.b32.xlu0 %v3572, %s3625
        %v3627 = vpop.permute.xlu0 %3626
        %s3629 = sor.u32 256, 112
        %3630 = vbcast.lane.b32.xlu0 %v3572, %s3629
        %v3631 = vpop.permute.xlu0 %3630
        %s3633 = sor.u32 256, 120
        %3634 = vbcast.lane.b32.xlu0 %v3572, %s3633
        %v3635 = vpop.permute.xlu0 %3634
        %v3636 = vlaneseq
        %v3637 = vshrl.u32 %v3636, 7
        %v3638 = vsub.s32 3, %v3637
        %v3639 = vrot.slane %v3434, %v3638
        %3641 = vbcast.lane.b32.xlu0 %v3639, 256
        %v3642 = vpop.permute.xlu0 %3641
        %s3644 = sor.u32 256, 8
        %3645 = vbcast.lane.b32.xlu0 %v3639, %s3644
        %v3646 = vpop.permute.xlu0 %3645
        %s3648 = sor.u32 256, 16
        %3649 = vbcast.lane.b32.xlu0 %v3639, %s3648
        %v3650 = vpop.permute.xlu0 %3649
        %s3652 = sor.u32 256, 24
        %3653 = vbcast.lane.b32.xlu0 %v3639, %s3652
        %v3654 = vpop.permute.xlu0 %3653
        %s3656 = sor.u32 256, 32
        %3657 = vbcast.lane.b32.xlu0 %v3639, %s3656
        %v3658 = vpop.permute.xlu0 %3657
        %s3660 = sor.u32 256, 40
        %3661 = vbcast.lane.b32.xlu0 %v3639, %s3660
        %v3662 = vpop.permute.xlu0 %3661
        %s3664 = sor.u32 256, 48
        %3665 = vbcast.lane.b32.xlu0 %v3639, %s3664
        %v3666 = vpop.permute.xlu0 %3665
        %s3668 = sor.u32 256, 56
        %3669 = vbcast.lane.b32.xlu0 %v3639, %s3668
        %v3670 = vpop.permute.xlu0 %3669
        %s3672 = sor.u32 256, 64
        %3673 = vbcast.lane.b32.xlu0 %v3639, %s3672
        %v3674 = vpop.permute.xlu0 %3673
        %s3676 = sor.u32 256, 72
        %3677 = vbcast.lane.b32.xlu0 %v3639, %s3676
        %v3678 = vpop.permute.xlu0 %3677
        %s3680 = sor.u32 256, 80
        %3681 = vbcast.lane.b32.xlu0 %v3639, %s3680
        %v3682 = vpop.permute.xlu0 %3681
        %s3684 = sor.u32 256, 88
        %3685 = vbcast.lane.b32.xlu0 %v3639, %s3684
        %v3686 = vpop.permute.xlu0 %3685
        %s3688 = sor.u32 256, 96
        %3689 = vbcast.lane.b32.xlu0 %v3639, %s3688
        %v3690 = vpop.permute.xlu0 %3689
        %s3692 = sor.u32 256, 104
        %3693 = vbcast.lane.b32.xlu0 %v3639, %s3692
        %v3694 = vpop.permute.xlu0 %3693
        %s3696 = sor.u32 256, 112
        %3697 = vbcast.lane.b32.xlu0 %v3639, %s3696
        %v3698 = vpop.permute.xlu0 %3697
        %s3700 = sor.u32 256, 120
        %3701 = vbcast.lane.b32.xlu0 %v3639, %s3700
        %v3702 = vpop.permute.xlu0 %3701
        %v3703 = vlaneseq
        %v3704 = vshrl.u32 %v3703, 7
        %v3705 = vsub.s32 4, %v3704
        %v3706 = vrot.slane %v3434, %v3705
        %3708 = vbcast.lane.b32.xlu0 %v3706, 256
        %v3709 = vpop.permute.xlu0 %3708
        %s3711 = sor.u32 256, 8
        %3712 = vbcast.lane.b32.xlu0 %v3706, %s3711
        %v3713 = vpop.permute.xlu0 %3712
        %s3715 = sor.u32 256, 16
        %3716 = vbcast.lane.b32.xlu0 %v3706, %s3715
        %v3717 = vpop.permute.xlu0 %3716
        %s3719 = sor.u32 256, 24
        %3720 = vbcast.lane.b32.xlu0 %v3706, %s3719
        %v3721 = vpop.permute.xlu0 %3720
        %s3723 = sor.u32 256, 32
        %3724 = vbcast.lane.b32.xlu0 %v3706, %s3723
        %v3725 = vpop.permute.xlu0 %3724
        %s3727 = sor.u32 256, 40
        %3728 = vbcast.lane.b32.xlu0 %v3706, %s3727
        %v3729 = vpop.permute.xlu0 %3728
        %s3731 = sor.u32 256, 48
        %3732 = vbcast.lane.b32.xlu0 %v3706, %s3731
        %v3733 = vpop.permute.xlu0 %3732
        %s3735 = sor.u32 256, 56
        %3736 = vbcast.lane.b32.xlu0 %v3706, %s3735
        %v3737 = vpop.permute.xlu0 %3736
        %s3739 = sor.u32 256, 64
        %3740 = vbcast.lane.b32.xlu0 %v3706, %s3739
        %v3741 = vpop.permute.xlu0 %3740
        %s3743 = sor.u32 256, 72
        %3744 = vbcast.lane.b32.xlu0 %v3706, %s3743
        %v3745 = vpop.permute.xlu0 %3744
        %s3747 = sor.u32 256, 80
        %3748 = vbcast.lane.b32.xlu0 %v3706, %s3747
        %v3749 = vpop.permute.xlu0 %3748
        %s3751 = sor.u32 256, 88
        %3752 = vbcast.lane.b32.xlu0 %v3706, %s3751
        %v3753 = vpop.permute.xlu0 %3752
        %s3755 = sor.u32 256, 96
        %3756 = vbcast.lane.b32.xlu0 %v3706, %s3755
        %v3757 = vpop.permute.xlu0 %3756
        %s3759 = sor.u32 256, 104
        %3760 = vbcast.lane.b32.xlu0 %v3706, %s3759
        %v3761 = vpop.permute.xlu0 %3760
        %s3763 = sor.u32 256, 112
        %3764 = vbcast.lane.b32.xlu0 %v3706, %s3763
        %v3765 = vpop.permute.xlu0 %3764
        %s3767 = sor.u32 256, 120
        %3768 = vbcast.lane.b32.xlu0 %v3706, %s3767
        %v3769 = vpop.permute.xlu0 %3768
        %v3770 = vlaneseq
        %v3771 = vshrl.u32 %v3770, 7
        %v3772 = vsub.s32 5, %v3771
        %v3773 = vrot.slane %v3434, %v3772
        %3775 = vbcast.lane.b32.xlu0 %v3773, 256
        %v3776 = vpop.permute.xlu0 %3775
        %s3778 = sor.u32 256, 8
        %3779 = vbcast.lane.b32.xlu0 %v3773, %s3778
        %v3780 = vpop.permute.xlu0 %3779
        %s3782 = sor.u32 256, 16
        %3783 = vbcast.lane.b32.xlu0 %v3773, %s3782
        %v3784 = vpop.permute.xlu0 %3783
        %s3786 = sor.u32 256, 24
        %3787 = vbcast.lane.b32.xlu0 %v3773, %s3786
        %v3788 = vpop.permute.xlu0 %3787
        %s3790 = sor.u32 256, 32
        %3791 = vbcast.lane.b32.xlu0 %v3773, %s3790
        %v3792 = vpop.permute.xlu0 %3791
        %s3794 = sor.u32 256, 40
        %3795 = vbcast.lane.b32.xlu0 %v3773, %s3794
        %v3796 = vpop.permute.xlu0 %3795
        %s3798 = sor.u32 256, 48
        %3799 = vbcast.lane.b32.xlu0 %v3773, %s3798
        %v3800 = vpop.permute.xlu0 %3799
        %s3802 = sor.u32 256, 56
        %3803 = vbcast.lane.b32.xlu0 %v3773, %s3802
        %v3804 = vpop.permute.xlu0 %3803
        %s3806 = sor.u32 256, 64
        %3807 = vbcast.lane.b32.xlu0 %v3773, %s3806
        %v3808 = vpop.permute.xlu0 %3807
        %s3810 = sor.u32 256, 72
        %3811 = vbcast.lane.b32.xlu0 %v3773, %s3810
        %v3812 = vpop.permute.xlu0 %3811
        %s3814 = sor.u32 256, 80
        %3815 = vbcast.lane.b32.xlu0 %v3773, %s3814
        %v3816 = vpop.permute.xlu0 %3815
        %s3818 = sor.u32 256, 88
        %3819 = vbcast.lane.b32.xlu0 %v3773, %s3818
        %v3820 = vpop.permute.xlu0 %3819
        %s3822 = sor.u32 256, 96
        %3823 = vbcast.lane.b32.xlu0 %v3773, %s3822
        %v3824 = vpop.permute.xlu0 %3823
        %s3826 = sor.u32 256, 104
        %3827 = vbcast.lane.b32.xlu0 %v3773, %s3826
        %v3828 = vpop.permute.xlu0 %3827
        %s3830 = sor.u32 256, 112
        %3831 = vbcast.lane.b32.xlu0 %v3773, %s3830
        %v3832 = vpop.permute.xlu0 %3831
        %s3834 = sor.u32 256, 120
        %3835 = vbcast.lane.b32.xlu0 %v3773, %s3834
        %v3836 = vpop.permute.xlu0 %3835
        %v3837 = vlaneseq
        %v3838 = vshrl.u32 %v3837, 7
        %v3839 = vsub.s32 6, %v3838
        %v3840 = vrot.slane %v3434, %v3839
        %3842 = vbcast.lane.b32.xlu0 %v3840, 256
        %v3843 = vpop.permute.xlu0 %3842
        %s3845 = sor.u32 256, 8
        %3846 = vbcast.lane.b32.xlu0 %v3840, %s3845
        %v3847 = vpop.permute.xlu0 %3846
        %s3849 = sor.u32 256, 16
        %3850 = vbcast.lane.b32.xlu0 %v3840, %s3849
        %v3851 = vpop.permute.xlu0 %3850
        %s3853 = sor.u32 256, 24
        %3854 = vbcast.lane.b32.xlu0 %v3840, %s3853
        %v3855 = vpop.permute.xlu0 %3854
        %s3857 = sor.u32 256, 32
        %3858 = vbcast.lane.b32.xlu0 %v3840, %s3857
        %v3859 = vpop.permute.xlu0 %3858
        %s3861 = sor.u32 256, 40
        %3862 = vbcast.lane.b32.xlu0 %v3840, %s3861
        %v3863 = vpop.permute.xlu0 %3862
        %s3865 = sor.u32 256, 48
        %3866 = vbcast.lane.b32.xlu0 %v3840, %s3865
        %v3867 = vpop.permute.xlu0 %3866
        %s3869 = sor.u32 256, 56
        %3870 = vbcast.lane.b32.xlu0 %v3840, %s3869
        %v3871 = vpop.permute.xlu0 %3870
        %s3873 = sor.u32 256, 64
        %3874 = vbcast.lane.b32.xlu0 %v3840, %s3873
        %v3875 = vpop.permute.xlu0 %3874
        %s3877 = sor.u32 256, 72
        %3878 = vbcast.lane.b32.xlu0 %v3840, %s3877
        %v3879 = vpop.permute.xlu0 %3878
        %s3881 = sor.u32 256, 80
        %3882 = vbcast.lane.b32.xlu0 %v3840, %s3881
        %v3883 = vpop.permute.xlu0 %3882
        %s3885 = sor.u32 256, 88
        %3886 = vbcast.lane.b32.xlu0 %v3840, %s3885
        %v3887 = vpop.permute.xlu0 %3886
        %s3889 = sor.u32 256, 96
        %3890 = vbcast.lane.b32.xlu0 %v3840, %s3889
        %v3891 = vpop.permute.xlu0 %3890
        %s3893 = sor.u32 256, 104
        %3894 = vbcast.lane.b32.xlu0 %v3840, %s3893
        %v3895 = vpop.permute.xlu0 %3894
        %s3897 = sor.u32 256, 112
        %3898 = vbcast.lane.b32.xlu0 %v3840, %s3897
        %v3899 = vpop.permute.xlu0 %3898
        %s3901 = sor.u32 256, 120
        %3902 = vbcast.lane.b32.xlu0 %v3840, %s3901
        %v3903 = vpop.permute.xlu0 %3902
        %v3904 = vlaneseq
        %v3905 = vshrl.u32 %v3904, 7
        %v3906 = vsub.s32 7, %v3905
        %v3907 = vrot.slane %v3434, %v3906
        %3909 = vbcast.lane.b32.xlu0 %v3907, 256
        %v3910 = vpop.permute.xlu0 %3909
        %s3912 = sor.u32 256, 8
        %3913 = vbcast.lane.b32.xlu0 %v3907, %s3912
        %v3914 = vpop.permute.xlu0 %3913
        %s3916 = sor.u32 256, 16
        %3917 = vbcast.lane.b32.xlu0 %v3907, %s3916
        %v3918 = vpop.permute.xlu0 %3917
        %s3920 = sor.u32 256, 24
        %3921 = vbcast.lane.b32.xlu0 %v3907, %s3920
        %v3922 = vpop.permute.xlu0 %3921
        %s3924 = sor.u32 256, 32
        %3925 = vbcast.lane.b32.xlu0 %v3907, %s3924
        %v3926 = vpop.permute.xlu0 %3925
        %s3928 = sor.u32 256, 40
        %3929 = vbcast.lane.b32.xlu0 %v3907, %s3928
        %v3930 = vpop.permute.xlu0 %3929
        %s3932 = sor.u32 256, 48
        %3933 = vbcast.lane.b32.xlu0 %v3907, %s3932
        %v3934 = vpop.permute.xlu0 %3933
        %s3936 = sor.u32 256, 56
        %3937 = vbcast.lane.b32.xlu0 %v3907, %s3936
        %v3938 = vpop.permute.xlu0 %3937
        %s3940 = sor.u32 256, 64
        %3941 = vbcast.lane.b32.xlu0 %v3907, %s3940
        %v3942 = vpop.permute.xlu0 %3941
        %s3944 = sor.u32 256, 72
        %3945 = vbcast.lane.b32.xlu0 %v3907, %s3944
        %v3946 = vpop.permute.xlu0 %3945
        %s3948 = sor.u32 256, 80
        %3949 = vbcast.lane.b32.xlu0 %v3907, %s3948
        %v3950 = vpop.permute.xlu0 %3949
        %s3952 = sor.u32 256, 88
        %3953 = vbcast.lane.b32.xlu0 %v3907, %s3952
        %v3954 = vpop.permute.xlu0 %3953
        %s3956 = sor.u32 256, 96
        %3957 = vbcast.lane.b32.xlu0 %v3907, %s3956
        %v3958 = vpop.permute.xlu0 %3957
        %s3960 = sor.u32 256, 104
        %3961 = vbcast.lane.b32.xlu0 %v3907, %s3960
        %v3962 = vpop.permute.xlu0 %3961
        %s3964 = sor.u32 256, 112
        %3965 = vbcast.lane.b32.xlu0 %v3907, %s3964
        %v3966 = vpop.permute.xlu0 %3965
        %s3968 = sor.u32 256, 120
        %3969 = vbcast.lane.b32.xlu0 %v3907, %s3968
        %v3970 = vpop.permute.xlu0 %3969
        %vm3971 = vcmp.gt.f32.partialorder %v3441, %v873
        %vm3972 = vcmp.gt.f32.partialorder %v3445, %v873
        %vm3973 = vcmp.gt.f32.partialorder %v3449, %v873
        %vm3974 = vcmp.gt.f32.partialorder %v3453, %v873
        %vm3975 = vcmp.gt.f32.partialorder %v3457, %v873
        %vm3976 = vcmp.gt.f32.partialorder %v3461, %v873
        %vm3977 = vcmp.gt.f32.partialorder %v3465, %v873
        %vm3978 = vcmp.gt.f32.partialorder %v3469, %v873
        %vm3979 = vcmp.gt.f32.partialorder %v3473, %v873
        %vm3980 = vcmp.gt.f32.partialorder %v3477, %v873
        %vm3981 = vcmp.gt.f32.partialorder %v3481, %v873
        %vm3982 = vcmp.gt.f32.partialorder %v3485, %v873
        %vm3983 = vcmp.gt.f32.partialorder %v3489, %v873
        %vm3984 = vcmp.gt.f32.partialorder %v3493, %v873
        %vm3985 = vcmp.gt.f32.partialorder %v3497, %v873
        %vm3986 = vcmp.gt.f32.partialorder %v3501, %v873
        %vm3987 = vcmp.gt.f32.partialorder %v3508, %v877
        %vm3988 = vcmp.gt.f32.partialorder %v3512, %v877
        %vm3989 = vcmp.gt.f32.partialorder %v3516, %v877
        %vm3990 = vcmp.gt.f32.partialorder %v3520, %v877
        %vm3991 = vcmp.gt.f32.partialorder %v3524, %v877
        %vm3992 = vcmp.gt.f32.partialorder %v3528, %v877
        %vm3993 = vcmp.gt.f32.partialorder %v3532, %v877
        %vm3994 = vcmp.gt.f32.partialorder %v3536, %v877
        %vm3995 = vcmp.gt.f32.partialorder %v3540, %v877
        %vm3996 = vcmp.gt.f32.partialorder %v3544, %v877
        %vm3997 = vcmp.gt.f32.partialorder %v3548, %v877
        %vm3998 = vcmp.gt.f32.partialorder %v3552, %v877
        %vm3999 = vcmp.gt.f32.partialorder %v3556, %v877
        %vm4000 = vcmp.gt.f32.partialorder %v3560, %v877
        %vm4001 = vcmp.gt.f32.partialorder %v3564, %v877
        %vm4002 = vcmp.gt.f32.partialorder %v3568, %v877
        %vm4003 = vcmp.gt.f32.partialorder %v3575, %v881
        %vm4004 = vcmp.gt.f32.partialorder %v3579, %v881
        %vm4005 = vcmp.gt.f32.partialorder %v3583, %v881
        %vm4006 = vcmp.gt.f32.partialorder %v3587, %v881
        %vm4007 = vcmp.gt.f32.partialorder %v3591, %v881
        %vm4008 = vcmp.gt.f32.partialorder %v3595, %v881
        %vm4009 = vcmp.gt.f32.partialorder %v3599, %v881
        %vm4010 = vcmp.gt.f32.partialorder %v3603, %v881
        %vm4011 = vcmp.gt.f32.partialorder %v3607, %v881
        %vm4012 = vcmp.gt.f32.partialorder %v3611, %v881
        %vm4013 = vcmp.gt.f32.partialorder %v3615, %v881
        %vm4014 = vcmp.gt.f32.partialorder %v3619, %v881
        %vm4015 = vcmp.gt.f32.partialorder %v3623, %v881
        %vm4016 = vcmp.gt.f32.partialorder %v3627, %v881
        %vm4017 = vcmp.gt.f32.partialorder %v3631, %v881
        %vm4018 = vcmp.gt.f32.partialorder %v3635, %v881
        %vm4019 = vcmp.gt.f32.partialorder %v3642, %v885
        %vm4020 = vcmp.gt.f32.partialorder %v3646, %v885
        %vm4021 = vcmp.gt.f32.partialorder %v3650, %v885
        %vm4022 = vcmp.gt.f32.partialorder %v3654, %v885
        %vm4023 = vcmp.gt.f32.partialorder %v3658, %v885
        %vm4024 = vcmp.gt.f32.partialorder %v3662, %v885
        %vm4025 = vcmp.gt.f32.partialorder %v3666, %v885
        %vm4026 = vcmp.gt.f32.partialorder %v3670, %v885
        %vm4027 = vcmp.gt.f32.partialorder %v3674, %v885
        %vm4028 = vcmp.gt.f32.partialorder %v3678, %v885
        %vm4029 = vcmp.gt.f32.partialorder %v3682, %v885
        %vm4030 = vcmp.gt.f32.partialorder %v3686, %v885
        %vm4031 = vcmp.gt.f32.partialorder %v3690, %v885
        %vm4032 = vcmp.gt.f32.partialorder %v3694, %v885
        %vm4033 = vcmp.gt.f32.partialorder %v3698, %v885
        %vm4034 = vcmp.gt.f32.partialorder %v3702, %v885
        %vm4035 = vcmp.gt.f32.partialorder %v3709, %v889
        %vm4036 = vcmp.gt.f32.partialorder %v3713, %v889
        %vm4037 = vcmp.gt.f32.partialorder %v3717, %v889
        %vm4038 = vcmp.gt.f32.partialorder %v3721, %v889
        %vm4039 = vcmp.gt.f32.partialorder %v3725, %v889
        %vm4040 = vcmp.gt.f32.partialorder %v3729, %v889
        %vm4041 = vcmp.gt.f32.partialorder %v3733, %v889
        %vm4042 = vcmp.gt.f32.partialorder %v3737, %v889
        %vm4043 = vcmp.gt.f32.partialorder %v3741, %v889
        %vm4044 = vcmp.gt.f32.partialorder %v3745, %v889
        %vm4045 = vcmp.gt.f32.partialorder %v3749, %v889
        %vm4046 = vcmp.gt.f32.partialorder %v3753, %v889
        %vm4047 = vcmp.gt.f32.partialorder %v3757, %v889
        %vm4048 = vcmp.gt.f32.partialorder %v3761, %v889
        %vm4049 = vcmp.gt.f32.partialorder %v3765, %v889
        %vm4050 = vcmp.gt.f32.partialorder %v3769, %v889
        %vm4051 = vcmp.gt.f32.partialorder %v3776, %v893
        %vm4052 = vcmp.gt.f32.partialorder %v3780, %v893
        %vm4053 = vcmp.gt.f32.partialorder %v3784, %v893
        %vm4054 = vcmp.gt.f32.partialorder %v3788, %v893
        %vm4055 = vcmp.gt.f32.partialorder %v3792, %v893
        %vm4056 = vcmp.gt.f32.partialorder %v3796, %v893
        %vm4057 = vcmp.gt.f32.partialorder %v3800, %v893
        %vm4058 = vcmp.gt.f32.partialorder %v3804, %v893
        %vm4059 = vcmp.gt.f32.partialorder %v3808, %v893
        %vm4060 = vcmp.gt.f32.partialorder %v3812, %v893
        %vm4061 = vcmp.gt.f32.partialorder %v3816, %v893
        %vm4062 = vcmp.gt.f32.partialorder %v3820, %v893
        %vm4063 = vcmp.gt.f32.partialorder %v3824, %v893
        %vm4064 = vcmp.gt.f32.partialorder %v3828, %v893
        %vm4065 = vcmp.gt.f32.partialorder %v3832, %v893
        %vm4066 = vcmp.gt.f32.partialorder %v3836, %v893
        %vm4067 = vcmp.gt.f32.partialorder %v3843, %v897
        %vm4068 = vcmp.gt.f32.partialorder %v3847, %v897
        %vm4069 = vcmp.gt.f32.partialorder %v3851, %v897
        %vm4070 = vcmp.gt.f32.partialorder %v3855, %v897
        %vm4071 = vcmp.gt.f32.partialorder %v3859, %v897
        %vm4072 = vcmp.gt.f32.partialorder %v3863, %v897
        %vm4073 = vcmp.gt.f32.partialorder %v3867, %v897
        %vm4074 = vcmp.gt.f32.partialorder %v3871, %v897
        %vm4075 = vcmp.gt.f32.partialorder %v3875, %v897
        %vm4076 = vcmp.gt.f32.partialorder %v3879, %v897
        %vm4077 = vcmp.gt.f32.partialorder %v3883, %v897
        %vm4078 = vcmp.gt.f32.partialorder %v3887, %v897
        %vm4079 = vcmp.gt.f32.partialorder %v3891, %v897
        %vm4080 = vcmp.gt.f32.partialorder %v3895, %v897
        %vm4081 = vcmp.gt.f32.partialorder %v3899, %v897
        %vm4082 = vcmp.gt.f32.partialorder %v3903, %v897
        %vm4083 = vcmp.gt.f32.partialorder %v3910, %v901
        %vm4084 = vcmp.gt.f32.partialorder %v3914, %v901
        %vm4085 = vcmp.gt.f32.partialorder %v3918, %v901
        %vm4086 = vcmp.gt.f32.partialorder %v3922, %v901
        %vm4087 = vcmp.gt.f32.partialorder %v3926, %v901
        %vm4088 = vcmp.gt.f32.partialorder %v3930, %v901
        %vm4089 = vcmp.gt.f32.partialorder %v3934, %v901
        %vm4090 = vcmp.gt.f32.partialorder %v3938, %v901
        %vm4091 = vcmp.gt.f32.partialorder %v3942, %v901
        %vm4092 = vcmp.gt.f32.partialorder %v3946, %v901
        %vm4093 = vcmp.gt.f32.partialorder %v3950, %v901
        %vm4094 = vcmp.gt.f32.partialorder %v3954, %v901
        %vm4095 = vcmp.gt.f32.partialorder %v3958, %v901
        %vm4096 = vcmp.gt.f32.partialorder %v3962, %v901
        %vm4097 = vcmp.gt.f32.partialorder %v3966, %v901
        %vm4098 = vcmp.gt.f32.partialorder %v3970, %v901
        %vm4099 = vcmp.eq.f32.partialorder %v3441, %v873
        %vm4100 = vcmp.eq.f32.partialorder %v3445, %v873
        %vm4101 = vcmp.eq.f32.partialorder %v3449, %v873
        %vm4102 = vcmp.eq.f32.partialorder %v3453, %v873
        %vm4103 = vcmp.eq.f32.partialorder %v3457, %v873
        %vm4104 = vcmp.eq.f32.partialorder %v3461, %v873
        %vm4105 = vcmp.eq.f32.partialorder %v3465, %v873
        %vm4106 = vcmp.eq.f32.partialorder %v3469, %v873
        %vm4107 = vcmp.eq.f32.partialorder %v3473, %v873
        %vm4108 = vcmp.eq.f32.partialorder %v3477, %v873
        %vm4109 = vcmp.eq.f32.partialorder %v3481, %v873
        %vm4110 = vcmp.eq.f32.partialorder %v3485, %v873
        %vm4111 = vcmp.eq.f32.partialorder %v3489, %v873
        %vm4112 = vcmp.eq.f32.partialorder %v3493, %v873
        %vm4113 = vcmp.eq.f32.partialorder %v3497, %v873
        %vm4114 = vcmp.eq.f32.partialorder %v3501, %v873
        %vm4115 = vcmp.eq.f32.partialorder %v3508, %v877
        %vm4116 = vcmp.eq.f32.partialorder %v3512, %v877
        %vm4117 = vcmp.eq.f32.partialorder %v3516, %v877
        %vm4118 = vcmp.eq.f32.partialorder %v3520, %v877
        %vm4119 = vcmp.eq.f32.partialorder %v3524, %v877
        %vm4120 = vcmp.eq.f32.partialorder %v3528, %v877
        %vm4121 = vcmp.eq.f32.partialorder %v3532, %v877
        %vm4122 = vcmp.eq.f32.partialorder %v3536, %v877
        %vm4123 = vcmp.eq.f32.partialorder %v3540, %v877
        %vm4124 = vcmp.eq.f32.partialorder %v3544, %v877
        %vm4125 = vcmp.eq.f32.partialorder %v3548, %v877
        %vm4126 = vcmp.eq.f32.partialorder %v3552, %v877
        %vm4127 = vcmp.eq.f32.partialorder %v3556, %v877
        %vm4128 = vcmp.eq.f32.partialorder %v3560, %v877
        %vm4129 = vcmp.eq.f32.partialorder %v3564, %v877
        %vm4130 = vcmp.eq.f32.partialorder %v3568, %v877
        %vm4131 = vcmp.eq.f32.partialorder %v3575, %v881
        %vm4132 = vcmp.eq.f32.partialorder %v3579, %v881
        %vm4133 = vcmp.eq.f32.partialorder %v3583, %v881
        %vm4134 = vcmp.eq.f32.partialorder %v3587, %v881
        %vm4135 = vcmp.eq.f32.partialorder %v3591, %v881
        %vm4136 = vcmp.eq.f32.partialorder %v3595, %v881
        %vm4137 = vcmp.eq.f32.partialorder %v3599, %v881
        %vm4138 = vcmp.eq.f32.partialorder %v3603, %v881
        %vm4139 = vcmp.eq.f32.partialorder %v3607, %v881
        %vm4140 = vcmp.eq.f32.partialorder %v3611, %v881
        %vm4141 = vcmp.eq.f32.partialorder %v3615, %v881
        %vm4142 = vcmp.eq.f32.partialorder %v3619, %v881
        %vm4143 = vcmp.eq.f32.partialorder %v3623, %v881
        %vm4144 = vcmp.eq.f32.partialorder %v3627, %v881
        %vm4145 = vcmp.eq.f32.partialorder %v3631, %v881
        %vm4146 = vcmp.eq.f32.partialorder %v3635, %v881
        %vm4147 = vcmp.eq.f32.partialorder %v3642, %v885
        %vm4148 = vcmp.eq.f32.partialorder %v3646, %v885
        %vm4149 = vcmp.eq.f32.partialorder %v3650, %v885
        %vm4150 = vcmp.eq.f32.partialorder %v3654, %v885
        %vm4151 = vcmp.eq.f32.partialorder %v3658, %v885
        %vm4152 = vcmp.eq.f32.partialorder %v3662, %v885
        %vm4153 = vcmp.eq.f32.partialorder %v3666, %v885
        %vm4154 = vcmp.eq.f32.partialorder %v3670, %v885
        %vm4155 = vcmp.eq.f32.partialorder %v3674, %v885
        %vm4156 = vcmp.eq.f32.partialorder %v3678, %v885
        %vm4157 = vcmp.eq.f32.partialorder %v3682, %v885
        %vm4158 = vcmp.eq.f32.partialorder %v3686, %v885
        %vm4159 = vcmp.eq.f32.partialorder %v3690, %v885
        %vm4160 = vcmp.eq.f32.partialorder %v3694, %v885
        %vm4161 = vcmp.eq.f32.partialorder %v3698, %v885
        %vm4162 = vcmp.eq.f32.partialorder %v3702, %v885
        %vm4163 = vcmp.eq.f32.partialorder %v3709, %v889
        %vm4164 = vcmp.eq.f32.partialorder %v3713, %v889
        %vm4165 = vcmp.eq.f32.partialorder %v3717, %v889
        %vm4166 = vcmp.eq.f32.partialorder %v3721, %v889
        %vm4167 = vcmp.eq.f32.partialorder %v3725, %v889
        %vm4168 = vcmp.eq.f32.partialorder %v3729, %v889
        %vm4169 = vcmp.eq.f32.partialorder %v3733, %v889
        %vm4170 = vcmp.eq.f32.partialorder %v3737, %v889
        %vm4171 = vcmp.eq.f32.partialorder %v3741, %v889
        %vm4172 = vcmp.eq.f32.partialorder %v3745, %v889
        %vm4173 = vcmp.eq.f32.partialorder %v3749, %v889
        %vm4174 = vcmp.eq.f32.partialorder %v3753, %v889
        %vm4175 = vcmp.eq.f32.partialorder %v3757, %v889
        %vm4176 = vcmp.eq.f32.partialorder %v3761, %v889
        %vm4177 = vcmp.eq.f32.partialorder %v3765, %v889
        %vm4178 = vcmp.eq.f32.partialorder %v3769, %v889
        %vm4179 = vcmp.eq.f32.partialorder %v3776, %v893
        %vm4180 = vcmp.eq.f32.partialorder %v3780, %v893
        %vm4181 = vcmp.eq.f32.partialorder %v3784, %v893
        %vm4182 = vcmp.eq.f32.partialorder %v3788, %v893
        %vm4183 = vcmp.eq.f32.partialorder %v3792, %v893
        %vm4184 = vcmp.eq.f32.partialorder %v3796, %v893
        %vm4185 = vcmp.eq.f32.partialorder %v3800, %v893
        %vm4186 = vcmp.eq.f32.partialorder %v3804, %v893
        %vm4187 = vcmp.eq.f32.partialorder %v3808, %v893
        %vm4188 = vcmp.eq.f32.partialorder %v3812, %v893
        %vm4189 = vcmp.eq.f32.partialorder %v3816, %v893
        %vm4190 = vcmp.eq.f32.partialorder %v3820, %v893
        %vm4191 = vcmp.eq.f32.partialorder %v3824, %v893
        %vm4192 = vcmp.eq.f32.partialorder %v3828, %v893
        %vm4193 = vcmp.eq.f32.partialorder %v3832, %v893
        %vm4194 = vcmp.eq.f32.partialorder %v3836, %v893
        %vm4195 = vcmp.eq.f32.partialorder %v3843, %v897
        %vm4196 = vcmp.eq.f32.partialorder %v3847, %v897
        %vm4197 = vcmp.eq.f32.partialorder %v3851, %v897
        %vm4198 = vcmp.eq.f32.partialorder %v3855, %v897
        %vm4199 = vcmp.eq.f32.partialorder %v3859, %v897
        %vm4200 = vcmp.eq.f32.partialorder %v3863, %v897
        %vm4201 = vcmp.eq.f32.partialorder %v3867, %v897
        %vm4202 = vcmp.eq.f32.partialorder %v3871, %v897
        %vm4203 = vcmp.eq.f32.partialorder %v3875, %v897
        %vm4204 = vcmp.eq.f32.partialorder %v3879, %v897
        %vm4205 = vcmp.eq.f32.partialorder %v3883, %v897
        %vm4206 = vcmp.eq.f32.partialorder %v3887, %v897
        %vm4207 = vcmp.eq.f32.partialorder %v3891, %v897
        %vm4208 = vcmp.eq.f32.partialorder %v3895, %v897
        %vm4209 = vcmp.eq.f32.partialorder %v3899, %v897
        %vm4210 = vcmp.eq.f32.partialorder %v3903, %v897
        %vm4211 = vcmp.eq.f32.partialorder %v3910, %v901
        %vm4212 = vcmp.eq.f32.partialorder %v3914, %v901
        %vm4213 = vcmp.eq.f32.partialorder %v3918, %v901
        %vm4214 = vcmp.eq.f32.partialorder %v3922, %v901
        %vm4215 = vcmp.eq.f32.partialorder %v3926, %v901
        %vm4216 = vcmp.eq.f32.partialorder %v3930, %v901
        %vm4217 = vcmp.eq.f32.partialorder %v3934, %v901
        %vm4218 = vcmp.eq.f32.partialorder %v3938, %v901
        %vm4219 = vcmp.eq.f32.partialorder %v3942, %v901
        %vm4220 = vcmp.eq.f32.partialorder %v3946, %v901
        %vm4221 = vcmp.eq.f32.partialorder %v3950, %v901
        %vm4222 = vcmp.eq.f32.partialorder %v3954, %v901
        %vm4223 = vcmp.eq.f32.partialorder %v3958, %v901
        %vm4224 = vcmp.eq.f32.partialorder %v3962, %v901
        %vm4225 = vcmp.eq.f32.partialorder %v3966, %v901
        %vm4226 = vcmp.eq.f32.partialorder %v3970, %v901
        %s4227 = ssub.s32 %s242, 256
        %v4228 = vstv %s4227
        %vm4229 = vcmp.lt.s32.totalorder %v317, %v4228
        %vm4230 = vcmp.lt.s32.totalorder %v318, %v4228
        %vm4231 = vcmp.lt.s32.totalorder %v319, %v4228
        %vm4232 = vcmp.lt.s32.totalorder %v320, %v4228
        %vm4233 = vcmp.lt.s32.totalorder %v321, %v4228
        %vm4234 = vcmp.lt.s32.totalorder %v322, %v4228
        %vm4235 = vcmp.lt.s32.totalorder %v323, %v4228
        %vm4236 = vcmp.lt.s32.totalorder %v324, %v4228
        %vm4237 = vcmp.lt.s32.totalorder %v325, %v4228
        %vm4238 = vcmp.lt.s32.totalorder %v326, %v4228
        %vm4239 = vcmp.lt.s32.totalorder %v327, %v4228
        %vm4240 = vcmp.lt.s32.totalorder %v328, %v4228
        %vm4241 = vcmp.lt.s32.totalorder %v329, %v4228
        %vm4242 = vcmp.lt.s32.totalorder %v330, %v4228
        %vm4243 = vcmp.lt.s32.totalorder %v331, %v4228
        %vm4244 = vcmp.lt.s32.totalorder %v332, %v4228
        %v4245 = vsel %vm4229, 1, 0
        %v4246 = vsel %vm4230, 1, 0
        %v4247 = vsel %vm4231, 1, 0
        %v4248 = vsel %vm4232, 1, 0
        %v4249 = vsel %vm4233, 1, 0
        %v4250 = vsel %vm4234, 1, 0
        %v4251 = vsel %vm4235, 1, 0
        %v4252 = vsel %vm4236, 1, 0
        %v4253 = vsel %vm4237, 1, 0
        %v4254 = vsel %vm4238, 1, 0
        %v4255 = vsel %vm4239, 1, 0
        %v4256 = vsel %vm4240, 1, 0
        %v4257 = vsel %vm4241, 1, 0
        %v4258 = vsel %vm4242, 1, 0
        %v4259 = vsel %vm4243, 1, 0
        %v4260 = vsel %vm4244, 1, 0
        %vm4261 = vcmp.eq.s32.totalorder %v4245, 1
        %vm4262 = vcmp.eq.s32.totalorder %v4246, 1
        %vm4263 = vcmp.eq.s32.totalorder %v4247, 1
        %vm4264 = vcmp.eq.s32.totalorder %v4248, 1
        %vm4265 = vcmp.eq.s32.totalorder %v4249, 1
        %vm4266 = vcmp.eq.s32.totalorder %v4250, 1
        %vm4267 = vcmp.eq.s32.totalorder %v4251, 1
        %vm4268 = vcmp.eq.s32.totalorder %v4252, 1
        %vm4269 = vcmp.eq.s32.totalorder %v4253, 1
        %vm4270 = vcmp.eq.s32.totalorder %v4254, 1
        %vm4271 = vcmp.eq.s32.totalorder %v4255, 1
        %vm4272 = vcmp.eq.s32.totalorder %v4256, 1
        %vm4273 = vcmp.eq.s32.totalorder %v4257, 1
        %vm4274 = vcmp.eq.s32.totalorder %v4258, 1
        %vm4275 = vcmp.eq.s32.totalorder %v4259, 1
        %vm4276 = vcmp.eq.s32.totalorder %v4260, 1
        %vm4277 = vmand %vm4099, %vm4261
        %vm4278 = vmand %vm4100, %vm4262
        %vm4279 = vmand %vm4101, %vm4263
        %vm4280 = vmand %vm4102, %vm4264
        %vm4281 = vmand %vm4103, %vm4265
        %vm4282 = vmand %vm4104, %vm4266
        %vm4283 = vmand %vm4105, %vm4267
        %vm4284 = vmand %vm4106, %vm4268
        %vm4285 = vmand %vm4107, %vm4269
        %vm4286 = vmand %vm4108, %vm4270
        %vm4287 = vmand %vm4109, %vm4271
        %vm4288 = vmand %vm4110, %vm4272
        %vm4289 = vmand %vm4111, %vm4273
        %vm4290 = vmand %vm4112, %vm4274
        %vm4291 = vmand %vm4113, %vm4275
        %vm4292 = vmand %vm4114, %vm4276
        %vm4293 = vmand %vm4115, %vm4261
        %vm4294 = vmand %vm4116, %vm4262
        %vm4295 = vmand %vm4117, %vm4263
        %vm4296 = vmand %vm4118, %vm4264
        %vm4297 = vmand %vm4119, %vm4265
        %vm4298 = vmand %vm4120, %vm4266
        %vm4299 = vmand %vm4121, %vm4267
        %vm4300 = vmand %vm4122, %vm4268
        %vm4301 = vmand %vm4123, %vm4269
        %vm4302 = vmand %vm4124, %vm4270
        %vm4303 = vmand %vm4125, %vm4271
        %vm4304 = vmand %vm4126, %vm4272
        %vm4305 = vmand %vm4127, %vm4273
        %vm4306 = vmand %vm4128, %vm4274
        %vm4307 = vmand %vm4129, %vm4275
        %vm4308 = vmand %vm4130, %vm4276
        %vm4309 = vmand %vm4131, %vm4261
        %vm4310 = vmand %vm4132, %vm4262
        %vm4311 = vmand %vm4133, %vm4263
        %vm4312 = vmand %vm4134, %vm4264
        %vm4313 = vmand %vm4135, %vm4265
        %vm4314 = vmand %vm4136, %vm4266
        %vm4315 = vmand %vm4137, %vm4267
        %vm4316 = vmand %vm4138, %vm4268
        %vm4317 = vmand %vm4139, %vm4269
        %vm4318 = vmand %vm4140, %vm4270
        %vm4319 = vmand %vm4141, %vm4271
        %vm4320 = vmand %vm4142, %vm4272
        %vm4321 = vmand %vm4143, %vm4273
        %vm4322 = vmand %vm4144, %vm4274
        %vm4323 = vmand %vm4145, %vm4275
        %vm4324 = vmand %vm4146, %vm4276
        %vm4325 = vmand %vm4147, %vm4261
        %vm4326 = vmand %vm4148, %vm4262
        %vm4327 = vmand %vm4149, %vm4263
        %vm4328 = vmand %vm4150, %vm4264
        %vm4329 = vmand %vm4151, %vm4265
        %vm4330 = vmand %vm4152, %vm4266
        %vm4331 = vmand %vm4153, %vm4267
        %vm4332 = vmand %vm4154, %vm4268
        %vm4333 = vmand %vm4155, %vm4269
        %vm4334 = vmand %vm4156, %vm4270
        %vm4335 = vmand %vm4157, %vm4271
        %vm4336 = vmand %vm4158, %vm4272
        %vm4337 = vmand %vm4159, %vm4273
        %vm4338 = vmand %vm4160, %vm4274
        %vm4339 = vmand %vm4161, %vm4275
        %vm4340 = vmand %vm4162, %vm4276
        %vm4341 = vmand %vm4163, %vm4261
        %vm4342 = vmand %vm4164, %vm4262
        %vm4343 = vmand %vm4165, %vm4263
        %vm4344 = vmand %vm4166, %vm4264
        %vm4345 = vmand %vm4167, %vm4265
        %vm4346 = vmand %vm4168, %vm4266
        %vm4347 = vmand %vm4169, %vm4267
        %vm4348 = vmand %vm4170, %vm4268
        %vm4349 = vmand %vm4171, %vm4269
        %vm4350 = vmand %vm4172, %vm4270
        %vm4351 = vmand %vm4173, %vm4271
        %vm4352 = vmand %vm4174, %vm4272
        %vm4353 = vmand %vm4175, %vm4273
        %vm4354 = vmand %vm4176, %vm4274
        %vm4355 = vmand %vm4177, %vm4275
        %vm4356 = vmand %vm4178, %vm4276
        %vm4357 = vmand %vm4179, %vm4261
        %vm4358 = vmand %vm4180, %vm4262
        %vm4359 = vmand %vm4181, %vm4263
        %vm4360 = vmand %vm4182, %vm4264
        %vm4361 = vmand %vm4183, %vm4265
        %vm4362 = vmand %vm4184, %vm4266
        %vm4363 = vmand %vm4185, %vm4267
        %vm4364 = vmand %vm4186, %vm4268
        %vm4365 = vmand %vm4187, %vm4269
        %vm4366 = vmand %vm4188, %vm4270
        %vm4367 = vmand %vm4189, %vm4271
        %vm4368 = vmand %vm4190, %vm4272
        %vm4369 = vmand %vm4191, %vm4273
        %vm4370 = vmand %vm4192, %vm4274
        %vm4371 = vmand %vm4193, %vm4275
        %vm4372 = vmand %vm4194, %vm4276
        %vm4373 = vmand %vm4195, %vm4261
        %vm4374 = vmand %vm4196, %vm4262
        %vm4375 = vmand %vm4197, %vm4263
        %vm4376 = vmand %vm4198, %vm4264
        %vm4377 = vmand %vm4199, %vm4265
        %vm4378 = vmand %vm4200, %vm4266
        %vm4379 = vmand %vm4201, %vm4267
        %vm4380 = vmand %vm4202, %vm4268
        %vm4381 = vmand %vm4203, %vm4269
        %vm4382 = vmand %vm4204, %vm4270
        %vm4383 = vmand %vm4205, %vm4271
        %vm4384 = vmand %vm4206, %vm4272
        %vm4385 = vmand %vm4207, %vm4273
        %vm4386 = vmand %vm4208, %vm4274
        %vm4387 = vmand %vm4209, %vm4275
        %vm4388 = vmand %vm4210, %vm4276
        %vm4389 = vmand %vm4211, %vm4261
        %vm4390 = vmand %vm4212, %vm4262
        %vm4391 = vmand %vm4213, %vm4263
        %vm4392 = vmand %vm4214, %vm4264
        %vm4393 = vmand %vm4215, %vm4265
        %vm4394 = vmand %vm4216, %vm4266
        %vm4395 = vmand %vm4217, %vm4267
        %vm4396 = vmand %vm4218, %vm4268
        %vm4397 = vmand %vm4219, %vm4269
        %vm4398 = vmand %vm4220, %vm4270
        %vm4399 = vmand %vm4221, %vm4271
        %vm4400 = vmand %vm4222, %vm4272
        %vm4401 = vmand %vm4223, %vm4273
        %vm4402 = vmand %vm4224, %vm4274
        %vm4403 = vmand %vm4225, %vm4275
        %vm4404 = vmand %vm4226, %vm4276
        %vm4405 = vmor %vm3971, %vm4277
        %vm4406 = vmor %vm3972, %vm4278
        %vm4407 = vmor %vm3973, %vm4279
        %vm4408 = vmor %vm3974, %vm4280
        %vm4409 = vmor %vm3975, %vm4281
        %vm4410 = vmor %vm3976, %vm4282
        %vm4411 = vmor %vm3977, %vm4283
        %vm4412 = vmor %vm3978, %vm4284
        %vm4413 = vmor %vm3979, %vm4285
        %vm4414 = vmor %vm3980, %vm4286
        %vm4415 = vmor %vm3981, %vm4287
        %vm4416 = vmor %vm3982, %vm4288
        %vm4417 = vmor %vm3983, %vm4289
        %vm4418 = vmor %vm3984, %vm4290
        %vm4419 = vmor %vm3985, %vm4291
        %vm4420 = vmor %vm3986, %vm4292
        %vm4421 = vmor %vm3987, %vm4293
        %vm4422 = vmor %vm3988, %vm4294
        %vm4423 = vmor %vm3989, %vm4295
        %vm4424 = vmor %vm3990, %vm4296
        %vm4425 = vmor %vm3991, %vm4297
        %vm4426 = vmor %vm3992, %vm4298
        %vm4427 = vmor %vm3993, %vm4299
        %vm4428 = vmor %vm3994, %vm4300
        %vm4429 = vmor %vm3995, %vm4301
        %vm4430 = vmor %vm3996, %vm4302
        %vm4431 = vmor %vm3997, %vm4303
        %vm4432 = vmor %vm3998, %vm4304
        %vm4433 = vmor %vm3999, %vm4305
        %vm4434 = vmor %vm4000, %vm4306
        %vm4435 = vmor %vm4001, %vm4307
        %vm4436 = vmor %vm4002, %vm4308
        %vm4437 = vmor %vm4003, %vm4309
        %vm4438 = vmor %vm4004, %vm4310
        %vm4439 = vmor %vm4005, %vm4311
        %vm4440 = vmor %vm4006, %vm4312
        %vm4441 = vmor %vm4007, %vm4313
        %vm4442 = vmor %vm4008, %vm4314
        %vm4443 = vmor %vm4009, %vm4315
        %vm4444 = vmor %vm4010, %vm4316
        %vm4445 = vmor %vm4011, %vm4317
        %vm4446 = vmor %vm4012, %vm4318
        %vm4447 = vmor %vm4013, %vm4319
        %vm4448 = vmor %vm4014, %vm4320
        %vm4449 = vmor %vm4015, %vm4321
        %vm4450 = vmor %vm4016, %vm4322
        %vm4451 = vmor %vm4017, %vm4323
        %vm4452 = vmor %vm4018, %vm4324
        %vm4453 = vmor %vm4019, %vm4325
        %vm4454 = vmor %vm4020, %vm4326
        %vm4455 = vmor %vm4021, %vm4327
        %vm4456 = vmor %vm4022, %vm4328
        %vm4457 = vmor %vm4023, %vm4329
        %vm4458 = vmor %vm4024, %vm4330
        %vm4459 = vmor %vm4025, %vm4331
        %vm4460 = vmor %vm4026, %vm4332
        %vm4461 = vmor %vm4027, %vm4333
        %vm4462 = vmor %vm4028, %vm4334
        %vm4463 = vmor %vm4029, %vm4335
        %vm4464 = vmor %vm4030, %vm4336
        %vm4465 = vmor %vm4031, %vm4337
        %vm4466 = vmor %vm4032, %vm4338
        %vm4467 = vmor %vm4033, %vm4339
        %vm4468 = vmor %vm4034, %vm4340
        %vm4469 = vmor %vm4035, %vm4341
        %vm4470 = vmor %vm4036, %vm4342
        %vm4471 = vmor %vm4037, %vm4343
        %vm4472 = vmor %vm4038, %vm4344
        %vm4473 = vmor %vm4039, %vm4345
        %vm4474 = vmor %vm4040, %vm4346
        %vm4475 = vmor %vm4041, %vm4347
        %vm4476 = vmor %vm4042, %vm4348
        %vm4477 = vmor %vm4043, %vm4349
        %vm4478 = vmor %vm4044, %vm4350
        %vm4479 = vmor %vm4045, %vm4351
        %vm4480 = vmor %vm4046, %vm4352
        %vm4481 = vmor %vm4047, %vm4353
        %vm4482 = vmor %vm4048, %vm4354
        %vm4483 = vmor %vm4049, %vm4355
        %vm4484 = vmor %vm4050, %vm4356
        %vm4485 = vmor %vm4051, %vm4357
        %vm4486 = vmor %vm4052, %vm4358
        %vm4487 = vmor %vm4053, %vm4359
        %vm4488 = vmor %vm4054, %vm4360
        %vm4489 = vmor %vm4055, %vm4361
        %vm4490 = vmor %vm4056, %vm4362
        %vm4491 = vmor %vm4057, %vm4363
        %vm4492 = vmor %vm4058, %vm4364
        %vm4493 = vmor %vm4059, %vm4365
        %vm4494 = vmor %vm4060, %vm4366
        %vm4495 = vmor %vm4061, %vm4367
        %vm4496 = vmor %vm4062, %vm4368
        %vm4497 = vmor %vm4063, %vm4369
        %vm4498 = vmor %vm4064, %vm4370
        %vm4499 = vmor %vm4065, %vm4371
        %vm4500 = vmor %vm4066, %vm4372
        %vm4501 = vmor %vm4067, %vm4373
        %vm4502 = vmor %vm4068, %vm4374
        %vm4503 = vmor %vm4069, %vm4375
        %vm4504 = vmor %vm4070, %vm4376
        %vm4505 = vmor %vm4071, %vm4377
        %vm4506 = vmor %vm4072, %vm4378
        %vm4507 = vmor %vm4073, %vm4379
        %vm4508 = vmor %vm4074, %vm4380
        %vm4509 = vmor %vm4075, %vm4381
        %vm4510 = vmor %vm4076, %vm4382
        %vm4511 = vmor %vm4077, %vm4383
        %vm4512 = vmor %vm4078, %vm4384
        %vm4513 = vmor %vm4079, %vm4385
        %vm4514 = vmor %vm4080, %vm4386
        %vm4515 = vmor %vm4081, %vm4387
        %vm4516 = vmor %vm4082, %vm4388
        %vm4517 = vmor %vm4083, %vm4389
        %vm4518 = vmor %vm4084, %vm4390
        %vm4519 = vmor %vm4085, %vm4391
        %vm4520 = vmor %vm4086, %vm4392
        %vm4521 = vmor %vm4087, %vm4393
        %vm4522 = vmor %vm4088, %vm4394
        %vm4523 = vmor %vm4089, %vm4395
        %vm4524 = vmor %vm4090, %vm4396
        %vm4525 = vmor %vm4091, %vm4397
        %vm4526 = vmor %vm4092, %vm4398
        %vm4527 = vmor %vm4093, %vm4399
        %vm4528 = vmor %vm4094, %vm4400
        %vm4529 = vmor %vm4095, %vm4401
        %vm4530 = vmor %vm4096, %vm4402
        %vm4531 = vmor %vm4097, %vm4403
        %vm4532 = vmor %vm4098, %vm4404
        %v4533 = vsel %vm4405, 1, 0
        %v4534 = vsel %vm4406, 1, 0
        %v4535 = vsel %vm4407, 1, 0
        %v4536 = vsel %vm4408, 1, 0
        %v4537 = vsel %vm4409, 1, 0
        %v4538 = vsel %vm4410, 1, 0
        %v4539 = vsel %vm4411, 1, 0
        %v4540 = vsel %vm4412, 1, 0
        %v4541 = vsel %vm4413, 1, 0
        %v4542 = vsel %vm4414, 1, 0
        %v4543 = vsel %vm4415, 1, 0
        %v4544 = vsel %vm4416, 1, 0
        %v4545 = vsel %vm4417, 1, 0
        %v4546 = vsel %vm4418, 1, 0
        %v4547 = vsel %vm4419, 1, 0
        %v4548 = vsel %vm4420, 1, 0
        %v4549 = vsel %vm4421, 1, 0
        %v4550 = vsel %vm4422, 1, 0
        %v4551 = vsel %vm4423, 1, 0
        %v4552 = vsel %vm4424, 1, 0
        %v4553 = vsel %vm4425, 1, 0
        %v4554 = vsel %vm4426, 1, 0
        %v4555 = vsel %vm4427, 1, 0
        %v4556 = vsel %vm4428, 1, 0
        %v4557 = vsel %vm4429, 1, 0
        %v4558 = vsel %vm4430, 1, 0
        %v4559 = vsel %vm4431, 1, 0
        %v4560 = vsel %vm4432, 1, 0
        %v4561 = vsel %vm4433, 1, 0
        %v4562 = vsel %vm4434, 1, 0
        %v4563 = vsel %vm4435, 1, 0
        %v4564 = vsel %vm4436, 1, 0
        %v4565 = vsel %vm4437, 1, 0
        %v4566 = vsel %vm4438, 1, 0
        %v4567 = vsel %vm4439, 1, 0
        %v4568 = vsel %vm4440, 1, 0
        %v4569 = vsel %vm4441, 1, 0
        %v4570 = vsel %vm4442, 1, 0
        %v4571 = vsel %vm4443, 1, 0
        %v4572 = vsel %vm4444, 1, 0
        %v4573 = vsel %vm4445, 1, 0
        %v4574 = vsel %vm4446, 1, 0
        %v4575 = vsel %vm4447, 1, 0
        %v4576 = vsel %vm4448, 1, 0
        %v4577 = vsel %vm4449, 1, 0
        %v4578 = vsel %vm4450, 1, 0
        %v4579 = vsel %vm4451, 1, 0
        %v4580 = vsel %vm4452, 1, 0
        %v4581 = vsel %vm4453, 1, 0
        %v4582 = vsel %vm4454, 1, 0
        %v4583 = vsel %vm4455, 1, 0
        %v4584 = vsel %vm4456, 1, 0
        %v4585 = vsel %vm4457, 1, 0
        %v4586 = vsel %vm4458, 1, 0
        %v4587 = vsel %vm4459, 1, 0
        %v4588 = vsel %vm4460, 1, 0
        %v4589 = vsel %vm4461, 1, 0
        %v4590 = vsel %vm4462, 1, 0
        %v4591 = vsel %vm4463, 1, 0
        %v4592 = vsel %vm4464, 1, 0
        %v4593 = vsel %vm4465, 1, 0
        %v4594 = vsel %vm4466, 1, 0
        %v4595 = vsel %vm4467, 1, 0
        %v4596 = vsel %vm4468, 1, 0
        %v4597 = vsel %vm4469, 1, 0
        %v4598 = vsel %vm4470, 1, 0
        %v4599 = vsel %vm4471, 1, 0
        %v4600 = vsel %vm4472, 1, 0
        %v4601 = vsel %vm4473, 1, 0
        %v4602 = vsel %vm4474, 1, 0
        %v4603 = vsel %vm4475, 1, 0
        %v4604 = vsel %vm4476, 1, 0
        %v4605 = vsel %vm4477, 1, 0
        %v4606 = vsel %vm4478, 1, 0
        %v4607 = vsel %vm4479, 1, 0
        %v4608 = vsel %vm4480, 1, 0
        %v4609 = vsel %vm4481, 1, 0
        %v4610 = vsel %vm4482, 1, 0
        %v4611 = vsel %vm4483, 1, 0
        %v4612 = vsel %vm4484, 1, 0
        %v4613 = vsel %vm4485, 1, 0
        %v4614 = vsel %vm4486, 1, 0
        %v4615 = vsel %vm4487, 1, 0
        %v4616 = vsel %vm4488, 1, 0
        %v4617 = vsel %vm4489, 1, 0
        %v4618 = vsel %vm4490, 1, 0
        %v4619 = vsel %vm4491, 1, 0
        %v4620 = vsel %vm4492, 1, 0
        %v4621 = vsel %vm4493, 1, 0
        %v4622 = vsel %vm4494, 1, 0
        %v4623 = vsel %vm4495, 1, 0
        %v4624 = vsel %vm4496, 1, 0
        %v4625 = vsel %vm4497, 1, 0
        %v4626 = vsel %vm4498, 1, 0
        %v4627 = vsel %vm4499, 1, 0
        %v4628 = vsel %vm4500, 1, 0
        %v4629 = vsel %vm4501, 1, 0
        %v4630 = vsel %vm4502, 1, 0
        %v4631 = vsel %vm4503, 1, 0
        %v4632 = vsel %vm4504, 1, 0
        %v4633 = vsel %vm4505, 1, 0
        %v4634 = vsel %vm4506, 1, 0
        %v4635 = vsel %vm4507, 1, 0
        %v4636 = vsel %vm4508, 1, 0
        %v4637 = vsel %vm4509, 1, 0
        %v4638 = vsel %vm4510, 1, 0
        %v4639 = vsel %vm4511, 1, 0
        %v4640 = vsel %vm4512, 1, 0
        %v4641 = vsel %vm4513, 1, 0
        %v4642 = vsel %vm4514, 1, 0
        %v4643 = vsel %vm4515, 1, 0
        %v4644 = vsel %vm4516, 1, 0
        %v4645 = vsel %vm4517, 1, 0
        %v4646 = vsel %vm4518, 1, 0
        %v4647 = vsel %vm4519, 1, 0
        %v4648 = vsel %vm4520, 1, 0
        %v4649 = vsel %vm4521, 1, 0
        %v4650 = vsel %vm4522, 1, 0
        %v4651 = vsel %vm4523, 1, 0
        %v4652 = vsel %vm4524, 1, 0
        %v4653 = vsel %vm4525, 1, 0
        %v4654 = vsel %vm4526, 1, 0
        %v4655 = vsel %vm4527, 1, 0
        %v4656 = vsel %vm4528, 1, 0
        %v4657 = vsel %vm4529, 1, 0
        %v4658 = vsel %vm4530, 1, 0
        %v4659 = vsel %vm4531, 1, 0
        %v4660 = vsel %vm4532, 1, 0
        %v4661 = vcvt.s32.f32 %v4533
        %v4662 = vcvt.s32.f32 %v4534
        %v4663 = vcvt.s32.f32 %v4535
        %v4664 = vcvt.s32.f32 %v4536
        %v4665 = vcvt.s32.f32 %v4537
        %v4666 = vcvt.s32.f32 %v4538
        %v4667 = vcvt.s32.f32 %v4539
        %v4668 = vcvt.s32.f32 %v4540
        %v4669 = vcvt.s32.f32 %v4541
        %v4670 = vcvt.s32.f32 %v4542
        %v4671 = vcvt.s32.f32 %v4543
        %v4672 = vcvt.s32.f32 %v4544
        %v4673 = vcvt.s32.f32 %v4545
        %v4674 = vcvt.s32.f32 %v4546
        %v4675 = vcvt.s32.f32 %v4547
        %v4676 = vcvt.s32.f32 %v4548
        %v4677 = vcvt.s32.f32 %v4549
        %v4678 = vcvt.s32.f32 %v4550
        %v4679 = vcvt.s32.f32 %v4551
        %v4680 = vcvt.s32.f32 %v4552
        %v4681 = vcvt.s32.f32 %v4553
        %v4682 = vcvt.s32.f32 %v4554
        %v4683 = vcvt.s32.f32 %v4555
        %v4684 = vcvt.s32.f32 %v4556
        %v4685 = vcvt.s32.f32 %v4557
        %v4686 = vcvt.s32.f32 %v4558
        %v4687 = vcvt.s32.f32 %v4559
        %v4688 = vcvt.s32.f32 %v4560
        %v4689 = vcvt.s32.f32 %v4561
        %v4690 = vcvt.s32.f32 %v4562
        %v4691 = vcvt.s32.f32 %v4563
        %v4692 = vcvt.s32.f32 %v4564
        %v4693 = vcvt.s32.f32 %v4565
        %v4694 = vcvt.s32.f32 %v4566
        %v4695 = vcvt.s32.f32 %v4567
        %v4696 = vcvt.s32.f32 %v4568
        %v4697 = vcvt.s32.f32 %v4569
        %v4698 = vcvt.s32.f32 %v4570
        %v4699 = vcvt.s32.f32 %v4571
        %v4700 = vcvt.s32.f32 %v4572
        %v4701 = vcvt.s32.f32 %v4573
        %v4702 = vcvt.s32.f32 %v4574
        %v4703 = vcvt.s32.f32 %v4575
        %v4704 = vcvt.s32.f32 %v4576
        %v4705 = vcvt.s32.f32 %v4577
        %v4706 = vcvt.s32.f32 %v4578
        %v4707 = vcvt.s32.f32 %v4579
        %v4708 = vcvt.s32.f32 %v4580
        %v4709 = vcvt.s32.f32 %v4581
        %v4710 = vcvt.s32.f32 %v4582
        %v4711 = vcvt.s32.f32 %v4583
        %v4712 = vcvt.s32.f32 %v4584
        %v4713 = vcvt.s32.f32 %v4585
        %v4714 = vcvt.s32.f32 %v4586
        %v4715 = vcvt.s32.f32 %v4587
        %v4716 = vcvt.s32.f32 %v4588
        %v4717 = vcvt.s32.f32 %v4589
        %v4718 = vcvt.s32.f32 %v4590
        %v4719 = vcvt.s32.f32 %v4591
        %v4720 = vcvt.s32.f32 %v4592
        %v4721 = vcvt.s32.f32 %v4593
        %v4722 = vcvt.s32.f32 %v4594
        %v4723 = vcvt.s32.f32 %v4595
        %v4724 = vcvt.s32.f32 %v4596
        %v4725 = vcvt.s32.f32 %v4597
        %v4726 = vcvt.s32.f32 %v4598
        %v4727 = vcvt.s32.f32 %v4599
        %v4728 = vcvt.s32.f32 %v4600
        %v4729 = vcvt.s32.f32 %v4601
        %v4730 = vcvt.s32.f32 %v4602
        %v4731 = vcvt.s32.f32 %v4603
        %v4732 = vcvt.s32.f32 %v4604
        %v4733 = vcvt.s32.f32 %v4605
        %v4734 = vcvt.s32.f32 %v4606
        %v4735 = vcvt.s32.f32 %v4607
        %v4736 = vcvt.s32.f32 %v4608
        %v4737 = vcvt.s32.f32 %v4609
        %v4738 = vcvt.s32.f32 %v4610
        %v4739 = vcvt.s32.f32 %v4611
        %v4740 = vcvt.s32.f32 %v4612
        %v4741 = vcvt.s32.f32 %v4613
        %v4742 = vcvt.s32.f32 %v4614
        %v4743 = vcvt.s32.f32 %v4615
        %v4744 = vcvt.s32.f32 %v4616
        %v4745 = vcvt.s32.f32 %v4617
        %v4746 = vcvt.s32.f32 %v4618
        %v4747 = vcvt.s32.f32 %v4619
        %v4748 = vcvt.s32.f32 %v4620
        %v4749 = vcvt.s32.f32 %v4621
        %v4750 = vcvt.s32.f32 %v4622
        %v4751 = vcvt.s32.f32 %v4623
        %v4752 = vcvt.s32.f32 %v4624
        %v4753 = vcvt.s32.f32 %v4625
        %v4754 = vcvt.s32.f32 %v4626
        %v4755 = vcvt.s32.f32 %v4627
        %v4756 = vcvt.s32.f32 %v4628
        %v4757 = vcvt.s32.f32 %v4629
        %v4758 = vcvt.s32.f32 %v4630
        %v4759 = vcvt.s32.f32 %v4631
        %v4760 = vcvt.s32.f32 %v4632
        %v4761 = vcvt.s32.f32 %v4633
        %v4762 = vcvt.s32.f32 %v4634
        %v4763 = vcvt.s32.f32 %v4635
        %v4764 = vcvt.s32.f32 %v4636
        %v4765 = vcvt.s32.f32 %v4637
        %v4766 = vcvt.s32.f32 %v4638
        %v4767 = vcvt.s32.f32 %v4639
        %v4768 = vcvt.s32.f32 %v4640
        %v4769 = vcvt.s32.f32 %v4641
        %v4770 = vcvt.s32.f32 %v4642
        %v4771 = vcvt.s32.f32 %v4643
        %v4772 = vcvt.s32.f32 %v4644
        %v4773 = vcvt.s32.f32 %v4645
        %v4774 = vcvt.s32.f32 %v4646
        %v4775 = vcvt.s32.f32 %v4647
        %v4776 = vcvt.s32.f32 %v4648
        %v4777 = vcvt.s32.f32 %v4649
        %v4778 = vcvt.s32.f32 %v4650
        %v4779 = vcvt.s32.f32 %v4651
        %v4780 = vcvt.s32.f32 %v4652
        %v4781 = vcvt.s32.f32 %v4653
        %v4782 = vcvt.s32.f32 %v4654
        %v4783 = vcvt.s32.f32 %v4655
        %v4784 = vcvt.s32.f32 %v4656
        %v4785 = vcvt.s32.f32 %v4657
        %v4786 = vcvt.s32.f32 %v4658
        %v4787 = vcvt.s32.f32 %v4659
        %v4788 = vcvt.s32.f32 %v4660
        %v4789 = vadd.f32 %v4661, %v4662
        %v4790 = vadd.f32 %v4789, %v4663
        %v4791 = vadd.f32 %v4790, %v4664
        %v4792 = vadd.f32 %v4791, %v4665
        %v4793 = vadd.f32 %v4792, %v4666
        %v4794 = vadd.f32 %v4793, %v4667
        %v4795 = vadd.f32 %v4794, %v4668
        %v4796 = vadd.f32 %v4795, %v4669
        %v4797 = vadd.f32 %v4796, %v4670
        %v4798 = vadd.f32 %v4797, %v4671
        %v4799 = vadd.f32 %v4798, %v4672
        %v4800 = vadd.f32 %v4799, %v4673
        %v4801 = vadd.f32 %v4800, %v4674
        %v4802 = vadd.f32 %v4801, %v4675
        %v4803 = vadd.f32 %v4802, %v4676
        %v4804 = vrot.slane %v4803, 4
        %v4805 = vadd.f32 %v4803, %v4804
        %v4806 = vrot.slane %v4805, 2
        %v4807 = vadd.f32 %v4805, %v4806
        %v4808 = vrot.slane %v4807, 1
        %v4809 = vadd.f32 %v4807, %v4808
        %v4810 = vadd.f32 %v4677, %v4678
        %v4811 = vadd.f32 %v4810, %v4679
        %v4812 = vadd.f32 %v4811, %v4680
        %v4813 = vadd.f32 %v4812, %v4681
        %v4814 = vadd.f32 %v4813, %v4682
        %v4815 = vadd.f32 %v4814, %v4683
        %v4816 = vadd.f32 %v4815, %v4684
        %v4817 = vadd.f32 %v4816, %v4685
        %v4818 = vadd.f32 %v4817, %v4686
        %v4819 = vadd.f32 %v4818, %v4687
        %v4820 = vadd.f32 %v4819, %v4688
        %v4821 = vadd.f32 %v4820, %v4689
        %v4822 = vadd.f32 %v4821, %v4690
        %v4823 = vadd.f32 %v4822, %v4691
        %v4824 = vadd.f32 %v4823, %v4692
        %v4825 = vrot.slane %v4824, 4
        %v4826 = vadd.f32 %v4824, %v4825
        %v4827 = vrot.slane %v4826, 2
        %v4828 = vadd.f32 %v4826, %v4827
        %v4829 = vrot.slane %v4828, 1
        %v4830 = vadd.f32 %v4828, %v4829
        %v4831 = vadd.f32 %v4693, %v4694
        %v4832 = vadd.f32 %v4831, %v4695
        %v4833 = vadd.f32 %v4832, %v4696
        %v4834 = vadd.f32 %v4833, %v4697
        %v4835 = vadd.f32 %v4834, %v4698
        %v4836 = vadd.f32 %v4835, %v4699
        %v4837 = vadd.f32 %v4836, %v4700
        %v4838 = vadd.f32 %v4837, %v4701
        %v4839 = vadd.f32 %v4838, %v4702
        %v4840 = vadd.f32 %v4839, %v4703
        %v4841 = vadd.f32 %v4840, %v4704
        %v4842 = vadd.f32 %v4841, %v4705
        %v4843 = vadd.f32 %v4842, %v4706
        %v4844 = vadd.f32 %v4843, %v4707
        %v4845 = vadd.f32 %v4844, %v4708
        %v4846 = vrot.slane %v4845, 4
        %v4847 = vadd.f32 %v4845, %v4846
        %v4848 = vrot.slane %v4847, 2
        %v4849 = vadd.f32 %v4847, %v4848
        %v4850 = vrot.slane %v4849, 1
        %v4851 = vadd.f32 %v4849, %v4850
        %v4852 = vadd.f32 %v4709, %v4710
        %v4853 = vadd.f32 %v4852, %v4711
        %v4854 = vadd.f32 %v4853, %v4712
        %v4855 = vadd.f32 %v4854, %v4713
        %v4856 = vadd.f32 %v4855, %v4714
        %v4857 = vadd.f32 %v4856, %v4715
        %v4858 = vadd.f32 %v4857, %v4716
        %v4859 = vadd.f32 %v4858, %v4717
        %v4860 = vadd.f32 %v4859, %v4718
        %v4861 = vadd.f32 %v4860, %v4719
        %v4862 = vadd.f32 %v4861, %v4720
        %v4863 = vadd.f32 %v4862, %v4721
        %v4864 = vadd.f32 %v4863, %v4722
        %v4865 = vadd.f32 %v4864, %v4723
        %v4866 = vadd.f32 %v4865, %v4724
        %v4867 = vrot.slane %v4866, 4
        %v4868 = vadd.f32 %v4866, %v4867
        %v4869 = vrot.slane %v4868, 2
        %v4870 = vadd.f32 %v4868, %v4869
        %v4871 = vrot.slane %v4870, 1
        %v4872 = vadd.f32 %v4870, %v4871
        %v4873 = vadd.f32 %v4725, %v4726
        %v4874 = vadd.f32 %v4873, %v4727
        %v4875 = vadd.f32 %v4874, %v4728
        %v4876 = vadd.f32 %v4875, %v4729
        %v4877 = vadd.f32 %v4876, %v4730
        %v4878 = vadd.f32 %v4877, %v4731
        %v4879 = vadd.f32 %v4878, %v4732
        %v4880 = vadd.f32 %v4879, %v4733
        %v4881 = vadd.f32 %v4880, %v4734
        %v4882 = vadd.f32 %v4881, %v4735
        %v4883 = vadd.f32 %v4882, %v4736
        %v4884 = vadd.f32 %v4883, %v4737
        %v4885 = vadd.f32 %v4884, %v4738
        %v4886 = vadd.f32 %v4885, %v4739
        %v4887 = vadd.f32 %v4886, %v4740
        %v4888 = vrot.slane %v4887, 4
        %v4889 = vadd.f32 %v4887, %v4888
        %v4890 = vrot.slane %v4889, 2
        %v4891 = vadd.f32 %v4889, %v4890
        %v4892 = vrot.slane %v4891, 1
        %v4893 = vadd.f32 %v4891, %v4892
        %v4894 = vadd.f32 %v4741, %v4742
        %v4895 = vadd.f32 %v4894, %v4743
        %v4896 = vadd.f32 %v4895, %v4744
        %v4897 = vadd.f32 %v4896, %v4745
        %v4898 = vadd.f32 %v4897, %v4746
        %v4899 = vadd.f32 %v4898, %v4747
        %v4900 = vadd.f32 %v4899, %v4748
        %v4901 = vadd.f32 %v4900, %v4749
        %v4902 = vadd.f32 %v4901, %v4750
        %v4903 = vadd.f32 %v4902, %v4751
        %v4904 = vadd.f32 %v4903, %v4752
        %v4905 = vadd.f32 %v4904, %v4753
        %v4906 = vadd.f32 %v4905, %v4754
        %v4907 = vadd.f32 %v4906, %v4755
        %v4908 = vadd.f32 %v4907, %v4756
        %v4909 = vrot.slane %v4908, 4
        %v4910 = vadd.f32 %v4908, %v4909
        %v4911 = vrot.slane %v4910, 2
        %v4912 = vadd.f32 %v4910, %v4911
        %v4913 = vrot.slane %v4912, 1
        %v4914 = vadd.f32 %v4912, %v4913
        %v4915 = vadd.f32 %v4757, %v4758
        %v4916 = vadd.f32 %v4915, %v4759
        %v4917 = vadd.f32 %v4916, %v4760
        %v4918 = vadd.f32 %v4917, %v4761
        %v4919 = vadd.f32 %v4918, %v4762
        %v4920 = vadd.f32 %v4919, %v4763
        %v4921 = vadd.f32 %v4920, %v4764
        %v4922 = vadd.f32 %v4921, %v4765
        %v4923 = vadd.f32 %v4922, %v4766
        %v4924 = vadd.f32 %v4923, %v4767
        %v4925 = vadd.f32 %v4924, %v4768
        %v4926 = vadd.f32 %v4925, %v4769
        %v4927 = vadd.f32 %v4926, %v4770
        %v4928 = vadd.f32 %v4927, %v4771
        %v4929 = vadd.f32 %v4928, %v4772
        %v4930 = vrot.slane %v4929, 4
        %v4931 = vadd.f32 %v4929, %v4930
        %v4932 = vrot.slane %v4931, 2
        %v4933 = vadd.f32 %v4931, %v4932
        %v4934 = vrot.slane %v4933, 1
        %v4935 = vadd.f32 %v4933, %v4934
        %v4936 = vadd.f32 %v4773, %v4774
        %v4937 = vadd.f32 %v4936, %v4775
        %v4938 = vadd.f32 %v4937, %v4776
        %v4939 = vadd.f32 %v4938, %v4777
        %v4940 = vadd.f32 %v4939, %v4778
        %v4941 = vadd.f32 %v4940, %v4779
        %v4942 = vadd.f32 %v4941, %v4780
        %v4943 = vadd.f32 %v4942, %v4781
        %v4944 = vadd.f32 %v4943, %v4782
        %v4945 = vadd.f32 %v4944, %v4783
        %v4946 = vadd.f32 %v4945, %v4784
        %v4947 = vadd.f32 %v4946, %v4785
        %v4948 = vadd.f32 %v4947, %v4786
        %v4949 = vadd.f32 %v4948, %v4787
        %v4950 = vadd.f32 %v4949, %v4788
        %v4951 = vrot.slane %v4950, 4
        %v4952 = vadd.f32 %v4950, %v4951
        %v4953 = vrot.slane %v4952, 2
        %v4954 = vadd.f32 %v4952, %v4953
        %v4955 = vrot.slane %v4954, 1
        %v4956 = vadd.f32 %v4954, %v4955
        %v4957 = vadd.f32 %v3426, %v4809
        %v4958 = vadd.f32 %v3427, %v4830
        %v4959 = vadd.f32 %v3428, %v4851
        %v4960 = vadd.f32 %v3429, %v4872
        %v4961 = vadd.f32 %v3430, %v4893
        %v4962 = vadd.f32 %v3431, %v4914
        %v4963 = vadd.f32 %v3432, %v4935
        %v4964 = vadd.f32 %v3433, %v4956
        %v4965 = vld [vmem:[%s241] sm:$0xff]
        %4967 = vset.pattern.permute.xlu0 0
        %4968 = vperm.xlu0 %4967, %v4965
        %v4969 = vpop.permute.xlu0 %4968
        %v4970 = vrot.slane %v4969, 1
        %v4971 = vrot.slane %v4969, 2
        %v4972 = vrot.slane %v4969, 3
        %v4973 = vrot.slane %v4969, 4
        %v4974 = vrot.slane %v4969, 5
        %v4975 = vrot.slane %v4969, 6
        %v4976 = vrot.slane %v4969, 7
        %vm4985 = vcmp.lt.f32.partialorder %v4957, %v4969
        %vm4986 = vcmp.lt.f32.partialorder %v4958, %v4970
        %vm4987 = vcmp.lt.f32.partialorder %v4959, %v4971
        %vm4988 = vcmp.lt.f32.partialorder %v4960, %v4972
        %vm4989 = vcmp.lt.f32.partialorder %v4961, %v4973
        %vm4990 = vcmp.lt.f32.partialorder %v4962, %v4974
        %vm4991 = vcmp.lt.f32.partialorder %v4963, %v4975
        %vm4992 = vcmp.lt.f32.partialorder %v4964, %v4976
        %v4993 = vsel %vm4985, 1, 0
        %v4994 = vsel %vm4986, 1, 0
        %v4995 = vsel %vm4987, 1, 0
        %v4996 = vsel %vm4988, 1, 0
        %v4997 = vsel %vm4989, 1, 0
        %v4998 = vsel %vm4990, 1, 0
        %v4999 = vsel %vm4991, 1, 0
        %v5000 = vsel %vm4992, 1, 0
        %v5001 = vcvt.s32.f32 %v4993
        %v5002 = vcvt.s32.f32 %v4994
        %v5003 = vcvt.s32.f32 %v4995
        %v5004 = vcvt.s32.f32 %v4996
        %v5005 = vcvt.s32.f32 %v4997
        %v5006 = vcvt.s32.f32 %v4998
        %v5007 = vcvt.s32.f32 %v4999
        %v5008 = vcvt.s32.f32 %v5000
        %v5009 = vld [vmem:[%s211] sm:$0xff]
        %v5011 = vrot.slane %v5009, 1
        %v5012 = vrot.slane %v5009, 2
        %v5013 = vrot.slane %v5009, 3
        %v5014 = vrot.slane %v5009, 4
        %v5015 = vrot.slane %v5009, 5
        %v5016 = vrot.slane %v5009, 6
        %v5017 = vrot.slane %v5009, 7
        %v5026 = vmul.f32 %v5001, %v5009
        %v5027 = vmul.f32 %v5002, %v5011
        %v5028 = vmul.f32 %v5003, %v5012
        %v5029 = vmul.f32 %v5004, %v5013
        %v5030 = vmul.f32 %v5005, %v5014
        %v5031 = vmul.f32 %v5006, %v5015
        %v5032 = vmul.f32 %v5007, %v5016
        %v5033 = vmul.f32 %v5008, %v5017
        %v5042 = vrot.slane %v5027, 7
        %vm5043 = vcmask 1041409
        %v5044 = vsel %vm5043, %v5042, %v5026
        %v5045 = vrot.slane %v5028, 6
        %vm5046 = vcmask 1042434
        %v5047 = vsel %vm5046, %v5045, %v5044
        %v5048 = vrot.slane %v5029, 5
        %vm5049 = vcmask 1043459
        %v5050 = vsel %vm5049, %v5048, %v5047
        %v5051 = vrot.slane %v5030, 4
        %vm5052 = vcmask 1044484
        %v5053 = vsel %vm5052, %v5051, %v5050
        %v5054 = vrot.slane %v5031, 3
        %vm5055 = vcmask 1045509
        %v5056 = vsel %vm5055, %v5054, %v5053
        %v5057 = vrot.slane %v5032, 2
        %vm5058 = vcmask 1046534
        %v5059 = vsel %vm5058, %v5057, %v5056
        %v5060 = vrot.slane %v5033, 1
        %vm5061 = vcmask 1047559
        %v5062 = vsel %vm5061, %v5060, %v5059
        %5064 = vst [vmem:[%s237] sm:$0xff] %v5062
        %s5065 = sand.u32 %s123, 1
        %s5066 = scalar_lea.sflag [#allocation4], %s5065
        %s5067 = sand.u32 %s123, 1
        %s5068 = smul.addr %s5067, 8
        %s5069 = scalar_lea.vmem [#allocation7], %s5068
        // Predicated region
        $region41: #{tpu_custom_call.1} parent=31 // pred_check
          %p5070 = pneg %p133
        $region42: #{tpu_custom_call.1} parent=31 // pred_check_branch
          %5072 = sbr.rel (%p5070) target = $region44
        $region43: #{tpu_custom_call.1} parent=31 // pred_region
          %s5074 = ssub.s32 128, 128
          %5075 = vsyncadd %s5066, %s5074
          %s5076 = smul.addr %s25, 3
          %s5077 = sadd.s32 %s26, %s5076
          %s5078 = smul.addr %s5077, 128
          %s5079 = scalar_lea.hbm %s3, %s5078
          %s5081 = sshll.u32 %s5069, 4
          %s5082 = int_to_ptr.vmem [resolvable:$true] %s5081
          %5084 = dma.vmem_to_hbm [thread:$0]  %s5082, 128, %s5079, %s5066
        $region44: #{tpu_custom_call.1} parent=31 // pred_fallthru
          _
      $region32: #{tpu_custom_call.1} parent=5 // pred_fallthru
        _
      %p5085 = scmp.le.s32.totalorder 2, %s16
      // Predicated region
      $region45: #{tpu_custom_call.1} parent=5 // pred_check
        %p5086 = pneg %p5085
      $region46: #{tpu_custom_call.1} parent=5 // pred_check_branch
        %5088 = sbr.rel (%p5086) target = $region48
      $region47: #{tpu_custom_call.1} parent=5 // pred_region
        %s5089 = ssub.s32 %s16, 2
        // Predicated region
        $region49: #{tpu_custom_call.1} parent=47 // pred_check
          %p5090 = pneg %p139
        $region50: #{tpu_custom_call.1} parent=47 // pred_check_branch
          %5092 = sbr.rel (%p5090) target = $region52
        $region51: #{tpu_custom_call.1} parent=47 // pred_region
          %s5093 = sand.u32 %s124, 1
          %s5094 = scalar_lea.sflag [#allocation4], %s5093
          %s5095 = sand.u32 %s124, 1
          %s5096 = smul.addr %s5095, 8
          %s5097 = scalar_lea.vmem [#allocation7], %s5096
          %5098 = dma.done %s5094, 128
        $region52: #{tpu_custom_call.1} parent=47 // pred_fallthru
          _
      $region48: #{tpu_custom_call.1} parent=5 // pred_fallthru
        _
    $region6: #{tpu_custom_call.1} parent=1 // loop_footer
      %s20 = sadd.s32 1, %s16
    $region7: #{tpu_custom_call.1} parent=1 // loop_footer_branch
      %15 = sbr.rel target = $region3
    $region8: #{tpu_custom_call.1} parent=1 // loop_exit
      _
    %5099 = vsyncpa [#allocation3], 1
    %s5100 = scalar_lea.sflag [#allocation3], 1
    %5101 = vsyncpa %s5100, 1
    %5102 = vsyncpa [#allocation6], 1
    %s5103 = scalar_lea.sflag [#allocation6], 1
    %5104 = vsyncpa %s5103, 1
    %5105 = vsyncpa [#allocation4], 1
    %s5106 = scalar_lea.sflag [#allocation4], 1
    %5107 = vsyncpa %s5106, 1

</llo_original>
